<compile_context>
chip_gen: v7x
topology: tpu7x:2x2x1
jax: 0.10.0
libtpu: 0.0.40
codegen_flags: <defaults>
</compile_context>

<pallas_src>
import math
from functools import partial

import jax
import jax.numpy as jnp
import numpy as np
from jax.experimental import pallas as pl
from jax.experimental.pallas import tpu as pltpu


# ----------------------------- fused Pallas kernel -----------------------------

def _bert_embedding_kernel(x_ref, m1_ref, w1_ref, side_ref, ds1_ref, m2_ref,
                           w2_ref, ds2_ref, mblk_ref, wfin_ref, bpe_ref, o_ref,
                           *, shifts1, shifts2, pshifts1, pshifts2,
                           t_len, c1, c2):
    f32, bf16 = jnp.float32, jnp.bfloat16

    # ---- conv1 (3,3,3) pad 1: sublane rolls -> im2col -> ONE MXU matmul ----
    x = x_ref[...]                                        # (BB*P1, bands) f32
    n1 = x.shape[0]
    taps = [x if (off % n1) == 0 else pltpu.roll(x, shift=(-off) % n1, axis=0)
            for off in shifts1]
    im1 = jnp.concatenate(taps, axis=1) * m1_ref[...]     # zero padding via mask
    a1 = jnp.dot(im1.astype(bf16), w1_ref[...], preferred_element_type=f32)
    y1 = (jnp.maximum(a1 + side_ref[0:1, 0:c1], 0.0) * side_ref[1:2, 0:c1]
          + side_ref[2:3, 0:c1])                          # bias + ReLU + BN1

    # ---- pool1 (2,2,2): roll/max tree + one downsample/zero-embed selector ----
    m = y1
    for off in pshifts1:
        m = jnp.maximum(m, pltpu.roll(m, shift=(-off) % n1, axis=0))
    e = jnp.dot(ds1_ref[...], m.astype(bf16), preferred_element_type=f32)

    # ---- conv2 (3,2,2) pad 1 on the zero-embedded grid: rolls -> ONE matmul ----
    n2 = e.shape[0]
    taps2 = [e if (off % n2) == 0 else pltpu.roll(e, shift=(-off) % n2, axis=0)
             for off in shifts2]
    im2 = jnp.concatenate(taps2, axis=1) * m2_ref[...]
    a2 = jnp.dot(im2.astype(bf16), w2_ref[...], preferred_element_type=f32)
    y2 = (jnp.maximum(a2 + side_ref[3:4, 0:c2], 0.0) * side_ref[4:5, 0:c2]
          + side_ref[5:6, 0:c2])                          # bias + ReLU + BN2

    # ---- pool2 (1,2,2): roll/max tree + duplicating downsample selector ----
    for off in pshifts2:
        y2 = jnp.maximum(y2, pltpu.roll(y2, shift=(-off) % n2, axis=0))
    gst = jnp.dot(ds2_ref[...], y2.astype(bf16), preferred_element_type=f32)

    # ---- torch .view(B,t,-1) + Linear + bias + PE: t_len dense matmuls ----
    rows = o_ref.shape[0]                                 # BB * t_len
    out = bpe_ref[...]
    for tau in range(t_len):
        lhs = (gst[tau * rows:(tau + 1) * rows, :] * mblk_ref[tau]).astype(bf16)
        out = out + jnp.dot(lhs, wfin_ref[tau], preferred_element_type=f32)
    o_ref[...] = out                                      # lane-dense (BB*t, 256)


# ----------------------------- host-side helpers -----------------------------

def _sinusoidal_pe(max_len, d_model):
    pos = np.arange(max_len, dtype=np.float32)[:, None]
    div = np.exp(np.arange(0, d_model, 2, dtype=np.float32)
                 * (-math.log(10000.0) / d_model))
    pe = np.zeros((max_len, d_model), np.float32)
    pe[:, 0::2] = np.sin(pos * div)
    pe[:, 1::2] = np.cos(pos * div)
    return pe


# ----------------------------- forward pass -----------------------------

def bert_embedding_forward(x, params, eps=1e-5):
    B, years, seq, bands, W, H = x.shape
    T1 = years * seq
    C1, C2, D = 32, 64, 256

    # conv/pool geometry: conv1 keeps dims; pool1 halves all; conv2 keeps t and
    # grows w/h by 1 (pad 1, kernel 2); pool2 halves w/h.
    T2, W2, H2 = T1 // 2, W // 2, H // 2
    T3, W3, H3 = T2, W2 + 1, H2 + 1
    P1, P3 = T1 * W * H, T3 * W3 * H3
    t_len, W4, H4 = T3, W3 // 2, H3 // 2
    feat = C2 * W4 * H4
    assert feat == 64, "nn.Linear(64, 256) needs the conv/pool stack to end at 64 feats"
    assert t_len <= 75, "PositionalEncoding max_len=75"

    # batch blocking: BB elements per grid step (amortizes per-step overhead,
    # keeps constants resident, raises every matmul's M).  Keep tiles 8-aligned.
    BB = B
    for cand in (8, 4, 2):
        if (B % cand == 0 and (cand * P1) % 8 == 0 and (cand * P3) % 8 == 0
                and (cand * t_len) % 8 == 0):
            BB = cand
            break
    G = B // BB

    f32np, bf16 = np.float32, jnp.bfloat16

    # ---- conv1: tap roll offsets + boundary (zero-padding) masks + im2col weight ----
    shifts1, inb1 = [], []
    for dt in range(3):
        for dw in range(3):
            for dh in range(3):
                shifts1.append((dt - 1) * W * H + (dw - 1) * H + (dh - 1))
                msk = np.zeros((T1, W, H), f32np)
                msk[max(0, 1 - dt):min(T1, T1 + 1 - dt),
                    max(0, 1 - dw):min(W, W + 1 - dw),
                    max(0, 1 - dh):min(H, H + 1 - dh)] = 1.0
                inb1.append(msk.reshape(-1))
    inb1 = np.stack(inb1)                                             # (27, P1)
    mask1 = np.tile(np.repeat(inb1.T, bands, axis=1), (BB, 1))        # (BB*P1, 27*bands)
    w1im = jnp.transpose(params["conv1_w"], (2, 3, 4, 1, 0)).reshape(27 * bands, C1).astype(bf16)

    # ---- pool1: roll/max shifts + downsample-and-zero-embed selector (into conv2 grid) ----
    pshifts1 = (1, H, W * H)
    ds1 = np.zeros((BB * P3, BB * P1), f32np)   # NOTE: grows O(BB^2 * P1 * P3); fine at these sizes
    for b in range(BB):
        for t in range(T3):
            for w in range(W3):
                for h in range(H3):
                    if w < W2 and h < H2:                 # real pool1 output, else zero row (pad)
                        r = b * P3 + (t * W3 + w) * H3 + h
                        c = b * P1 + ((2 * t) * W + 2 * w) * H + 2 * h
                        ds1[r, c] = 1.0

    # ---- conv2: tap roll offsets on the embedded (T3,W3,H3) grid + masks + weight ----
    shifts2, inb2 = [], []
    for dt in range(3):
        for dw in range(2):
            for dh in range(2):
                shifts2.append((dt - 1) * W3 * H3 + (dw - 1) * H3 + (dh - 1))
                msk = np.zeros((T3, W3, H3), f32np)
                msk[max(0, 1 - dt):min(T3, T3 + 1 - dt),
                    max(0, 1 - dw):min(W3, W3 + 1 - dw),
                    max(0, 1 - dh):min(H3, H3 + 1 - dh)] = 1.0
                inb2.append(msk.reshape(-1))
    inb2 = np.stack(inb2)                                             # (12, P3)
    mask2 = np.tile(np.repeat(inb2.T, C1, axis=1), (BB, 1))           # (BB*P3, 12*C1)
    w2im = jnp.transpose(params["conv2_w"], (2, 3, 4, 1, 0)).reshape(12 * C1, C2).astype(bf16)

    # ---- pool2: roll/max shifts + duplicating downsample selector ----
    pshifts2 = (1, H3)
    ds2 = np.zeros((t_len * BB * t_len, BB * P3), f32np)
    for t in range(t_len):
        for b in range(BB):
            for tp in range(t_len):
                ds2[(t * BB + b) * t_len + tp, b * P3 + t * W3 * H3] = 1.0

    # ---- BN (inference) folded to scale/shift; conv biases packed (one small DMA) ----
    sc1 = params["bn1_gamma"] / jnp.sqrt(params["bn1_var"] + eps)
    sh1 = params["bn1_beta"] - params["bn1_mean"] * sc1
    sc2 = params["bn2_gamma"] / jnp.sqrt(params["bn2_var"] + eps)
    sh2 = params["bn2_beta"] - params["bn2_mean"] * sc2
    side = jnp.zeros((8, C2), jnp.float32)
    side = side.at[0, :C1].set(params["conv1_b"]).at[1, :C1].set(sc1).at[2, :C1].set(sh1)
    side = side.at[3, :].set(params["conv2_b"]).at[4, :].set(sc2).at[5, :].set(sh2)

    # ---- torch .view(B,t,-1) + Linear: dense per-tau weight slices + 0/1 row gate ----
    lin_w = np.asarray(params["lin_w"], f32np)                        # (D, feat)
    mblk = np.zeros((t_len, BB * t_len, C2), f32np)
    wfin = np.zeros((t_len, C2, D), f32np)
    for tau in range(t_len):
        for c in range(C2):
            m_idx = c * t_len + tau               # torch contiguous (channel-major) index
            wfin[tau, c, :] = lin_w[:, m_idx % feat]
            for b in range(BB):
                mblk[tau, b * t_len + (m_idx // feat), c] = 1.0

    # ---- linear bias + positional encoding (shared across the batch block) ----
    pe = _sinusoidal_pe(75, D)[:t_len]
    bpe = np.tile(np.asarray(params["lin_b"], f32np)[None, :] + pe, (BB, 1))

    # ---- input: (B, years, seq, bands, W, H) -> stacked position-major (B*P1, bands) ----
    xr = (x.reshape(B, T1, bands, W, H)
           .transpose(0, 1, 3, 4, 2)
           .reshape(B * P1, bands)
           .astype(jnp.float32))

    kernel = partial(_bert_embedding_kernel,
                     shifts1=tuple(shifts1), shifts2=tuple(shifts2),
                     pshifts1=pshifts1, pshifts2=pshifts2,
                     t_len=t_len, c1=C1, c2=C2)

    out = pl.pallas_call(
        kernel,
        out_shape=jax.ShapeDtypeStruct((B * t_len, D), jnp.float32),
        grid=(G,),
        in_specs=[
            pl.BlockSpec((BB * P1, bands), lambda i: (i, 0)),               # x (BB batches)
            pl.BlockSpec((BB * P1, 27 * bands), lambda i: (0, 0)),          # conv1 pad mask
            pl.BlockSpec((27 * bands, C1), lambda i: (0, 0)),               # conv1 im2col weight
            pl.BlockSpec((8, C2), lambda i: (0, 0)),                        # biases + BN scale/shift
            pl.BlockSpec((BB * P3, BB * P1), lambda i: (0, 0)),             # pool1 downsample/embed
            pl.BlockSpec((BB * P3, 12 * C1), lambda i: (0, 0)),             # conv2 pad mask
            pl.BlockSpec((12 * C1, C2), lambda i: (0, 0)),                  # conv2 im2col weight
            pl.BlockSpec((t_len * BB * t_len, BB * P3), lambda i: (0, 0)),  # pool2 downsample
            pl.BlockSpec((t_len, BB * t_len, C2), lambda i: (0, 0, 0)),     # view row gate
            pl.BlockSpec((t_len, C2, D), lambda i: (0, 0, 0)),              # per-tau linear W
            pl.BlockSpec((BB * t_len, D), lambda i: (0, 0)),                # lin bias + PE
        ],
        out_specs=pl.BlockSpec((BB * t_len, D), lambda i: (i, 0)),
        compiler_params=pltpu.CompilerParams(
            dimension_semantics=("parallel",)),
    )(xr, jnp.asarray(mask1), w1im, side, jnp.asarray(ds1, bf16),
      jnp.asarray(mask2), w2im, jnp.asarray(ds2, bf16),
      jnp.asarray(mblk), jnp.asarray(wfin, bf16), jnp.asarray(bpe))

    return out.reshape(B, t_len, D)


# ----------------------------- params -----------------------------

def init_params(key):
    ks = jax.random.split(key, 16)

    def n(k, shape, scale=0.05):
        return scale * jax.random.normal(k, shape, dtype=jnp.float32)

    return dict(
        conv1_w=n(ks[0], (32, 10, 3, 3, 3)),
        conv1_b=n(ks[1], (32,)),
        bn1_gamma=1.0 + 0.1 * jax.random.normal(ks[2], (32,), jnp.float32),
        bn1_beta=n(ks[3], (32,)),
        bn1_mean=n(ks[4], (32,)),
        bn1_var=jnp.abs(1.0 + 0.1 * jax.random.normal(ks[5], (32,), jnp.float32)),
        conv2_w=n(ks[6], (64, 32, 3, 2, 2)),
        conv2_b=n(ks[7], (64,)),
        bn2_gamma=1.0 + 0.1 * jax.random.normal(ks[8], (64,), jnp.float32),
        bn2_beta=n(ks[9], (64,)),
        bn2_mean=n(ks[10], (64,)),
        bn2_var=jnp.abs(1.0 + 0.1 * jax.random.normal(ks[11], (64,), jnp.float32)),
        lin_w=n(ks[12], (256, 64)),
        lin_b=n(ks[13], (256,)),
    )


if __name__ == "__main__":
    key = jax.random.PRNGKey(0)
    pkey, xkey = jax.random.split(key)
    params = init_params(pkey)

    # (B, years, seq, bands, W, H); bands=10 (conv1 in_channels), W=H=4 so the
    # conv/pool stack ends at 1x1 spatial -> 64 features (linear in_features).
    x = jax.random.normal(xkey, (2, 2, 4, 10, 4, 4), dtype=jnp.float32)

    fwd = jax.jit(lambda inp: bert_embedding_forward(inp, params))
    out = fwd(x)
    jax.block_until_ready(out)
    assert out.shape == (2, 4, 256), out.shape
    assert bool(jnp.all(jnp.isfinite(out)))
    print("KERNEL_OK")
</pallas_src>

<mosaic_0001>
module attributes {stable_mosaic.version = 11 : i64} {
  func.func @_bert_embedding_kernel(%arg0: i32, %arg1: memref<256x10xf32, #tpu.memory_space<vmem>>, %arg2: memref<256x270xf32, #tpu.memory_space<vmem>>, %arg3: memref<270x32xbf16, #tpu.memory_space<vmem>>, %arg4: memref<8x64xf32, #tpu.memory_space<vmem>>, %arg5: memref<72x256xbf16, #tpu.memory_space<vmem>>, %arg6: memref<72x384xf32, #tpu.memory_space<vmem>>, %arg7: memref<384x64xbf16, #tpu.memory_space<vmem>>, %arg8: memref<32x72xbf16, #tpu.memory_space<vmem>>, %arg9: memref<4x8x64xf32, #tpu.memory_space<vmem>>, %arg10: memref<4x64x256xbf16, #tpu.memory_space<vmem>>, %arg11: memref<8x256xf32, #tpu.memory_space<vmem>>, %arg12: memref<8x256xf32, #tpu.memory_space<vmem>>) attributes {dimension_semantics = [#tpu.dimension_semantics<parallel>], iteration_bounds = array<i64: 1>, scalar_prefetch = 0 : i64, scratch_operands = 0 : i64, tpu.core_type = #tpu.core_type<tc>, window_params = [{transform_indices = @transform_0, window_bounds = array<i64: 256, 10>}, {pipeline_mode = #tpu.pipeline_mode<synchronous>, transform_indices = @transform_1, window_bounds = array<i64: 256, 270>}, {pipeline_mode = #tpu.pipeline_mode<synchronous>, transform_indices = @transform_2, window_bounds = array<i64: 270, 32>}, {pipeline_mode = #tpu.pipeline_mode<synchronous>, transform_indices = @transform_3, window_bounds = array<i64: 8, 64>}, {pipeline_mode = #tpu.pipeline_mode<synchronous>, transform_indices = @transform_4, window_bounds = array<i64: 72, 256>}, {pipeline_mode = #tpu.pipeline_mode<synchronous>, transform_indices = @transform_5, window_bounds = array<i64: 72, 384>}, {pipeline_mode = #tpu.pipeline_mode<synchronous>, transform_indices = @transform_6, window_bounds = array<i64: 384, 64>}, {pipeline_mode = #tpu.pipeline_mode<synchronous>, transform_indices = @transform_7, window_bounds = array<i64: 32, 72>}, {pipeline_mode = #tpu.pipeline_mode<synchronous>, transform_indices = @transform_8, window_bounds = array<i64: 4, 8, 64>}, {pipeline_mode = #tpu.pipeline_mode<synchronous>, transform_indices = @transform_9, window_bounds = array<i64: 4, 64, 256>}, {pipeline_mode = #tpu.pipeline_mode<synchronous>, transform_indices = @transform_10, window_bounds = array<i64: 8, 256>}, {transform_indices = @transform_11, window_bounds = array<i64: 8, 256>}]} {
    %c0 = arith.constant 0 : index
    %c0_0 = arith.constant 0 : index
    %0 = vector.load %arg1[%c0, %c0_0] : memref<256x10xf32, #tpu.memory_space<vmem>>, vector<256x10xf32>
    %c21_i32 = arith.constant 21 : i32
    %1 = tpu.dynamic_rotate %0 by %c21_i32 dim 0 : vector<256x10xf32>, i32 -> vector<256x10xf32>
    %c20_i32 = arith.constant 20 : i32
    %2 = tpu.dynamic_rotate %0 by %c20_i32 dim 0 : vector<256x10xf32>, i32 -> vector<256x10xf32>
    %c19_i32 = arith.constant 19 : i32
    %3 = tpu.dynamic_rotate %0 by %c19_i32 dim 0 : vector<256x10xf32>, i32 -> vector<256x10xf32>
    %c17_i32 = arith.constant 17 : i32
    %4 = tpu.dynamic_rotate %0 by %c17_i32 dim 0 : vector<256x10xf32>, i32 -> vector<256x10xf32>
    %c16_i32 = arith.constant 16 : i32
    %5 = tpu.dynamic_rotate %0 by %c16_i32 dim 0 : vector<256x10xf32>, i32 -> vector<256x10xf32>
    %c15_i32 = arith.constant 15 : i32
    %6 = tpu.dynamic_rotate %0 by %c15_i32 dim 0 : vector<256x10xf32>, i32 -> vector<256x10xf32>
    %c13_i32 = arith.constant 13 : i32
    %7 = tpu.dynamic_rotate %0 by %c13_i32 dim 0 : vector<256x10xf32>, i32 -> vector<256x10xf32>
    %c12_i32 = arith.constant 12 : i32
    %8 = tpu.dynamic_rotate %0 by %c12_i32 dim 0 : vector<256x10xf32>, i32 -> vector<256x10xf32>
    %c11_i32 = arith.constant 11 : i32
    %9 = tpu.dynamic_rotate %0 by %c11_i32 dim 0 : vector<256x10xf32>, i32 -> vector<256x10xf32>
    %c5_i32 = arith.constant 5 : i32
    %10 = tpu.dynamic_rotate %0 by %c5_i32 dim 0 : vector<256x10xf32>, i32 -> vector<256x10xf32>
    %c4_i32 = arith.constant 4 : i32
    %11 = tpu.dynamic_rotate %0 by %c4_i32 dim 0 : vector<256x10xf32>, i32 -> vector<256x10xf32>
    %c3_i32 = arith.constant 3 : i32
    %12 = tpu.dynamic_rotate %0 by %c3_i32 dim 0 : vector<256x10xf32>, i32 -> vector<256x10xf32>
    %c1_i32 = arith.constant 1 : i32
    %13 = tpu.dynamic_rotate %0 by %c1_i32 dim 0 : vector<256x10xf32>, i32 -> vector<256x10xf32>
    %c255_i32 = arith.constant 255 : i32
    %14 = tpu.dynamic_rotate %0 by %c255_i32 dim 0 : vector<256x10xf32>, i32 -> vector<256x10xf32>
    %c253_i32 = arith.constant 253 : i32
    %15 = tpu.dynamic_rotate %0 by %c253_i32 dim 0 : vector<256x10xf32>, i32 -> vector<256x10xf32>
    %c252_i32 = arith.constant 252 : i32
    %16 = tpu.dynamic_rotate %0 by %c252_i32 dim 0 : vector<256x10xf32>, i32 -> vector<256x10xf32>
    %c251_i32 = arith.constant 251 : i32
    %17 = tpu.dynamic_rotate %0 by %c251_i32 dim 0 : vector<256x10xf32>, i32 -> vector<256x10xf32>
    %c245_i32 = arith.constant 245 : i32
    %18 = tpu.dynamic_rotate %0 by %c245_i32 dim 0 : vector<256x10xf32>, i32 -> vector<256x10xf32>
    %c244_i32 = arith.constant 244 : i32
    %19 = tpu.dynamic_rotate %0 by %c244_i32 dim 0 : vector<256x10xf32>, i32 -> vector<256x10xf32>
    %c243_i32 = arith.constant 243 : i32
    %20 = tpu.dynamic_rotate %0 by %c243_i32 dim 0 : vector<256x10xf32>, i32 -> vector<256x10xf32>
    %c241_i32 = arith.constant 241 : i32
    %21 = tpu.dynamic_rotate %0 by %c241_i32 dim 0 : vector<256x10xf32>, i32 -> vector<256x10xf32>
    %c240_i32 = arith.constant 240 : i32
    %22 = tpu.dynamic_rotate %0 by %c240_i32 dim 0 : vector<256x10xf32>, i32 -> vector<256x10xf32>
    %c239_i32 = arith.constant 239 : i32
    %23 = tpu.dynamic_rotate %0 by %c239_i32 dim 0 : vector<256x10xf32>, i32 -> vector<256x10xf32>
    %c237_i32 = arith.constant 237 : i32
    %24 = tpu.dynamic_rotate %0 by %c237_i32 dim 0 : vector<256x10xf32>, i32 -> vector<256x10xf32>
    %c236_i32 = arith.constant 236 : i32
    %25 = tpu.dynamic_rotate %0 by %c236_i32 dim 0 : vector<256x10xf32>, i32 -> vector<256x10xf32>
    %c235_i32 = arith.constant 235 : i32
    %26 = tpu.dynamic_rotate %0 by %c235_i32 dim 0 : vector<256x10xf32>, i32 -> vector<256x10xf32>
    %27 = tpu.concatenate %1, %2, %3, %4, %5, %6, %7, %8, %9, %10, %11, %12, %13, %0, %14, %15 in 1 : vector<256x10xf32>, vector<256x10xf32>, vector<256x10xf32>, vector<256x10xf32>, vector<256x10xf32>, vector<256x10xf32>, vector<256x10xf32>, vector<256x10xf32>, vector<256x10xf32>, vector<256x10xf32>, vector<256x10xf32>, vector<256x10xf32>, vector<256x10xf32>, vector<256x10xf32>, vector<256x10xf32>, vector<256x10xf32> -> vector<256x160xf32>
    %28 = tpu.concatenate %16, %17, %18, %19, %20, %21, %22, %23, %24, %25, %26 in 1 : vector<256x10xf32>, vector<256x10xf32>, vector<256x10xf32>, vector<256x10xf32>, vector<256x10xf32>, vector<256x10xf32>, vector<256x10xf32>, vector<256x10xf32>, vector<256x10xf32>, vector<256x10xf32>, vector<256x10xf32> -> vector<256x110xf32>
    %29 = tpu.concatenate %27, %28 in 1 : vector<256x160xf32>, vector<256x110xf32> -> vector<256x270xf32>
    %c0_1 = arith.constant 0 : index
    %c0_2 = arith.constant 0 : index
    %30 = vector.load %arg2[%c0_1, %c0_2] : memref<256x270xf32, #tpu.memory_space<vmem>>, vector<256x270xf32>
    %31 = arith.mulf %29, %30 : vector<256x270xf32>
    %32 = arith.truncf %31 : vector<256x270xf32> to vector<256x270xbf16>
    %c0_3 = arith.constant 0 : index
    %c0_4 = arith.constant 0 : index
    %33 = vector.load %arg3[%c0_3, %c0_4] : memref<270x32xbf16, #tpu.memory_space<vmem>>, vector<270x32xbf16>
    %cst = arith.constant dense<0.000000e+00> : vector<256x32xf32>
    %34 = tpu.matmul %32, %33, %cst {dimension_numbers = #tpu.dot_dimension_numbers<[1], [0], [0], [1], [0, 0, 1, 1], [], []>} : vector<256x270xbf16>, vector<270x32xbf16>, vector<256x32xf32> -> vector<256x32xf32>
    %c0_5 = arith.constant 0 : index
    %c0_6 = arith.constant 0 : index
    %35 = vector.load %arg4[%c0_5, %c0_6] : memref<8x64xf32, #tpu.memory_space<vmem>>, vector<1x32xf32>
    %36 = vector.broadcast %35 : vector<1x32xf32> to vector<256x32xf32>
    %37 = arith.addf %34, %36 : vector<256x32xf32>
    %cst_7 = arith.constant 0.000000e+00 : f32
    %38 = vector.broadcast %cst_7 : f32 to vector<256x32xf32>
    %39 = arith.maximumf %37, %38 : vector<256x32xf32>
    %c1 = arith.constant 1 : index
    %c0_8 = arith.constant 0 : index
    %40 = vector.load %arg4[%c1, %c0_8] : memref<8x64xf32, #tpu.memory_space<vmem>>, vector<1x32xf32>
    %41 = vector.broadcast %40 : vector<1x32xf32> to vector<256x32xf32>
    %42 = arith.mulf %39, %41 : vector<256x32xf32>
    %c2 = arith.constant 2 : index
    %c0_9 = arith.constant 0 : index
    %43 = vector.load %arg4[%c2, %c0_9] : memref<8x64xf32, #tpu.memory_space<vmem>>, vector<1x32xf32>
    %44 = vector.broadcast %43 : vector<1x32xf32> to vector<256x32xf32>
    %45 = arith.addf %42, %44 : vector<256x32xf32>
    %c255_i32_10 = arith.constant 255 : i32
    %46 = tpu.dynamic_rotate %45 by %c255_i32_10 dim 0 : vector<256x32xf32>, i32 -> vector<256x32xf32>
    %47 = arith.maximumf %45, %46 : vector<256x32xf32>
    %c252_i32_11 = arith.constant 252 : i32
    %48 = tpu.dynamic_rotate %47 by %c252_i32_11 dim 0 : vector<256x32xf32>, i32 -> vector<256x32xf32>
    %49 = arith.maximumf %47, %48 : vector<256x32xf32>
    %c240_i32_12 = arith.constant 240 : i32
    %50 = tpu.dynamic_rotate %49 by %c240_i32_12 dim 0 : vector<256x32xf32>, i32 -> vector<256x32xf32>
    %51 = arith.maximumf %49, %50 : vector<256x32xf32>
    %c0_13 = arith.constant 0 : index
    %c0_14 = arith.constant 0 : index
    %52 = vector.load %arg5[%c0_13, %c0_14] : memref<72x256xbf16, #tpu.memory_space<vmem>>, vector<72x256xbf16>
    %53 = arith.truncf %51 : vector<256x32xf32> to vector<256x32xbf16>
    %cst_15 = arith.constant dense<0.000000e+00> : vector<72x32xf32>
    %54 = tpu.matmul %52, %53, %cst_15 {dimension_numbers = #tpu.dot_dimension_numbers<[1], [0], [0], [1], [0, 0, 1, 1], [], []>} : vector<72x256xbf16>, vector<256x32xbf16>, vector<72x32xf32> -> vector<72x32xf32>
    %c13_i32_16 = arith.constant 13 : i32
    %55 = tpu.dynamic_rotate %54 by %c13_i32_16 dim 0 : vector<72x32xf32>, i32 -> vector<72x32xf32>
    %c12_i32_17 = arith.constant 12 : i32
    %56 = tpu.dynamic_rotate %54 by %c12_i32_17 dim 0 : vector<72x32xf32>, i32 -> vector<72x32xf32>
    %c10_i32 = arith.constant 10 : i32
    %57 = tpu.dynamic_rotate %54 by %c10_i32 dim 0 : vector<72x32xf32>, i32 -> vector<72x32xf32>
    %c9_i32 = arith.constant 9 : i32
    %58 = tpu.dynamic_rotate %54 by %c9_i32 dim 0 : vector<72x32xf32>, i32 -> vector<72x32xf32>
    %c4_i32_18 = arith.constant 4 : i32
    %59 = tpu.dynamic_rotate %54 by %c4_i32_18 dim 0 : vector<72x32xf32>, i32 -> vector<72x32xf32>
    %c3_i32_19 = arith.constant 3 : i32
    %60 = tpu.dynamic_rotate %54 by %c3_i32_19 dim 0 : vector<72x32xf32>, i32 -> vector<72x32xf32>
    %c1_i32_20 = arith.constant 1 : i32
    %61 = tpu.dynamic_rotate %54 by %c1_i32_20 dim 0 : vector<72x32xf32>, i32 -> vector<72x32xf32>
    %c67_i32 = arith.constant 67 : i32
    %62 = tpu.dynamic_rotate %54 by %c67_i32 dim 0 : vector<72x32xf32>, i32 -> vector<72x32xf32>
    %c66_i32 = arith.constant 66 : i32
    %63 = tpu.dynamic_rotate %54 by %c66_i32 dim 0 : vector<72x32xf32>, i32 -> vector<72x32xf32>
    %c64_i32 = arith.constant 64 : i32
    %64 = tpu.dynamic_rotate %54 by %c64_i32 dim 0 : vector<72x32xf32>, i32 -> vector<72x32xf32>
    %c63_i32 = arith.constant 63 : i32
    %65 = tpu.dynamic_rotate %54 by %c63_i32 dim 0 : vector<72x32xf32>, i32 -> vector<72x32xf32>
    %66 = tpu.concatenate %55, %56, %57, %58, %59, %60, %61, %54, %62, %63, %64, %65 in 1 : vector<72x32xf32>, vector<72x32xf32>, vector<72x32xf32>, vector<72x32xf32>, vector<72x32xf32>, vector<72x32xf32>, vector<72x32xf32>, vector<72x32xf32>, vector<72x32xf32>, vector<72x32xf32>, vector<72x32xf32>, vector<72x32xf32> -> vector<72x384xf32>
    %c0_21 = arith.constant 0 : index
    %c0_22 = arith.constant 0 : index
    %67 = vector.load %arg6[%c0_21, %c0_22] : memref<72x384xf32, #tpu.memory_space<vmem>>, vector<72x384xf32>
    %68 = arith.mulf %66, %67 : vector<72x384xf32>
    %69 = arith.truncf %68 : vector<72x384xf32> to vector<72x384xbf16>
    %c0_23 = arith.constant 0 : index
    %c0_24 = arith.constant 0 : index
    %70 = vector.load %arg7[%c0_23, %c0_24] : memref<384x64xbf16, #tpu.memory_space<vmem>>, vector<384x64xbf16>
    %cst_25 = arith.constant dense<0.000000e+00> : vector<72x64xf32>
    %71 = tpu.matmul %69, %70, %cst_25 {dimension_numbers = #tpu.dot_dimension_numbers<[1], [0], [0], [1], [0, 0, 1, 1], [], []>} : vector<72x384xbf16>, vector<384x64xbf16>, vector<72x64xf32> -> vector<72x64xf32>
    %c3 = arith.constant 3 : index
    %c0_26 = arith.constant 0 : index
    %72 = vector.load %arg4[%c3, %c0_26] : memref<8x64xf32, #tpu.memory_space<vmem>>, vector<1x64xf32>
    %73 = vector.broadcast %72 : vector<1x64xf32> to vector<72x64xf32>
    %74 = arith.addf %71, %73 : vector<72x64xf32>
    %cst_27 = arith.constant 0.000000e+00 : f32
    %75 = vector.broadcast %cst_27 : f32 to vector<72x64xf32>
    %76 = arith.maximumf %74, %75 : vector<72x64xf32>
    %c4 = arith.constant 4 : index
    %c0_28 = arith.constant 0 : index
    %77 = vector.load %arg4[%c4, %c0_28] : memref<8x64xf32, #tpu.memory_space<vmem>>, vector<1x64xf32>
    %78 = vector.broadcast %77 : vector<1x64xf32> to vector<72x64xf32>
    %79 = arith.mulf %76, %78 : vector<72x64xf32>
    %c5 = arith.constant 5 : index
    %c0_29 = arith.constant 0 : index
    %80 = vector.load %arg4[%c5, %c0_29] : memref<8x64xf32, #tpu.memory_space<vmem>>, vector<1x64xf32>
    %81 = vector.broadcast %80 : vector<1x64xf32> to vector<72x64xf32>
    %82 = arith.addf %79, %81 : vector<72x64xf32>
    %c71_i32 = arith.constant 71 : i32
    %83 = tpu.dynamic_rotate %82 by %c71_i32 dim 0 : vector<72x64xf32>, i32 -> vector<72x64xf32>
    %84 = arith.maximumf %82, %83 : vector<72x64xf32>
    %c69_i32 = arith.constant 69 : i32
    %85 = tpu.dynamic_rotate %84 by %c69_i32 dim 0 : vector<72x64xf32>, i32 -> vector<72x64xf32>
    %86 = arith.maximumf %84, %85 : vector<72x64xf32>
    %c0_30 = arith.constant 0 : index
    %c0_31 = arith.constant 0 : index
    %87 = vector.load %arg8[%c0_30, %c0_31] : memref<32x72xbf16, #tpu.memory_space<vmem>>, vector<32x72xbf16>
    %88 = arith.truncf %86 : vector<72x64xf32> to vector<72x64xbf16>
    %cst_32 = arith.constant dense<0.000000e+00> : vector<32x64xf32>
    %89 = tpu.matmul %87, %88, %cst_32 {dimension_numbers = #tpu.dot_dimension_numbers<[1], [0], [0], [1], [0, 0, 1, 1], [], []>} : vector<32x72xbf16>, vector<72x64xbf16>, vector<32x64xf32> -> vector<32x64xf32>
    %c0_33 = arith.constant 0 : index
    %c0_34 = arith.constant 0 : index
    %90 = vector.load %arg11[%c0_33, %c0_34] : memref<8x256xf32, #tpu.memory_space<vmem>>, vector<8x256xf32>
    %91 = vector.extract_strided_slice %89 {offsets = [0, 0], sizes = [8, 64], strides = [1, 1]} : vector<32x64xf32> to vector<8x64xf32>
    %c0_35 = arith.constant 0 : index
    %c0_36 = arith.constant 0 : index
    %c0_37 = arith.constant 0 : index
    %92 = vector.load %arg9[%c0_35, %c0_36, %c0_37] : memref<4x8x64xf32, #tpu.memory_space<vmem>>, vector<1x8x64xf32>
    %93 = vector.shape_cast %92 : vector<1x8x64xf32> to vector<8x64xf32>
    %94 = arith.mulf %91, %93 : vector<8x64xf32>
    %95 = arith.truncf %94 : vector<8x64xf32> to vector<8x64xbf16>
    %c0_38 = arith.constant 0 : index
    %c0_39 = arith.constant 0 : index
    %c0_40 = arith.constant 0 : index
    %96 = vector.load %arg10[%c0_38, %c0_39, %c0_40] : memref<4x64x256xbf16, #tpu.memory_space<vmem>>, vector<1x64x256xbf16>
    %97 = vector.shape_cast %96 : vector<1x64x256xbf16> to vector<64x256xbf16>
    %cst_41 = arith.constant dense<0.000000e+00> : vector<8x256xf32>
    %98 = tpu.matmul %95, %97, %cst_41 {dimension_numbers = #tpu.dot_dimension_numbers<[1], [0], [0], [1], [0, 0, 1, 1], [], []>} : vector<8x64xbf16>, vector<64x256xbf16>, vector<8x256xf32> -> vector<8x256xf32>
    %99 = arith.addf %90, %98 : vector<8x256xf32>
    %100 = vector.extract_strided_slice %89 {offsets = [8, 0], sizes = [8, 64], strides = [1, 1]} : vector<32x64xf32> to vector<8x64xf32>
    %c1_42 = arith.constant 1 : index
    %c0_43 = arith.constant 0 : index
    %c0_44 = arith.constant 0 : index
    %101 = vector.load %arg9[%c1_42, %c0_43, %c0_44] : memref<4x8x64xf32, #tpu.memory_space<vmem>>, vector<1x8x64xf32>
    %102 = vector.shape_cast %101 : vector<1x8x64xf32> to vector<8x64xf32>
    %103 = arith.mulf %100, %102 : vector<8x64xf32>
    %104 = arith.truncf %103 : vector<8x64xf32> to vector<8x64xbf16>
    %c1_45 = arith.constant 1 : index
    %c0_46 = arith.constant 0 : index
    %c0_47 = arith.constant 0 : index
    %105 = vector.load %arg10[%c1_45, %c0_46, %c0_47] : memref<4x64x256xbf16, #tpu.memory_space<vmem>>, vector<1x64x256xbf16>
    %106 = vector.shape_cast %105 : vector<1x64x256xbf16> to vector<64x256xbf16>
    %cst_48 = arith.constant dense<0.000000e+00> : vector<8x256xf32>
    %107 = tpu.matmul %104, %106, %cst_48 {dimension_numbers = #tpu.dot_dimension_numbers<[1], [0], [0], [1], [0, 0, 1, 1], [], []>} : vector<8x64xbf16>, vector<64x256xbf16>, vector<8x256xf32> -> vector<8x256xf32>
    %108 = arith.addf %99, %107 : vector<8x256xf32>
    %109 = vector.extract_strided_slice %89 {offsets = [16, 0], sizes = [8, 64], strides = [1, 1]} : vector<32x64xf32> to vector<8x64xf32>
    %c2_49 = arith.constant 2 : index
    %c0_50 = arith.constant 0 : index
    %c0_51 = arith.constant 0 : index
    %110 = vector.load %arg9[%c2_49, %c0_50, %c0_51] : memref<4x8x64xf32, #tpu.memory_space<vmem>>, vector<1x8x64xf32>
    %111 = vector.shape_cast %110 : vector<1x8x64xf32> to vector<8x64xf32>
    %112 = arith.mulf %109, %111 : vector<8x64xf32>
    %113 = arith.truncf %112 : vector<8x64xf32> to vector<8x64xbf16>
    %c2_52 = arith.constant 2 : index
    %c0_53 = arith.constant 0 : index
    %c0_54 = arith.constant 0 : index
    %114 = vector.load %arg10[%c2_52, %c0_53, %c0_54] : memref<4x64x256xbf16, #tpu.memory_space<vmem>>, vector<1x64x256xbf16>
    %115 = vector.shape_cast %114 : vector<1x64x256xbf16> to vector<64x256xbf16>
    %cst_55 = arith.constant dense<0.000000e+00> : vector<8x256xf32>
    %116 = tpu.matmul %113, %115, %cst_55 {dimension_numbers = #tpu.dot_dimension_numbers<[1], [0], [0], [1], [0, 0, 1, 1], [], []>} : vector<8x64xbf16>, vector<64x256xbf16>, vector<8x256xf32> -> vector<8x256xf32>
    %117 = arith.addf %108, %116 : vector<8x256xf32>
    %118 = vector.extract_strided_slice %89 {offsets = [24, 0], sizes = [8, 64], strides = [1, 1]} : vector<32x64xf32> to vector<8x64xf32>
    %c3_56 = arith.constant 3 : index
    %c0_57 = arith.constant 0 : index
    %c0_58 = arith.constant 0 : index
    %119 = vector.load %arg9[%c3_56, %c0_57, %c0_58] : memref<4x8x64xf32, #tpu.memory_space<vmem>>, vector<1x8x64xf32>
    %120 = vector.shape_cast %119 : vector<1x8x64xf32> to vector<8x64xf32>
    %121 = arith.mulf %118, %120 : vector<8x64xf32>
    %122 = arith.truncf %121 : vector<8x64xf32> to vector<8x64xbf16>
    %c3_59 = arith.constant 3 : index
    %c0_60 = arith.constant 0 : index
    %c0_61 = arith.constant 0 : index
    %123 = vector.load %arg10[%c3_59, %c0_60, %c0_61] : memref<4x64x256xbf16, #tpu.memory_space<vmem>>, vector<1x64x256xbf16>
    %124 = vector.shape_cast %123 : vector<1x64x256xbf16> to vector<64x256xbf16>
    %cst_62 = arith.constant dense<0.000000e+00> : vector<8x256xf32>
    %125 = tpu.matmul %122, %124, %cst_62 {dimension_numbers = #tpu.dot_dimension_numbers<[1], [0], [0], [1], [0, 0, 1, 1], [], []>} : vector<8x64xbf16>, vector<64x256xbf16>, vector<8x256xf32> -> vector<8x256xf32>
    %126 = arith.addf %117, %125 : vector<8x256xf32>
    %c0_63 = arith.constant 0 : index
    %c0_64 = arith.constant 0 : index
    %127 = vector.load %arg12[%c0_63, %c0_64] : memref<8x256xf32, #tpu.memory_space<vmem>>, vector<8x256xf32>
    tpu.vector_store %arg12[%c0_63, %c0_64], %126 {strides = array<i32>} : memref<8x256xf32, #tpu.memory_space<vmem>>, vector<8x256xf32>,
    return
  }
  func.func @transform_0(%arg0: i32) -> (i32, i32) {
    %c0_i32 = arith.constant 0 : i32
    %c0_i32_0 = arith.constant 0 : i32
    return %arg0, %c0_i32 : i32, i32
  }
  func.func @transform_1(%arg0: i32) -> (i32, i32) {
    %c0_i32 = arith.constant 0 : i32
    %c0_i32_0 = arith.constant 0 : i32
    %c0_i32_1 = arith.constant 0 : i32
    return %c0_i32, %c0_i32_0 : i32, i32
  }
  func.func @transform_2(%arg0: i32) -> (i32, i32) {
    %c0_i32 = arith.constant 0 : i32
    %c0_i32_0 = arith.constant 0 : i32
    %c0_i32_1 = arith.constant 0 : i32
    return %c0_i32, %c0_i32_0 : i32, i32
  }
  func.func @transform_3(%arg0: i32) -> (i32, i32) {
    %c0_i32 = arith.constant 0 : i32
    %c0_i32_0 = arith.constant 0 : i32
    %c0_i32_1 = arith.constant 0 : i32
    return %c0_i32, %c0_i32_0 : i32, i32
  }
  func.func @transform_4(%arg0: i32) -> (i32, i32) {
    %c0_i32 = arith.constant 0 : i32
    %c0_i32_0 = arith.constant 0 : i32
    %c0_i32_1 = arith.constant 0 : i32
    return %c0_i32, %c0_i32_0 : i32, i32
  }
  func.func @transform_5(%arg0: i32) -> (i32, i32) {
    %c0_i32 = arith.constant 0 : i32
    %c0_i32_0 = arith.constant 0 : i32
    %c0_i32_1 = arith.constant 0 : i32
    return %c0_i32, %c0_i32_0 : i32, i32
  }
  func.func @transform_6(%arg0: i32) -> (i32, i32) {
    %c0_i32 = arith.constant 0 : i32
    %c0_i32_0 = arith.constant 0 : i32
    %c0_i32_1 = arith.constant 0 : i32
    return %c0_i32, %c0_i32_0 : i32, i32
  }
  func.func @transform_7(%arg0: i32) -> (i32, i32) {
    %c0_i32 = arith.constant 0 : i32
    %c0_i32_0 = arith.constant 0 : i32
    %c0_i32_1 = arith.constant 0 : i32
    return %c0_i32, %c0_i32_0 : i32, i32
  }
  func.func @transform_8(%arg0: i32) -> (i32, i32, i32) {
    %c0_i32 = arith.constant 0 : i32
    %c0_i32_0 = arith.constant 0 : i32
    %c0_i32_1 = arith.constant 0 : i32
    %c0_i32_2 = arith.constant 0 : i32
    return %c0_i32, %c0_i32_0, %c0_i32_1 : i32, i32, i32
  }
  func.func @transform_9(%arg0: i32) -> (i32, i32, i32) {
    %c0_i32 = arith.constant 0 : i32
    %c0_i32_0 = arith.constant 0 : i32
    %c0_i32_1 = arith.constant 0 : i32
    %c0_i32_2 = arith.constant 0 : i32
    return %c0_i32, %c0_i32_0, %c0_i32_1 : i32, i32, i32
  }
  func.func @transform_10(%arg0: i32) -> (i32, i32) {
    %c0_i32 = arith.constant 0 : i32
    %c0_i32_0 = arith.constant 0 : i32
    %c0_i32_1 = arith.constant 0 : i32
    return %c0_i32, %c0_i32_0 : i32, i32
  }
  func.func @transform_11(%arg0: i32) -> (i32, i32) {
    %c0_i32 = arith.constant 0 : i32
    %c0_i32_0 = arith.constant 0 : i32
    return %arg0, %c0_i32 : i32, i32
  }
}

</mosaic_0001>

<llo_original>
// kernel: _lambda_.1
$region0: #{_lambda_.1}
  #allocation0 [shape = 'u32[]', space=smem, size = 0x4, offset = 0x4, fixed_abs, tag = 'smem constant byte address 0x4 - core index']
  #allocation1 [shape = 'u32[144,128]{1,0:T(1,128)}', space=vmem, size = 0x12000, scoped, tag = 'internal scratch']
  %s0 = inlined_call_operand.vmem [shape: f32[256,10], index: 0, kind: input, shape index: {}]
  %s1 = inlined_call_operand.hbm [shape: f32[256,270], index: 1, kind: input, shape index: {}]
  %s2 = inlined_call_operand.hbm [shape: bf16[270,32], index: 2, kind: input, shape index: {}]
  %s3 = inlined_call_operand.vmem [shape: f32[8,64], index: 3, kind: input, shape index: {}]
  %s4 = inlined_call_operand.hbm [shape: bf16[72,256], index: 4, kind: input, shape index: {}]
  %s5 = inlined_call_operand.vmem [shape: f32[72,384], index: 5, kind: input, shape index: {}]
  %s6 = inlined_call_operand.hbm [shape: bf16[384,64], index: 6, kind: input, shape index: {}]
  %s7 = inlined_call_operand.vmem [shape: bf16[32,72], index: 7, kind: input, shape index: {}]
  %s8 = inlined_call_operand.vmem [shape: f32[4,8,64], index: 8, kind: input, shape index: {}]
  %s9 = inlined_call_operand.vmem [shape: bf16[4,64,256], index: 9, kind: input, shape index: {}]
  %s10 = inlined_call_operand.vmem [shape: f32[8,256], index: 10, kind: input, shape index: {}]
  %s11 = inlined_call_operand.vmem [shape: f32[8,256], index: 11, kind: output, shape index: {}]
  %s12 = sld [smem:[#allocation0]]
  $region70: #{_lambda_.1} parent=0
    _
  %s14 = ssub.s32 1, %s12
  %s15 = scalar_select 0, %s14, %s12
  $region1: #{_lambda_.1} parent=0
    #allocation2 [shape = 'u8[393216]{0}', space=vmem, size = 0x60000, scoped, tag = 'input window, operand 1, single buffered']
    #allocation3 [shape = 's32[1]{0}', space=sflag, size = 0x4, scoped, tag = 'scoped memory for _lambda_.1']
    #allocation4 [shape = 'u8[69632]{0}', space=vmem, size = 0x11000, scoped, tag = 'input window, operand 2, single buffered']
    #allocation5 [shape = 's32[1]{0}', space=sflag, size = 0x4, scoped, tag = 'scoped memory for _lambda_.1']
    #allocation6 [shape = 'u8[36864]{0}', space=vmem, size = 0x9000, scoped, tag = 'input window, operand 4, single buffered']
    #allocation7 [shape = 'u8[98304]{0}', space=vmem, size = 0x18000, scoped, tag = 'input window, operand 6, single buffered']
    #allocation8 [shape = 's32[1]{0}', space=sflag, size = 0x4, scoped, tag = 'scoped memory for _lambda_.1']
    %16 = vsyncpa [#allocation3], 0
    %17 = vsyncpa [#allocation5], 0
    %18 = vsyncpa [#allocation8], 0
    // Predicated region
    $region2: #{_lambda_.1} parent=1 // pred_check
      _
    $region3: #{_lambda_.1} parent=1 // pred_check_branch
      %20 = sbr.rel (0) target = $region5
    $region4: #{_lambda_.1} parent=1 // pred_region
      _
    $region5: #{_lambda_.1} parent=1 // pred_fallthru
      _
    // Predicated region
    $region6: #{_lambda_.1} parent=1 // pred_check
      _
    $region7: #{_lambda_.1} parent=1 // pred_check_branch
      %22 = sbr.rel (0) target = $region9
    $region8: #{_lambda_.1} parent=1 // pred_region
      %s24 = ssub.s32 12288, 12288
      %25 = vsyncadd [#allocation3], %s24
      %s26 = sshll.u32 [#allocation2], 4
      %s27 = int_to_ptr.vmem [resolvable:$true] %s26
      %32 = dma.hbm_to_vmem [thread:$0]  %s1, 12288, %s27, [#allocation3], 384, 384, 24
    $region9: #{_lambda_.1} parent=1 // pred_fallthru
      _
    // Predicated region
    $region10: #{_lambda_.1} parent=1 // pred_check
      _
    $region11: #{_lambda_.1} parent=1 // pred_check_branch
      %34 = sbr.rel (0) target = $region13
    $region12: #{_lambda_.1} parent=1 // pred_region
      %s36 = ssub.s32 2176, 2176
      %37 = vsyncadd [#allocation5], %s36
      %s38 = sshll.u32 [#allocation4], 4
      %s39 = int_to_ptr.vmem [resolvable:$true] %s38
      %44 = dma.hbm_to_vmem [thread:$0]  %s2, 2176, %s39, [#allocation5], 64, 64, 4
    $region13: #{_lambda_.1} parent=1 // pred_fallthru
      _
    // Predicated region
    $region14: #{_lambda_.1} parent=1 // pred_check
      _
    $region15: #{_lambda_.1} parent=1 // pred_check_branch
      %46 = sbr.rel (0) target = $region17
    $region16: #{_lambda_.1} parent=1 // pred_region
      _
    $region17: #{_lambda_.1} parent=1 // pred_fallthru
      _
    // Predicated region
    $region18: #{_lambda_.1} parent=1 // pred_check
      _
    $region19: #{_lambda_.1} parent=1 // pred_check_branch
      %48 = sbr.rel (0) target = $region21
    $region20: #{_lambda_.1} parent=1 // pred_region
      %s50 = ssub.s32 1152, 1152
      %51 = vsyncadd [#allocation5], %s50
      %s52 = sshll.u32 [#allocation6], 4
      %s53 = int_to_ptr.vmem [resolvable:$true] %s52
      %58 = dma.hbm_to_vmem [thread:$0]  %s4, 1152, %s53, [#allocation5], 128, 128, 8
    $region21: #{_lambda_.1} parent=1 // pred_fallthru
      _
    // Predicated region
    $region22: #{_lambda_.1} parent=1 // pred_check
      _
    $region23: #{_lambda_.1} parent=1 // pred_check_branch
      %60 = sbr.rel (0) target = $region25
    $region24: #{_lambda_.1} parent=1 // pred_region
      _
    $region25: #{_lambda_.1} parent=1 // pred_fallthru
      _
    // Predicated region
    $region26: #{_lambda_.1} parent=1 // pred_check
      _
    $region27: #{_lambda_.1} parent=1 // pred_check_branch
      %62 = sbr.rel (0) target = $region29
    $region28: #{_lambda_.1} parent=1 // pred_region
      %s64 = ssub.s32 3072, 3072
      %65 = vsyncadd [#allocation8], %s64
      %s66 = sshll.u32 [#allocation7], 4
      %s67 = int_to_ptr.vmem [resolvable:$true] %s66
      %72 = dma.hbm_to_vmem [thread:$0]  %s6, 3072, %s67, [#allocation8], 64, 64, 4
    $region29: #{_lambda_.1} parent=1 // pred_fallthru
      _
    // Predicated region
    $region30: #{_lambda_.1} parent=1 // pred_check
      _
    $region31: #{_lambda_.1} parent=1 // pred_check_branch
      %74 = sbr.rel (0) target = $region33
    $region32: #{_lambda_.1} parent=1 // pred_region
      _
    $region33: #{_lambda_.1} parent=1 // pred_fallthru
      _
    // Predicated region
    $region34: #{_lambda_.1} parent=1 // pred_check
      _
    $region35: #{_lambda_.1} parent=1 // pred_check_branch
      %76 = sbr.rel (0) target = $region37
    $region36: #{_lambda_.1} parent=1 // pred_region
      _
    $region37: #{_lambda_.1} parent=1 // pred_fallthru
      _
    // Predicated region
    $region38: #{_lambda_.1} parent=1 // pred_check
      _
    $region39: #{_lambda_.1} parent=1 // pred_check_branch
      %78 = sbr.rel (0) target = $region41
    $region40: #{_lambda_.1} parent=1 // pred_region
      _
    $region41: #{_lambda_.1} parent=1 // pred_fallthru
      _
    // Predicated region
    $region42: #{_lambda_.1} parent=1 // pred_check
      _
    $region43: #{_lambda_.1} parent=1 // pred_check_branch
      %80 = sbr.rel (0) target = $region45
    $region44: #{_lambda_.1} parent=1 // pred_region
      _
    $region45: #{_lambda_.1} parent=1 // pred_fallthru
      _
    // Predicated region
    $region46: #{_lambda_.1} parent=1 // pred_check
      _
    $region47: #{_lambda_.1} parent=1 // pred_check_branch
      %82 = sbr.rel (0) target = $region49
    $region48: #{_lambda_.1} parent=1 // pred_region
      %83 = dma.done [#allocation3], 12288
    $region49: #{_lambda_.1} parent=1 // pred_fallthru
      _
    // Predicated region
    $region50: #{_lambda_.1} parent=1 // pred_check
      _
    $region51: #{_lambda_.1} parent=1 // pred_check_branch
      %85 = sbr.rel (0) target = $region53
    $region52: #{_lambda_.1} parent=1 // pred_region
      %86 = dma.done [#allocation5], 2176
    $region53: #{_lambda_.1} parent=1 // pred_fallthru
      _
    // Predicated region
    $region54: #{_lambda_.1} parent=1 // pred_check
      _
    $region55: #{_lambda_.1} parent=1 // pred_check_branch
      %88 = sbr.rel (0) target = $region57
    $region56: #{_lambda_.1} parent=1 // pred_region
      %89 = dma.done [#allocation5], 1152
    $region57: #{_lambda_.1} parent=1 // pred_fallthru
      _
    // Predicated region
    $region58: #{_lambda_.1} parent=1 // pred_check
      _
    $region59: #{_lambda_.1} parent=1 // pred_check_branch
      %91 = sbr.rel (0) target = $region61
    $region60: #{_lambda_.1} parent=1 // pred_region
      %92 = dma.done [#allocation8], 3072
    $region61: #{_lambda_.1} parent=1 // pred_fallthru
      _
    %v94 = vld [vmem:[%s0] sm:$0xff]
    %v95 = vld [vmem:[%s0 + $0x8] sm:$0xff]
    %v96 = vld [vmem:[%s0 + $0x10] sm:$0xff]
    %v97 = vld [vmem:[%s0 + $0x18] sm:$0xff]
    %v98 = vld [vmem:[%s0 + $0x20] sm:$0xff]
    %v99 = vld [vmem:[%s0 + $0x28] sm:$0xff]
    %v100 = vld [vmem:[%s0 + $0x30] sm:$0xff]
    %v101 = vld [vmem:[%s0 + $0x38] sm:$0xff]
    %v102 = vld [vmem:[%s0 + $0x40] sm:$0xff]
    %v103 = vld [vmem:[%s0 + $0x48] sm:$0xff]
    %v104 = vld [vmem:[%s0 + $0x50] sm:$0xff]
    %v105 = vld [vmem:[%s0 + $0x58] sm:$0xff]
    %v106 = vld [vmem:[%s0 + $0x60] sm:$0xff]
    %v107 = vld [vmem:[%s0 + $0x68] sm:$0xff]
    %v108 = vld [vmem:[%s0 + $0x70] sm:$0xff]
    %v109 = vld [vmem:[%s0 + $0x78] sm:$0xff]
    %v110 = vld [vmem:[%s0 + $0x80] sm:$0xff]
    %v111 = vld [vmem:[%s0 + $0x88] sm:$0xff]
    %v112 = vld [vmem:[%s0 + $0x90] sm:$0xff]
    %v113 = vld [vmem:[%s0 + $0x98] sm:$0xff]
    %v114 = vld [vmem:[%s0 + $0xa0] sm:$0xff]
    %v115 = vld [vmem:[%s0 + $0xa8] sm:$0xff]
    %v116 = vld [vmem:[%s0 + $0xb0] sm:$0xff]
    %v117 = vld [vmem:[%s0 + $0xb8] sm:$0xff]
    %v118 = vld [vmem:[%s0 + $0xc0] sm:$0xff]
    %v119 = vld [vmem:[%s0 + $0xc8] sm:$0xff]
    %v120 = vld [vmem:[%s0 + $0xd0] sm:$0xff]
    %v121 = vld [vmem:[%s0 + $0xd8] sm:$0xff]
    %v122 = vld [vmem:[%s0 + $0xe0] sm:$0xff]
    %v123 = vld [vmem:[%s0 + $0xe8] sm:$0xff]
    %v124 = vld [vmem:[%s0 + $0xf0] sm:$0xff]
    %v125 = vld [vmem:[%s0 + $0xf8] sm:$0xff]
    %v126 = vrot.slane %v94, 3
    %v127 = vrot.slane %v95, 3
    %v128 = vrot.slane %v96, 3
    %v129 = vrot.slane %v97, 3
    %v130 = vrot.slane %v98, 3
    %v131 = vrot.slane %v99, 3
    %v132 = vrot.slane %v100, 3
    %v133 = vrot.slane %v101, 3
    %v134 = vrot.slane %v102, 3
    %v135 = vrot.slane %v103, 3
    %v136 = vrot.slane %v104, 3
    %v137 = vrot.slane %v105, 3
    %v138 = vrot.slane %v106, 3
    %v139 = vrot.slane %v107, 3
    %v140 = vrot.slane %v108, 3
    %v141 = vrot.slane %v109, 3
    %v142 = vrot.slane %v110, 3
    %v143 = vrot.slane %v111, 3
    %v144 = vrot.slane %v112, 3
    %v145 = vrot.slane %v113, 3
    %v146 = vrot.slane %v114, 3
    %v147 = vrot.slane %v115, 3
    %v148 = vrot.slane %v116, 3
    %v149 = vrot.slane %v117, 3
    %v150 = vrot.slane %v118, 3
    %v151 = vrot.slane %v119, 3
    %v152 = vrot.slane %v120, 3
    %v153 = vrot.slane %v121, 3
    %v154 = vrot.slane %v122, 3
    %v155 = vrot.slane %v123, 3
    %v156 = vrot.slane %v124, 3
    %v157 = vrot.slane %v125, 3
    %v158 = vlaneseq
    %v159 = vshrl.u32 %v158, 7
    %vm160 = vcmp.lt.s32.totalorder %v159, 5
    %v161 = vsel %vm160, %v156, %v157
    %v162 = vsel %vm160, %v155, %v156
    %v163 = vsel %vm160, %v154, %v155
    %v164 = vsel %vm160, %v153, %v154
    %v165 = vsel %vm160, %v152, %v153
    %v166 = vsel %vm160, %v151, %v152
    %v167 = vsel %vm160, %v150, %v151
    %v168 = vsel %vm160, %v149, %v150
    %v169 = vsel %vm160, %v148, %v149
    %v170 = vsel %vm160, %v147, %v148
    %v171 = vsel %vm160, %v146, %v147
    %v172 = vsel %vm160, %v145, %v146
    %v173 = vsel %vm160, %v144, %v145
    %v174 = vsel %vm160, %v143, %v144
    %v175 = vsel %vm160, %v142, %v143
    %v176 = vsel %vm160, %v141, %v142
    %v177 = vsel %vm160, %v140, %v141
    %v178 = vsel %vm160, %v139, %v140
    %v179 = vsel %vm160, %v138, %v139
    %v180 = vsel %vm160, %v137, %v138
    %v181 = vsel %vm160, %v136, %v137
    %v182 = vsel %vm160, %v135, %v136
    %v183 = vsel %vm160, %v134, %v135
    %v184 = vsel %vm160, %v133, %v134
    %v185 = vsel %vm160, %v132, %v133
    %v186 = vsel %vm160, %v131, %v132
    %v187 = vsel %vm160, %v130, %v131
    %v188 = vsel %vm160, %v129, %v130
    %v189 = vsel %vm160, %v128, %v129
    %v190 = vsel %vm160, %v127, %v128
    %v191 = vsel %vm160, %v126, %v127
    %v192 = vsel %vm160, %v157, %v126
    %v193 = vrot.slane %v94, 4
    %v194 = vrot.slane %v95, 4
    %v195 = vrot.slane %v96, 4
    %v196 = vrot.slane %v97, 4
    %v197 = vrot.slane %v98, 4
    %v198 = vrot.slane %v99, 4
    %v199 = vrot.slane %v100, 4
    %v200 = vrot.slane %v101, 4
    %v201 = vrot.slane %v102, 4
    %v202 = vrot.slane %v103, 4
    %v203 = vrot.slane %v104, 4
    %v204 = vrot.slane %v105, 4
    %v205 = vrot.slane %v106, 4
    %v206 = vrot.slane %v107, 4
    %v207 = vrot.slane %v108, 4
    %v208 = vrot.slane %v109, 4
    %v209 = vrot.slane %v110, 4
    %v210 = vrot.slane %v111, 4
    %v211 = vrot.slane %v112, 4
    %v212 = vrot.slane %v113, 4
    %v213 = vrot.slane %v114, 4
    %v214 = vrot.slane %v115, 4
    %v215 = vrot.slane %v116, 4
    %v216 = vrot.slane %v117, 4
    %v217 = vrot.slane %v118, 4
    %v218 = vrot.slane %v119, 4
    %v219 = vrot.slane %v120, 4
    %v220 = vrot.slane %v121, 4
    %v221 = vrot.slane %v122, 4
    %v222 = vrot.slane %v123, 4
    %v223 = vrot.slane %v124, 4
    %v224 = vrot.slane %v125, 4
    %vm225 = vcmp.lt.s32.totalorder %v159, 4
    %v226 = vsel %vm225, %v223, %v224
    %v227 = vsel %vm225, %v222, %v223
    %v228 = vsel %vm225, %v221, %v222
    %v229 = vsel %vm225, %v220, %v221
    %v230 = vsel %vm225, %v219, %v220
    %v231 = vsel %vm225, %v218, %v219
    %v232 = vsel %vm225, %v217, %v218
    %v233 = vsel %vm225, %v216, %v217
    %v234 = vsel %vm225, %v215, %v216
    %v235 = vsel %vm225, %v214, %v215
    %v236 = vsel %vm225, %v213, %v214
    %v237 = vsel %vm225, %v212, %v213
    %v238 = vsel %vm225, %v211, %v212
    %v239 = vsel %vm225, %v210, %v211
    %v240 = vsel %vm225, %v209, %v210
    %v241 = vsel %vm225, %v208, %v209
    %v242 = vsel %vm225, %v207, %v208
    %v243 = vsel %vm225, %v206, %v207
    %v244 = vsel %vm225, %v205, %v206
    %v245 = vsel %vm225, %v204, %v205
    %v246 = vsel %vm225, %v203, %v204
    %v247 = vsel %vm225, %v202, %v203
    %v248 = vsel %vm225, %v201, %v202
    %v249 = vsel %vm225, %v200, %v201
    %v250 = vsel %vm225, %v199, %v200
    %v251 = vsel %vm225, %v198, %v199
    %v252 = vsel %vm225, %v197, %v198
    %v253 = vsel %vm225, %v196, %v197
    %v254 = vsel %vm225, %v195, %v196
    %v255 = vsel %vm225, %v194, %v195
    %v256 = vsel %vm225, %v193, %v194
    %v257 = vsel %vm225, %v224, %v193
    %v258 = vrot.slane %v94, 5
    %v259 = vrot.slane %v95, 5
    %v260 = vrot.slane %v96, 5
    %v261 = vrot.slane %v97, 5
    %v262 = vrot.slane %v98, 5
    %v263 = vrot.slane %v99, 5
    %v264 = vrot.slane %v100, 5
    %v265 = vrot.slane %v101, 5
    %v266 = vrot.slane %v102, 5
    %v267 = vrot.slane %v103, 5
    %v268 = vrot.slane %v104, 5
    %v269 = vrot.slane %v105, 5
    %v270 = vrot.slane %v106, 5
    %v271 = vrot.slane %v107, 5
    %v272 = vrot.slane %v108, 5
    %v273 = vrot.slane %v109, 5
    %v274 = vrot.slane %v110, 5
    %v275 = vrot.slane %v111, 5
    %v276 = vrot.slane %v112, 5
    %v277 = vrot.slane %v113, 5
    %v278 = vrot.slane %v114, 5
    %v279 = vrot.slane %v115, 5
    %v280 = vrot.slane %v116, 5
    %v281 = vrot.slane %v117, 5
    %v282 = vrot.slane %v118, 5
    %v283 = vrot.slane %v119, 5
    %v284 = vrot.slane %v120, 5
    %v285 = vrot.slane %v121, 5
    %v286 = vrot.slane %v122, 5
    %v287 = vrot.slane %v123, 5
    %v288 = vrot.slane %v124, 5
    %v289 = vrot.slane %v125, 5
    %vm290 = vcmp.lt.s32.totalorder %v159, 3
    %v291 = vsel %vm290, %v288, %v289
    %v292 = vsel %vm290, %v287, %v288
    %v293 = vsel %vm290, %v286, %v287
    %v294 = vsel %vm290, %v285, %v286
    %v295 = vsel %vm290, %v284, %v285
    %v296 = vsel %vm290, %v283, %v284
    %v297 = vsel %vm290, %v282, %v283
    %v298 = vsel %vm290, %v281, %v282
    %v299 = vsel %vm290, %v280, %v281
    %v300 = vsel %vm290, %v279, %v280
    %v301 = vsel %vm290, %v278, %v279
    %v302 = vsel %vm290, %v277, %v278
    %v303 = vsel %vm290, %v276, %v277
    %v304 = vsel %vm290, %v275, %v276
    %v305 = vsel %vm290, %v274, %v275
    %v306 = vsel %vm290, %v273, %v274
    %v307 = vsel %vm290, %v272, %v273
    %v308 = vsel %vm290, %v271, %v272
    %v309 = vsel %vm290, %v270, %v271
    %v310 = vsel %vm290, %v269, %v270
    %v311 = vsel %vm290, %v268, %v269
    %v312 = vsel %vm290, %v267, %v268
    %v313 = vsel %vm290, %v266, %v267
    %v314 = vsel %vm290, %v265, %v266
    %v315 = vsel %vm290, %v264, %v265
    %v316 = vsel %vm290, %v263, %v264
    %v317 = vsel %vm290, %v262, %v263
    %v318 = vsel %vm290, %v261, %v262
    %v319 = vsel %vm290, %v260, %v261
    %v320 = vsel %vm290, %v259, %v260
    %v321 = vsel %vm290, %v258, %v259
    %v322 = vsel %vm290, %v289, %v258
    %v323 = vrot.slane %v94, 7
    %v324 = vrot.slane %v95, 7
    %v325 = vrot.slane %v96, 7
    %v326 = vrot.slane %v97, 7
    %v327 = vrot.slane %v98, 7
    %v328 = vrot.slane %v99, 7
    %v329 = vrot.slane %v100, 7
    %v330 = vrot.slane %v101, 7
    %v331 = vrot.slane %v102, 7
    %v332 = vrot.slane %v103, 7
    %v333 = vrot.slane %v104, 7
    %v334 = vrot.slane %v105, 7
    %v335 = vrot.slane %v106, 7
    %v336 = vrot.slane %v107, 7
    %v337 = vrot.slane %v108, 7
    %v338 = vrot.slane %v109, 7
    %v339 = vrot.slane %v110, 7
    %v340 = vrot.slane %v111, 7
    %v341 = vrot.slane %v112, 7
    %v342 = vrot.slane %v113, 7
    %v343 = vrot.slane %v114, 7
    %v344 = vrot.slane %v115, 7
    %v345 = vrot.slane %v116, 7
    %v346 = vrot.slane %v117, 7
    %v347 = vrot.slane %v118, 7
    %v348 = vrot.slane %v119, 7
    %v349 = vrot.slane %v120, 7
    %v350 = vrot.slane %v121, 7
    %v351 = vrot.slane %v122, 7
    %v352 = vrot.slane %v123, 7
    %v353 = vrot.slane %v124, 7
    %v354 = vrot.slane %v125, 7
    %vm355 = vcmp.lt.s32.totalorder %v159, 1
    %v356 = vsel %vm355, %v353, %v354
    %v357 = vsel %vm355, %v352, %v353
    %v358 = vsel %vm355, %v351, %v352
    %v359 = vsel %vm355, %v350, %v351
    %v360 = vsel %vm355, %v349, %v350
    %v361 = vsel %vm355, %v348, %v349
    %v362 = vsel %vm355, %v347, %v348
    %v363 = vsel %vm355, %v346, %v347
    %v364 = vsel %vm355, %v345, %v346
    %v365 = vsel %vm355, %v344, %v345
    %v366 = vsel %vm355, %v343, %v344
    %v367 = vsel %vm355, %v342, %v343
    %v368 = vsel %vm355, %v341, %v342
    %v369 = vsel %vm355, %v340, %v341
    %v370 = vsel %vm355, %v339, %v340
    %v371 = vsel %vm355, %v338, %v339
    %v372 = vsel %vm355, %v337, %v338
    %v373 = vsel %vm355, %v336, %v337
    %v374 = vsel %vm355, %v335, %v336
    %v375 = vsel %vm355, %v334, %v335
    %v376 = vsel %vm355, %v333, %v334
    %v377 = vsel %vm355, %v332, %v333
    %v378 = vsel %vm355, %v331, %v332
    %v379 = vsel %vm355, %v330, %v331
    %v380 = vsel %vm355, %v329, %v330
    %v381 = vsel %vm355, %v328, %v329
    %v382 = vsel %vm355, %v327, %v328
    %v383 = vsel %vm355, %v326, %v327
    %v384 = vsel %vm355, %v325, %v326
    %v385 = vsel %vm355, %v324, %v325
    %v386 = vsel %vm355, %v323, %v324
    %v387 = vsel %vm355, %v354, %v323
    %v388 = vrot.slane %v94, 1
    %v389 = vrot.slane %v95, 1
    %v390 = vrot.slane %v96, 1
    %v391 = vrot.slane %v97, 1
    %v392 = vrot.slane %v98, 1
    %v393 = vrot.slane %v99, 1
    %v394 = vrot.slane %v100, 1
    %v395 = vrot.slane %v101, 1
    %v396 = vrot.slane %v102, 1
    %v397 = vrot.slane %v103, 1
    %v398 = vrot.slane %v104, 1
    %v399 = vrot.slane %v105, 1
    %v400 = vrot.slane %v106, 1
    %v401 = vrot.slane %v107, 1
    %v402 = vrot.slane %v108, 1
    %v403 = vrot.slane %v109, 1
    %v404 = vrot.slane %v110, 1
    %v405 = vrot.slane %v111, 1
    %v406 = vrot.slane %v112, 1
    %v407 = vrot.slane %v113, 1
    %v408 = vrot.slane %v114, 1
    %v409 = vrot.slane %v115, 1
    %v410 = vrot.slane %v116, 1
    %v411 = vrot.slane %v117, 1
    %v412 = vrot.slane %v118, 1
    %v413 = vrot.slane %v119, 1
    %v414 = vrot.slane %v120, 1
    %v415 = vrot.slane %v121, 1
    %v416 = vrot.slane %v122, 1
    %v417 = vrot.slane %v123, 1
    %v418 = vrot.slane %v124, 1
    %v419 = vrot.slane %v125, 1
    %vm420 = vcmp.lt.s32.totalorder %v159, 7
    %v421 = vsel %vm420, %v418, %v419
    %v422 = vsel %vm420, %v417, %v418
    %v423 = vsel %vm420, %v416, %v417
    %v424 = vsel %vm420, %v415, %v416
    %v425 = vsel %vm420, %v414, %v415
    %v426 = vsel %vm420, %v413, %v414
    %v427 = vsel %vm420, %v412, %v413
    %v428 = vsel %vm420, %v411, %v412
    %v429 = vsel %vm420, %v410, %v411
    %v430 = vsel %vm420, %v409, %v410
    %v431 = vsel %vm420, %v408, %v409
    %v432 = vsel %vm420, %v407, %v408
    %v433 = vsel %vm420, %v406, %v407
    %v434 = vsel %vm420, %v405, %v406
    %v435 = vsel %vm420, %v404, %v405
    %v436 = vsel %vm420, %v403, %v404
    %v437 = vsel %vm420, %v402, %v403
    %v438 = vsel %vm420, %v401, %v402
    %v439 = vsel %vm420, %v400, %v401
    %v440 = vsel %vm420, %v399, %v400
    %v441 = vsel %vm420, %v398, %v399
    %v442 = vsel %vm420, %v397, %v398
    %v443 = vsel %vm420, %v396, %v397
    %v444 = vsel %vm420, %v395, %v396
    %v445 = vsel %vm420, %v394, %v395
    %v446 = vsel %vm420, %v393, %v394
    %v447 = vsel %vm420, %v392, %v393
    %v448 = vsel %vm420, %v391, %v392
    %v449 = vsel %vm420, %v390, %v391
    %v450 = vsel %vm420, %v389, %v390
    %v451 = vsel %vm420, %v388, %v389
    %v452 = vsel %vm420, %v419, %v388
    %485 = vrot.lane.b32.xlu0 %v227, 10
    %v486 = vpop.permute.xlu0 %485
    %487 = vrot.lane.b32.xlu0 %v226, 10
    %v488 = vpop.permute.xlu0 %487
    %489 = vrot.lane.b32.xlu0 %v257, 10
    %v490 = vpop.permute.xlu0 %489
    %491 = vrot.lane.b32.xlu0 %v256, 10
    %v492 = vpop.permute.xlu0 %491
    %493 = vrot.lane.b32.xlu0 %v255, 10
    %v494 = vpop.permute.xlu0 %493
    %495 = vrot.lane.b32.xlu0 %v254, 10
    %v496 = vpop.permute.xlu0 %495
    %497 = vrot.lane.b32.xlu0 %v253, 10
    %v498 = vpop.permute.xlu0 %497
    %499 = vrot.lane.b32.xlu0 %v252, 10
    %v500 = vpop.permute.xlu0 %499
    %501 = vrot.lane.b32.xlu0 %v251, 10
    %v502 = vpop.permute.xlu0 %501
    %503 = vrot.lane.b32.xlu0 %v250, 10
    %v504 = vpop.permute.xlu0 %503
    %505 = vrot.lane.b32.xlu0 %v249, 10
    %v506 = vpop.permute.xlu0 %505
    %507 = vrot.lane.b32.xlu0 %v248, 10
    %v508 = vpop.permute.xlu0 %507
    %509 = vrot.lane.b32.xlu0 %v247, 10
    %v510 = vpop.permute.xlu0 %509
    %511 = vrot.lane.b32.xlu0 %v246, 10
    %v512 = vpop.permute.xlu0 %511
    %513 = vrot.lane.b32.xlu0 %v245, 10
    %v514 = vpop.permute.xlu0 %513
    %515 = vrot.lane.b32.xlu0 %v244, 10
    %v516 = vpop.permute.xlu0 %515
    %517 = vrot.lane.b32.xlu0 %v243, 10
    %v518 = vpop.permute.xlu0 %517
    %519 = vrot.lane.b32.xlu0 %v242, 10
    %v520 = vpop.permute.xlu0 %519
    %521 = vrot.lane.b32.xlu0 %v241, 10
    %v522 = vpop.permute.xlu0 %521
    %523 = vrot.lane.b32.xlu0 %v240, 10
    %v524 = vpop.permute.xlu0 %523
    %525 = vrot.lane.b32.xlu0 %v239, 10
    %v526 = vpop.permute.xlu0 %525
    %527 = vrot.lane.b32.xlu0 %v238, 10
    %v528 = vpop.permute.xlu0 %527
    %529 = vrot.lane.b32.xlu0 %v237, 10
    %v530 = vpop.permute.xlu0 %529
    %531 = vrot.lane.b32.xlu0 %v236, 10
    %v532 = vpop.permute.xlu0 %531
    %533 = vrot.lane.b32.xlu0 %v235, 10
    %v534 = vpop.permute.xlu0 %533
    %535 = vrot.lane.b32.xlu0 %v234, 10
    %v536 = vpop.permute.xlu0 %535
    %537 = vrot.lane.b32.xlu0 %v233, 10
    %v538 = vpop.permute.xlu0 %537
    %539 = vrot.lane.b32.xlu0 %v232, 10
    %v540 = vpop.permute.xlu0 %539
    %541 = vrot.lane.b32.xlu0 %v231, 10
    %v542 = vpop.permute.xlu0 %541
    %543 = vrot.lane.b32.xlu0 %v230, 10
    %v544 = vpop.permute.xlu0 %543
    %545 = vrot.lane.b32.xlu0 %v229, 10
    %v546 = vpop.permute.xlu0 %545
    %547 = vrot.lane.b32.xlu0 %v228, 10
    %v548 = vpop.permute.xlu0 %547
    %613 = vrot.lane.b32.xlu0 %v292, 20
    %v614 = vpop.permute.xlu0 %613
    %615 = vrot.lane.b32.xlu0 %v291, 20
    %v616 = vpop.permute.xlu0 %615
    %617 = vrot.lane.b32.xlu0 %v322, 20
    %v618 = vpop.permute.xlu0 %617
    %619 = vrot.lane.b32.xlu0 %v321, 20
    %v620 = vpop.permute.xlu0 %619
    %621 = vrot.lane.b32.xlu0 %v320, 20
    %v622 = vpop.permute.xlu0 %621
    %623 = vrot.lane.b32.xlu0 %v319, 20
    %v624 = vpop.permute.xlu0 %623
    %625 = vrot.lane.b32.xlu0 %v318, 20
    %v626 = vpop.permute.xlu0 %625
    %627 = vrot.lane.b32.xlu0 %v317, 20
    %v628 = vpop.permute.xlu0 %627
    %629 = vrot.lane.b32.xlu0 %v316, 20
    %v630 = vpop.permute.xlu0 %629
    %631 = vrot.lane.b32.xlu0 %v315, 20
    %v632 = vpop.permute.xlu0 %631
    %633 = vrot.lane.b32.xlu0 %v314, 20
    %v634 = vpop.permute.xlu0 %633
    %635 = vrot.lane.b32.xlu0 %v313, 20
    %v636 = vpop.permute.xlu0 %635
    %637 = vrot.lane.b32.xlu0 %v312, 20
    %v638 = vpop.permute.xlu0 %637
    %639 = vrot.lane.b32.xlu0 %v311, 20
    %v640 = vpop.permute.xlu0 %639
    %641 = vrot.lane.b32.xlu0 %v310, 20
    %v642 = vpop.permute.xlu0 %641
    %643 = vrot.lane.b32.xlu0 %v309, 20
    %v644 = vpop.permute.xlu0 %643
    %645 = vrot.lane.b32.xlu0 %v308, 20
    %v646 = vpop.permute.xlu0 %645
    %647 = vrot.lane.b32.xlu0 %v307, 20
    %v648 = vpop.permute.xlu0 %647
    %649 = vrot.lane.b32.xlu0 %v306, 20
    %v650 = vpop.permute.xlu0 %649
    %651 = vrot.lane.b32.xlu0 %v305, 20
    %v652 = vpop.permute.xlu0 %651
    %653 = vrot.lane.b32.xlu0 %v304, 20
    %v654 = vpop.permute.xlu0 %653
    %655 = vrot.lane.b32.xlu0 %v303, 20
    %v656 = vpop.permute.xlu0 %655
    %657 = vrot.lane.b32.xlu0 %v302, 20
    %v658 = vpop.permute.xlu0 %657
    %659 = vrot.lane.b32.xlu0 %v301, 20
    %v660 = vpop.permute.xlu0 %659
    %661 = vrot.lane.b32.xlu0 %v300, 20
    %v662 = vpop.permute.xlu0 %661
    %663 = vrot.lane.b32.xlu0 %v299, 20
    %v664 = vpop.permute.xlu0 %663
    %665 = vrot.lane.b32.xlu0 %v298, 20
    %v666 = vpop.permute.xlu0 %665
    %667 = vrot.lane.b32.xlu0 %v297, 20
    %v668 = vpop.permute.xlu0 %667
    %669 = vrot.lane.b32.xlu0 %v296, 20
    %v670 = vpop.permute.xlu0 %669
    %671 = vrot.lane.b32.xlu0 %v295, 20
    %v672 = vpop.permute.xlu0 %671
    %673 = vrot.lane.b32.xlu0 %v294, 20
    %v674 = vpop.permute.xlu0 %673
    %675 = vrot.lane.b32.xlu0 %v293, 20
    %v676 = vpop.permute.xlu0 %675
    %741 = vrot.lane.b32.xlu0 %v357, 30
    %v742 = vpop.permute.xlu0 %741
    %743 = vrot.lane.b32.xlu0 %v356, 30
    %v744 = vpop.permute.xlu0 %743
    %745 = vrot.lane.b32.xlu0 %v387, 30
    %v746 = vpop.permute.xlu0 %745
    %747 = vrot.lane.b32.xlu0 %v386, 30
    %v748 = vpop.permute.xlu0 %747
    %749 = vrot.lane.b32.xlu0 %v385, 30
    %v750 = vpop.permute.xlu0 %749
    %751 = vrot.lane.b32.xlu0 %v384, 30
    %v752 = vpop.permute.xlu0 %751
    %753 = vrot.lane.b32.xlu0 %v383, 30
    %v754 = vpop.permute.xlu0 %753
    %755 = vrot.lane.b32.xlu0 %v382, 30
    %v756 = vpop.permute.xlu0 %755
    %757 = vrot.lane.b32.xlu0 %v381, 30
    %v758 = vpop.permute.xlu0 %757
    %759 = vrot.lane.b32.xlu0 %v380, 30
    %v760 = vpop.permute.xlu0 %759
    %761 = vrot.lane.b32.xlu0 %v379, 30
    %v762 = vpop.permute.xlu0 %761
    %763 = vrot.lane.b32.xlu0 %v378, 30
    %v764 = vpop.permute.xlu0 %763
    %765 = vrot.lane.b32.xlu0 %v377, 30
    %v766 = vpop.permute.xlu0 %765
    %767 = vrot.lane.b32.xlu0 %v376, 30
    %v768 = vpop.permute.xlu0 %767
    %769 = vrot.lane.b32.xlu0 %v375, 30
    %v770 = vpop.permute.xlu0 %769
    %771 = vrot.lane.b32.xlu0 %v374, 30
    %v772 = vpop.permute.xlu0 %771
    %773 = vrot.lane.b32.xlu0 %v373, 30
    %v774 = vpop.permute.xlu0 %773
    %775 = vrot.lane.b32.xlu0 %v372, 30
    %v776 = vpop.permute.xlu0 %775
    %777 = vrot.lane.b32.xlu0 %v371, 30
    %v778 = vpop.permute.xlu0 %777
    %779 = vrot.lane.b32.xlu0 %v370, 30
    %v780 = vpop.permute.xlu0 %779
    %781 = vrot.lane.b32.xlu0 %v369, 30
    %v782 = vpop.permute.xlu0 %781
    %783 = vrot.lane.b32.xlu0 %v368, 30
    %v784 = vpop.permute.xlu0 %783
    %785 = vrot.lane.b32.xlu0 %v367, 30
    %v786 = vpop.permute.xlu0 %785
    %787 = vrot.lane.b32.xlu0 %v366, 30
    %v788 = vpop.permute.xlu0 %787
    %789 = vrot.lane.b32.xlu0 %v365, 30
    %v790 = vpop.permute.xlu0 %789
    %791 = vrot.lane.b32.xlu0 %v364, 30
    %v792 = vpop.permute.xlu0 %791
    %793 = vrot.lane.b32.xlu0 %v363, 30
    %v794 = vpop.permute.xlu0 %793
    %795 = vrot.lane.b32.xlu0 %v362, 30
    %v796 = vpop.permute.xlu0 %795
    %797 = vrot.lane.b32.xlu0 %v361, 30
    %v798 = vpop.permute.xlu0 %797
    %799 = vrot.lane.b32.xlu0 %v360, 30
    %v800 = vpop.permute.xlu0 %799
    %801 = vrot.lane.b32.xlu0 %v359, 30
    %v802 = vpop.permute.xlu0 %801
    %803 = vrot.lane.b32.xlu0 %v358, 30
    %v804 = vpop.permute.xlu0 %803
    %869 = vrot.lane.b32.xlu0 %v124, 40
    %v870 = vpop.permute.xlu0 %869
    %871 = vrot.lane.b32.xlu0 %v125, 40
    %v872 = vpop.permute.xlu0 %871
    %873 = vrot.lane.b32.xlu0 %v94, 40
    %v874 = vpop.permute.xlu0 %873
    %875 = vrot.lane.b32.xlu0 %v95, 40
    %v876 = vpop.permute.xlu0 %875
    %877 = vrot.lane.b32.xlu0 %v96, 40
    %v878 = vpop.permute.xlu0 %877
    %879 = vrot.lane.b32.xlu0 %v97, 40
    %v880 = vpop.permute.xlu0 %879
    %881 = vrot.lane.b32.xlu0 %v98, 40
    %v882 = vpop.permute.xlu0 %881
    %883 = vrot.lane.b32.xlu0 %v99, 40
    %v884 = vpop.permute.xlu0 %883
    %885 = vrot.lane.b32.xlu0 %v100, 40
    %v886 = vpop.permute.xlu0 %885
    %887 = vrot.lane.b32.xlu0 %v101, 40
    %v888 = vpop.permute.xlu0 %887
    %889 = vrot.lane.b32.xlu0 %v102, 40
    %v890 = vpop.permute.xlu0 %889
    %891 = vrot.lane.b32.xlu0 %v103, 40
    %v892 = vpop.permute.xlu0 %891
    %893 = vrot.lane.b32.xlu0 %v104, 40
    %v894 = vpop.permute.xlu0 %893
    %895 = vrot.lane.b32.xlu0 %v105, 40
    %v896 = vpop.permute.xlu0 %895
    %897 = vrot.lane.b32.xlu0 %v106, 40
    %v898 = vpop.permute.xlu0 %897
    %899 = vrot.lane.b32.xlu0 %v107, 40
    %v900 = vpop.permute.xlu0 %899
    %901 = vrot.lane.b32.xlu0 %v108, 40
    %v902 = vpop.permute.xlu0 %901
    %903 = vrot.lane.b32.xlu0 %v109, 40
    %v904 = vpop.permute.xlu0 %903
    %905 = vrot.lane.b32.xlu0 %v110, 40
    %v906 = vpop.permute.xlu0 %905
    %907 = vrot.lane.b32.xlu0 %v111, 40
    %v908 = vpop.permute.xlu0 %907
    %909 = vrot.lane.b32.xlu0 %v112, 40
    %v910 = vpop.permute.xlu0 %909
    %911 = vrot.lane.b32.xlu0 %v113, 40
    %v912 = vpop.permute.xlu0 %911
    %913 = vrot.lane.b32.xlu0 %v114, 40
    %v914 = vpop.permute.xlu0 %913
    %915 = vrot.lane.b32.xlu0 %v115, 40
    %v916 = vpop.permute.xlu0 %915
    %917 = vrot.lane.b32.xlu0 %v116, 40
    %v918 = vpop.permute.xlu0 %917
    %919 = vrot.lane.b32.xlu0 %v117, 40
    %v920 = vpop.permute.xlu0 %919
    %921 = vrot.lane.b32.xlu0 %v118, 40
    %v922 = vpop.permute.xlu0 %921
    %923 = vrot.lane.b32.xlu0 %v119, 40
    %v924 = vpop.permute.xlu0 %923
    %925 = vrot.lane.b32.xlu0 %v120, 40
    %v926 = vpop.permute.xlu0 %925
    %927 = vrot.lane.b32.xlu0 %v121, 40
    %v928 = vpop.permute.xlu0 %927
    %929 = vrot.lane.b32.xlu0 %v122, 40
    %v930 = vpop.permute.xlu0 %929
    %931 = vrot.lane.b32.xlu0 %v123, 40
    %v932 = vpop.permute.xlu0 %931
    %997 = vrot.lane.b32.xlu0 %v421, 50
    %v998 = vpop.permute.xlu0 %997
    %999 = vrot.lane.b32.xlu0 %v452, 50
    %v1000 = vpop.permute.xlu0 %999
    %1001 = vrot.lane.b32.xlu0 %v451, 50
    %v1002 = vpop.permute.xlu0 %1001
    %1003 = vrot.lane.b32.xlu0 %v450, 50
    %v1004 = vpop.permute.xlu0 %1003
    %1005 = vrot.lane.b32.xlu0 %v449, 50
    %v1006 = vpop.permute.xlu0 %1005
    %1007 = vrot.lane.b32.xlu0 %v448, 50
    %v1008 = vpop.permute.xlu0 %1007
    %1009 = vrot.lane.b32.xlu0 %v447, 50
    %v1010 = vpop.permute.xlu0 %1009
    %1011 = vrot.lane.b32.xlu0 %v446, 50
    %v1012 = vpop.permute.xlu0 %1011
    %1013 = vrot.lane.b32.xlu0 %v445, 50
    %v1014 = vpop.permute.xlu0 %1013
    %1015 = vrot.lane.b32.xlu0 %v444, 50
    %v1016 = vpop.permute.xlu0 %1015
    %1017 = vrot.lane.b32.xlu0 %v443, 50
    %v1018 = vpop.permute.xlu0 %1017
    %1019 = vrot.lane.b32.xlu0 %v442, 50
    %v1020 = vpop.permute.xlu0 %1019
    %1021 = vrot.lane.b32.xlu0 %v441, 50
    %v1022 = vpop.permute.xlu0 %1021
    %1023 = vrot.lane.b32.xlu0 %v440, 50
    %v1024 = vpop.permute.xlu0 %1023
    %1025 = vrot.lane.b32.xlu0 %v439, 50
    %v1026 = vpop.permute.xlu0 %1025
    %1027 = vrot.lane.b32.xlu0 %v438, 50
    %v1028 = vpop.permute.xlu0 %1027
    %1029 = vrot.lane.b32.xlu0 %v437, 50
    %v1030 = vpop.permute.xlu0 %1029
    %1031 = vrot.lane.b32.xlu0 %v436, 50
    %v1032 = vpop.permute.xlu0 %1031
    %1033 = vrot.lane.b32.xlu0 %v435, 50
    %v1034 = vpop.permute.xlu0 %1033
    %1035 = vrot.lane.b32.xlu0 %v434, 50
    %v1036 = vpop.permute.xlu0 %1035
    %1037 = vrot.lane.b32.xlu0 %v433, 50
    %v1038 = vpop.permute.xlu0 %1037
    %1039 = vrot.lane.b32.xlu0 %v432, 50
    %v1040 = vpop.permute.xlu0 %1039
    %1041 = vrot.lane.b32.xlu0 %v431, 50
    %v1042 = vpop.permute.xlu0 %1041
    %1043 = vrot.lane.b32.xlu0 %v430, 50
    %v1044 = vpop.permute.xlu0 %1043
    %1045 = vrot.lane.b32.xlu0 %v429, 50
    %v1046 = vpop.permute.xlu0 %1045
    %1047 = vrot.lane.b32.xlu0 %v428, 50
    %v1048 = vpop.permute.xlu0 %1047
    %1049 = vrot.lane.b32.xlu0 %v427, 50
    %v1050 = vpop.permute.xlu0 %1049
    %1051 = vrot.lane.b32.xlu0 %v426, 50
    %v1052 = vpop.permute.xlu0 %1051
    %1053 = vrot.lane.b32.xlu0 %v425, 50
    %v1054 = vpop.permute.xlu0 %1053
    %1055 = vrot.lane.b32.xlu0 %v424, 50
    %v1056 = vpop.permute.xlu0 %1055
    %1057 = vrot.lane.b32.xlu0 %v423, 50
    %v1058 = vpop.permute.xlu0 %1057
    %1059 = vrot.lane.b32.xlu0 %v422, 50
    %v1060 = vpop.permute.xlu0 %1059
    %1125 = vrot.lane.b32.xlu0 %v161, 60
    %v1126 = vpop.permute.xlu0 %1125
    %1127 = vrot.lane.b32.xlu0 %v192, 60
    %v1128 = vpop.permute.xlu0 %1127
    %1129 = vrot.lane.b32.xlu0 %v191, 60
    %v1130 = vpop.permute.xlu0 %1129
    %1131 = vrot.lane.b32.xlu0 %v190, 60
    %v1132 = vpop.permute.xlu0 %1131
    %1133 = vrot.lane.b32.xlu0 %v189, 60
    %v1134 = vpop.permute.xlu0 %1133
    %1135 = vrot.lane.b32.xlu0 %v188, 60
    %v1136 = vpop.permute.xlu0 %1135
    %1137 = vrot.lane.b32.xlu0 %v187, 60
    %v1138 = vpop.permute.xlu0 %1137
    %1139 = vrot.lane.b32.xlu0 %v186, 60
    %v1140 = vpop.permute.xlu0 %1139
    %1141 = vrot.lane.b32.xlu0 %v185, 60
    %v1142 = vpop.permute.xlu0 %1141
    %1143 = vrot.lane.b32.xlu0 %v184, 60
    %v1144 = vpop.permute.xlu0 %1143
    %1145 = vrot.lane.b32.xlu0 %v183, 60
    %v1146 = vpop.permute.xlu0 %1145
    %1147 = vrot.lane.b32.xlu0 %v182, 60
    %v1148 = vpop.permute.xlu0 %1147
    %1149 = vrot.lane.b32.xlu0 %v181, 60
    %v1150 = vpop.permute.xlu0 %1149
    %1151 = vrot.lane.b32.xlu0 %v180, 60
    %v1152 = vpop.permute.xlu0 %1151
    %1153 = vrot.lane.b32.xlu0 %v179, 60
    %v1154 = vpop.permute.xlu0 %1153
    %1155 = vrot.lane.b32.xlu0 %v178, 60
    %v1156 = vpop.permute.xlu0 %1155
    %1157 = vrot.lane.b32.xlu0 %v177, 60
    %v1158 = vpop.permute.xlu0 %1157
    %1159 = vrot.lane.b32.xlu0 %v176, 60
    %v1160 = vpop.permute.xlu0 %1159
    %1161 = vrot.lane.b32.xlu0 %v175, 60
    %v1162 = vpop.permute.xlu0 %1161
    %1163 = vrot.lane.b32.xlu0 %v174, 60
    %v1164 = vpop.permute.xlu0 %1163
    %1165 = vrot.lane.b32.xlu0 %v173, 60
    %v1166 = vpop.permute.xlu0 %1165
    %1167 = vrot.lane.b32.xlu0 %v172, 60
    %v1168 = vpop.permute.xlu0 %1167
    %1169 = vrot.lane.b32.xlu0 %v171, 60
    %v1170 = vpop.permute.xlu0 %1169
    %1171 = vrot.lane.b32.xlu0 %v170, 60
    %v1172 = vpop.permute.xlu0 %1171
    %1173 = vrot.lane.b32.xlu0 %v169, 60
    %v1174 = vpop.permute.xlu0 %1173
    %1175 = vrot.lane.b32.xlu0 %v168, 60
    %v1176 = vpop.permute.xlu0 %1175
    %1177 = vrot.lane.b32.xlu0 %v167, 60
    %v1178 = vpop.permute.xlu0 %1177
    %1179 = vrot.lane.b32.xlu0 %v166, 60
    %v1180 = vpop.permute.xlu0 %1179
    %1181 = vrot.lane.b32.xlu0 %v165, 60
    %v1182 = vpop.permute.xlu0 %1181
    %1183 = vrot.lane.b32.xlu0 %v164, 60
    %v1184 = vpop.permute.xlu0 %1183
    %1185 = vrot.lane.b32.xlu0 %v163, 60
    %v1186 = vpop.permute.xlu0 %1185
    %1187 = vrot.lane.b32.xlu0 %v162, 60
    %v1188 = vpop.permute.xlu0 %1187
    %1221 = vrot.lane.b32.xlu0 %v226, 70
    %v1222 = vpop.permute.xlu0 %1221
    %1223 = vrot.lane.b32.xlu0 %v257, 70
    %v1224 = vpop.permute.xlu0 %1223
    %1225 = vrot.lane.b32.xlu0 %v256, 70
    %v1226 = vpop.permute.xlu0 %1225
    %1227 = vrot.lane.b32.xlu0 %v255, 70
    %v1228 = vpop.permute.xlu0 %1227
    %1229 = vrot.lane.b32.xlu0 %v254, 70
    %v1230 = vpop.permute.xlu0 %1229
    %1231 = vrot.lane.b32.xlu0 %v253, 70
    %v1232 = vpop.permute.xlu0 %1231
    %1233 = vrot.lane.b32.xlu0 %v252, 70
    %v1234 = vpop.permute.xlu0 %1233
    %1235 = vrot.lane.b32.xlu0 %v251, 70
    %v1236 = vpop.permute.xlu0 %1235
    %1237 = vrot.lane.b32.xlu0 %v250, 70
    %v1238 = vpop.permute.xlu0 %1237
    %1239 = vrot.lane.b32.xlu0 %v249, 70
    %v1240 = vpop.permute.xlu0 %1239
    %1241 = vrot.lane.b32.xlu0 %v248, 70
    %v1242 = vpop.permute.xlu0 %1241
    %1243 = vrot.lane.b32.xlu0 %v247, 70
    %v1244 = vpop.permute.xlu0 %1243
    %1245 = vrot.lane.b32.xlu0 %v246, 70
    %v1246 = vpop.permute.xlu0 %1245
    %1247 = vrot.lane.b32.xlu0 %v245, 70
    %v1248 = vpop.permute.xlu0 %1247
    %1249 = vrot.lane.b32.xlu0 %v244, 70
    %v1250 = vpop.permute.xlu0 %1249
    %1251 = vrot.lane.b32.xlu0 %v243, 70
    %v1252 = vpop.permute.xlu0 %1251
    %1253 = vrot.lane.b32.xlu0 %v242, 70
    %v1254 = vpop.permute.xlu0 %1253
    %1255 = vrot.lane.b32.xlu0 %v241, 70
    %v1256 = vpop.permute.xlu0 %1255
    %1257 = vrot.lane.b32.xlu0 %v240, 70
    %v1258 = vpop.permute.xlu0 %1257
    %1259 = vrot.lane.b32.xlu0 %v239, 70
    %v1260 = vpop.permute.xlu0 %1259
    %1261 = vrot.lane.b32.xlu0 %v238, 70
    %v1262 = vpop.permute.xlu0 %1261
    %1263 = vrot.lane.b32.xlu0 %v237, 70
    %v1264 = vpop.permute.xlu0 %1263
    %1265 = vrot.lane.b32.xlu0 %v236, 70
    %v1266 = vpop.permute.xlu0 %1265
    %1267 = vrot.lane.b32.xlu0 %v235, 70
    %v1268 = vpop.permute.xlu0 %1267
    %1269 = vrot.lane.b32.xlu0 %v234, 70
    %v1270 = vpop.permute.xlu0 %1269
    %1271 = vrot.lane.b32.xlu0 %v233, 70
    %v1272 = vpop.permute.xlu0 %1271
    %1273 = vrot.lane.b32.xlu0 %v232, 70
    %v1274 = vpop.permute.xlu0 %1273
    %1275 = vrot.lane.b32.xlu0 %v231, 70
    %v1276 = vpop.permute.xlu0 %1275
    %1277 = vrot.lane.b32.xlu0 %v230, 70
    %v1278 = vpop.permute.xlu0 %1277
    %1279 = vrot.lane.b32.xlu0 %v229, 70
    %v1280 = vpop.permute.xlu0 %1279
    %1281 = vrot.lane.b32.xlu0 %v228, 70
    %v1282 = vpop.permute.xlu0 %1281
    %1283 = vrot.lane.b32.xlu0 %v227, 70
    %v1284 = vpop.permute.xlu0 %1283
    %1317 = vrot.lane.b32.xlu0 %v291, 80
    %v1318 = vpop.permute.xlu0 %1317
    %1319 = vrot.lane.b32.xlu0 %v322, 80
    %v1320 = vpop.permute.xlu0 %1319
    %1321 = vrot.lane.b32.xlu0 %v321, 80
    %v1322 = vpop.permute.xlu0 %1321
    %1323 = vrot.lane.b32.xlu0 %v320, 80
    %v1324 = vpop.permute.xlu0 %1323
    %1325 = vrot.lane.b32.xlu0 %v319, 80
    %v1326 = vpop.permute.xlu0 %1325
    %1327 = vrot.lane.b32.xlu0 %v318, 80
    %v1328 = vpop.permute.xlu0 %1327
    %1329 = vrot.lane.b32.xlu0 %v317, 80
    %v1330 = vpop.permute.xlu0 %1329
    %1331 = vrot.lane.b32.xlu0 %v316, 80
    %v1332 = vpop.permute.xlu0 %1331
    %1333 = vrot.lane.b32.xlu0 %v315, 80
    %v1334 = vpop.permute.xlu0 %1333
    %1335 = vrot.lane.b32.xlu0 %v314, 80
    %v1336 = vpop.permute.xlu0 %1335
    %1337 = vrot.lane.b32.xlu0 %v313, 80
    %v1338 = vpop.permute.xlu0 %1337
    %1339 = vrot.lane.b32.xlu0 %v312, 80
    %v1340 = vpop.permute.xlu0 %1339
    %1341 = vrot.lane.b32.xlu0 %v311, 80
    %v1342 = vpop.permute.xlu0 %1341
    %1343 = vrot.lane.b32.xlu0 %v310, 80
    %v1344 = vpop.permute.xlu0 %1343
    %1345 = vrot.lane.b32.xlu0 %v309, 80
    %v1346 = vpop.permute.xlu0 %1345
    %1347 = vrot.lane.b32.xlu0 %v308, 80
    %v1348 = vpop.permute.xlu0 %1347
    %1349 = vrot.lane.b32.xlu0 %v307, 80
    %v1350 = vpop.permute.xlu0 %1349
    %1351 = vrot.lane.b32.xlu0 %v306, 80
    %v1352 = vpop.permute.xlu0 %1351
    %1353 = vrot.lane.b32.xlu0 %v305, 80
    %v1354 = vpop.permute.xlu0 %1353
    %1355 = vrot.lane.b32.xlu0 %v304, 80
    %v1356 = vpop.permute.xlu0 %1355
    %1357 = vrot.lane.b32.xlu0 %v303, 80
    %v1358 = vpop.permute.xlu0 %1357
    %1359 = vrot.lane.b32.xlu0 %v302, 80
    %v1360 = vpop.permute.xlu0 %1359
    %1361 = vrot.lane.b32.xlu0 %v301, 80
    %v1362 = vpop.permute.xlu0 %1361
    %1363 = vrot.lane.b32.xlu0 %v300, 80
    %v1364 = vpop.permute.xlu0 %1363
    %1365 = vrot.lane.b32.xlu0 %v299, 80
    %v1366 = vpop.permute.xlu0 %1365
    %1367 = vrot.lane.b32.xlu0 %v298, 80
    %v1368 = vpop.permute.xlu0 %1367
    %1369 = vrot.lane.b32.xlu0 %v297, 80
    %v1370 = vpop.permute.xlu0 %1369
    %1371 = vrot.lane.b32.xlu0 %v296, 80
    %v1372 = vpop.permute.xlu0 %1371
    %1373 = vrot.lane.b32.xlu0 %v295, 80
    %v1374 = vpop.permute.xlu0 %1373
    %1375 = vrot.lane.b32.xlu0 %v294, 80
    %v1376 = vpop.permute.xlu0 %1375
    %1377 = vrot.lane.b32.xlu0 %v293, 80
    %v1378 = vpop.permute.xlu0 %1377
    %1379 = vrot.lane.b32.xlu0 %v292, 80
    %v1380 = vpop.permute.xlu0 %1379
    %1413 = vrot.lane.b32.xlu0 %v192, 90
    %v1414 = vpop.permute.xlu0 %1413
    %1415 = vrot.lane.b32.xlu0 %v191, 90
    %v1416 = vpop.permute.xlu0 %1415
    %1417 = vrot.lane.b32.xlu0 %v190, 90
    %v1418 = vpop.permute.xlu0 %1417
    %1419 = vrot.lane.b32.xlu0 %v189, 90
    %v1420 = vpop.permute.xlu0 %1419
    %1421 = vrot.lane.b32.xlu0 %v188, 90
    %v1422 = vpop.permute.xlu0 %1421
    %1423 = vrot.lane.b32.xlu0 %v187, 90
    %v1424 = vpop.permute.xlu0 %1423
    %1425 = vrot.lane.b32.xlu0 %v186, 90
    %v1426 = vpop.permute.xlu0 %1425
    %1427 = vrot.lane.b32.xlu0 %v185, 90
    %v1428 = vpop.permute.xlu0 %1427
    %1429 = vrot.lane.b32.xlu0 %v184, 90
    %v1430 = vpop.permute.xlu0 %1429
    %1431 = vrot.lane.b32.xlu0 %v183, 90
    %v1432 = vpop.permute.xlu0 %1431
    %1433 = vrot.lane.b32.xlu0 %v182, 90
    %v1434 = vpop.permute.xlu0 %1433
    %1435 = vrot.lane.b32.xlu0 %v181, 90
    %v1436 = vpop.permute.xlu0 %1435
    %1437 = vrot.lane.b32.xlu0 %v180, 90
    %v1438 = vpop.permute.xlu0 %1437
    %1439 = vrot.lane.b32.xlu0 %v179, 90
    %v1440 = vpop.permute.xlu0 %1439
    %1441 = vrot.lane.b32.xlu0 %v178, 90
    %v1442 = vpop.permute.xlu0 %1441
    %1443 = vrot.lane.b32.xlu0 %v177, 90
    %v1444 = vpop.permute.xlu0 %1443
    %1445 = vrot.lane.b32.xlu0 %v176, 90
    %v1446 = vpop.permute.xlu0 %1445
    %1447 = vrot.lane.b32.xlu0 %v175, 90
    %v1448 = vpop.permute.xlu0 %1447
    %1449 = vrot.lane.b32.xlu0 %v174, 90
    %v1450 = vpop.permute.xlu0 %1449
    %1451 = vrot.lane.b32.xlu0 %v173, 90
    %v1452 = vpop.permute.xlu0 %1451
    %1453 = vrot.lane.b32.xlu0 %v172, 90
    %v1454 = vpop.permute.xlu0 %1453
    %1455 = vrot.lane.b32.xlu0 %v171, 90
    %v1456 = vpop.permute.xlu0 %1455
    %1457 = vrot.lane.b32.xlu0 %v170, 90
    %v1458 = vpop.permute.xlu0 %1457
    %1459 = vrot.lane.b32.xlu0 %v169, 90
    %v1460 = vpop.permute.xlu0 %1459
    %1461 = vrot.lane.b32.xlu0 %v168, 90
    %v1462 = vpop.permute.xlu0 %1461
    %1463 = vrot.lane.b32.xlu0 %v167, 90
    %v1464 = vpop.permute.xlu0 %1463
    %1465 = vrot.lane.b32.xlu0 %v166, 90
    %v1466 = vpop.permute.xlu0 %1465
    %1467 = vrot.lane.b32.xlu0 %v165, 90
    %v1468 = vpop.permute.xlu0 %1467
    %1469 = vrot.lane.b32.xlu0 %v164, 90
    %v1470 = vpop.permute.xlu0 %1469
    %1471 = vrot.lane.b32.xlu0 %v163, 90
    %v1472 = vpop.permute.xlu0 %1471
    %1473 = vrot.lane.b32.xlu0 %v162, 90
    %v1474 = vpop.permute.xlu0 %1473
    %1475 = vrot.lane.b32.xlu0 %v161, 90
    %v1476 = vpop.permute.xlu0 %1475
    %1509 = vrot.lane.b32.xlu0 %v257, 100
    %v1510 = vpop.permute.xlu0 %1509
    %1511 = vrot.lane.b32.xlu0 %v256, 100
    %v1512 = vpop.permute.xlu0 %1511
    %1513 = vrot.lane.b32.xlu0 %v255, 100
    %v1514 = vpop.permute.xlu0 %1513
    %1515 = vrot.lane.b32.xlu0 %v254, 100
    %v1516 = vpop.permute.xlu0 %1515
    %1517 = vrot.lane.b32.xlu0 %v253, 100
    %v1518 = vpop.permute.xlu0 %1517
    %1519 = vrot.lane.b32.xlu0 %v252, 100
    %v1520 = vpop.permute.xlu0 %1519
    %1521 = vrot.lane.b32.xlu0 %v251, 100
    %v1522 = vpop.permute.xlu0 %1521
    %1523 = vrot.lane.b32.xlu0 %v250, 100
    %v1524 = vpop.permute.xlu0 %1523
    %1525 = vrot.lane.b32.xlu0 %v249, 100
    %v1526 = vpop.permute.xlu0 %1525
    %1527 = vrot.lane.b32.xlu0 %v248, 100
    %v1528 = vpop.permute.xlu0 %1527
    %1529 = vrot.lane.b32.xlu0 %v247, 100
    %v1530 = vpop.permute.xlu0 %1529
    %1531 = vrot.lane.b32.xlu0 %v246, 100
    %v1532 = vpop.permute.xlu0 %1531
    %1533 = vrot.lane.b32.xlu0 %v245, 100
    %v1534 = vpop.permute.xlu0 %1533
    %1535 = vrot.lane.b32.xlu0 %v244, 100
    %v1536 = vpop.permute.xlu0 %1535
    %1537 = vrot.lane.b32.xlu0 %v243, 100
    %v1538 = vpop.permute.xlu0 %1537
    %1539 = vrot.lane.b32.xlu0 %v242, 100
    %v1540 = vpop.permute.xlu0 %1539
    %1541 = vrot.lane.b32.xlu0 %v241, 100
    %v1542 = vpop.permute.xlu0 %1541
    %1543 = vrot.lane.b32.xlu0 %v240, 100
    %v1544 = vpop.permute.xlu0 %1543
    %1545 = vrot.lane.b32.xlu0 %v239, 100
    %v1546 = vpop.permute.xlu0 %1545
    %1547 = vrot.lane.b32.xlu0 %v238, 100
    %v1548 = vpop.permute.xlu0 %1547
    %1549 = vrot.lane.b32.xlu0 %v237, 100
    %v1550 = vpop.permute.xlu0 %1549
    %1551 = vrot.lane.b32.xlu0 %v236, 100
    %v1552 = vpop.permute.xlu0 %1551
    %1553 = vrot.lane.b32.xlu0 %v235, 100
    %v1554 = vpop.permute.xlu0 %1553
    %1555 = vrot.lane.b32.xlu0 %v234, 100
    %v1556 = vpop.permute.xlu0 %1555
    %1557 = vrot.lane.b32.xlu0 %v233, 100
    %v1558 = vpop.permute.xlu0 %1557
    %1559 = vrot.lane.b32.xlu0 %v232, 100
    %v1560 = vpop.permute.xlu0 %1559
    %1561 = vrot.lane.b32.xlu0 %v231, 100
    %v1562 = vpop.permute.xlu0 %1561
    %1563 = vrot.lane.b32.xlu0 %v230, 100
    %v1564 = vpop.permute.xlu0 %1563
    %1565 = vrot.lane.b32.xlu0 %v229, 100
    %v1566 = vpop.permute.xlu0 %1565
    %1567 = vrot.lane.b32.xlu0 %v228, 100
    %v1568 = vpop.permute.xlu0 %1567
    %1569 = vrot.lane.b32.xlu0 %v227, 100
    %v1570 = vpop.permute.xlu0 %1569
    %1571 = vrot.lane.b32.xlu0 %v226, 100
    %v1572 = vpop.permute.xlu0 %1571
    %1605 = vrot.lane.b32.xlu0 %v322, 110
    %v1606 = vpop.permute.xlu0 %1605
    %1607 = vrot.lane.b32.xlu0 %v321, 110
    %v1608 = vpop.permute.xlu0 %1607
    %1609 = vrot.lane.b32.xlu0 %v320, 110
    %v1610 = vpop.permute.xlu0 %1609
    %1611 = vrot.lane.b32.xlu0 %v319, 110
    %v1612 = vpop.permute.xlu0 %1611
    %1613 = vrot.lane.b32.xlu0 %v318, 110
    %v1614 = vpop.permute.xlu0 %1613
    %1615 = vrot.lane.b32.xlu0 %v317, 110
    %v1616 = vpop.permute.xlu0 %1615
    %1617 = vrot.lane.b32.xlu0 %v316, 110
    %v1618 = vpop.permute.xlu0 %1617
    %1619 = vrot.lane.b32.xlu0 %v315, 110
    %v1620 = vpop.permute.xlu0 %1619
    %1621 = vrot.lane.b32.xlu0 %v314, 110
    %v1622 = vpop.permute.xlu0 %1621
    %1623 = vrot.lane.b32.xlu0 %v313, 110
    %v1624 = vpop.permute.xlu0 %1623
    %1625 = vrot.lane.b32.xlu0 %v312, 110
    %v1626 = vpop.permute.xlu0 %1625
    %1627 = vrot.lane.b32.xlu0 %v311, 110
    %v1628 = vpop.permute.xlu0 %1627
    %1629 = vrot.lane.b32.xlu0 %v310, 110
    %v1630 = vpop.permute.xlu0 %1629
    %1631 = vrot.lane.b32.xlu0 %v309, 110
    %v1632 = vpop.permute.xlu0 %1631
    %1633 = vrot.lane.b32.xlu0 %v308, 110
    %v1634 = vpop.permute.xlu0 %1633
    %1635 = vrot.lane.b32.xlu0 %v307, 110
    %v1636 = vpop.permute.xlu0 %1635
    %1637 = vrot.lane.b32.xlu0 %v306, 110
    %v1638 = vpop.permute.xlu0 %1637
    %1639 = vrot.lane.b32.xlu0 %v305, 110
    %v1640 = vpop.permute.xlu0 %1639
    %1641 = vrot.lane.b32.xlu0 %v304, 110
    %v1642 = vpop.permute.xlu0 %1641
    %1643 = vrot.lane.b32.xlu0 %v303, 110
    %v1644 = vpop.permute.xlu0 %1643
    %1645 = vrot.lane.b32.xlu0 %v302, 110
    %v1646 = vpop.permute.xlu0 %1645
    %1647 = vrot.lane.b32.xlu0 %v301, 110
    %v1648 = vpop.permute.xlu0 %1647
    %1649 = vrot.lane.b32.xlu0 %v300, 110
    %v1650 = vpop.permute.xlu0 %1649
    %1651 = vrot.lane.b32.xlu0 %v299, 110
    %v1652 = vpop.permute.xlu0 %1651
    %1653 = vrot.lane.b32.xlu0 %v298, 110
    %v1654 = vpop.permute.xlu0 %1653
    %1655 = vrot.lane.b32.xlu0 %v297, 110
    %v1656 = vpop.permute.xlu0 %1655
    %1657 = vrot.lane.b32.xlu0 %v296, 110
    %v1658 = vpop.permute.xlu0 %1657
    %1659 = vrot.lane.b32.xlu0 %v295, 110
    %v1660 = vpop.permute.xlu0 %1659
    %1661 = vrot.lane.b32.xlu0 %v294, 110
    %v1662 = vpop.permute.xlu0 %1661
    %1663 = vrot.lane.b32.xlu0 %v293, 110
    %v1664 = vpop.permute.xlu0 %1663
    %1665 = vrot.lane.b32.xlu0 %v292, 110
    %v1666 = vpop.permute.xlu0 %1665
    %1667 = vrot.lane.b32.xlu0 %v291, 110
    %v1668 = vpop.permute.xlu0 %1667
    %1701 = vrot.lane.b32.xlu0 %v387, 120
    %v1702 = vpop.permute.xlu0 %1701
    %1703 = vrot.lane.b32.xlu0 %v386, 120
    %v1704 = vpop.permute.xlu0 %1703
    %1705 = vrot.lane.b32.xlu0 %v385, 120
    %v1706 = vpop.permute.xlu0 %1705
    %1707 = vrot.lane.b32.xlu0 %v384, 120
    %v1708 = vpop.permute.xlu0 %1707
    %1709 = vrot.lane.b32.xlu0 %v383, 120
    %v1710 = vpop.permute.xlu0 %1709
    %1711 = vrot.lane.b32.xlu0 %v382, 120
    %v1712 = vpop.permute.xlu0 %1711
    %1713 = vrot.lane.b32.xlu0 %v381, 120
    %v1714 = vpop.permute.xlu0 %1713
    %1715 = vrot.lane.b32.xlu0 %v380, 120
    %v1716 = vpop.permute.xlu0 %1715
    %1717 = vrot.lane.b32.xlu0 %v379, 120
    %v1718 = vpop.permute.xlu0 %1717
    %1719 = vrot.lane.b32.xlu0 %v378, 120
    %v1720 = vpop.permute.xlu0 %1719
    %1721 = vrot.lane.b32.xlu0 %v377, 120
    %v1722 = vpop.permute.xlu0 %1721
    %1723 = vrot.lane.b32.xlu0 %v376, 120
    %v1724 = vpop.permute.xlu0 %1723
    %1725 = vrot.lane.b32.xlu0 %v375, 120
    %v1726 = vpop.permute.xlu0 %1725
    %1727 = vrot.lane.b32.xlu0 %v374, 120
    %v1728 = vpop.permute.xlu0 %1727
    %1729 = vrot.lane.b32.xlu0 %v373, 120
    %v1730 = vpop.permute.xlu0 %1729
    %1731 = vrot.lane.b32.xlu0 %v372, 120
    %v1732 = vpop.permute.xlu0 %1731
    %1733 = vrot.lane.b32.xlu0 %v371, 120
    %v1734 = vpop.permute.xlu0 %1733
    %1735 = vrot.lane.b32.xlu0 %v370, 120
    %v1736 = vpop.permute.xlu0 %1735
    %1737 = vrot.lane.b32.xlu0 %v369, 120
    %v1738 = vpop.permute.xlu0 %1737
    %1739 = vrot.lane.b32.xlu0 %v368, 120
    %v1740 = vpop.permute.xlu0 %1739
    %1741 = vrot.lane.b32.xlu0 %v367, 120
    %v1742 = vpop.permute.xlu0 %1741
    %1743 = vrot.lane.b32.xlu0 %v366, 120
    %v1744 = vpop.permute.xlu0 %1743
    %1745 = vrot.lane.b32.xlu0 %v365, 120
    %v1746 = vpop.permute.xlu0 %1745
    %1747 = vrot.lane.b32.xlu0 %v364, 120
    %v1748 = vpop.permute.xlu0 %1747
    %1749 = vrot.lane.b32.xlu0 %v363, 120
    %v1750 = vpop.permute.xlu0 %1749
    %1751 = vrot.lane.b32.xlu0 %v362, 120
    %v1752 = vpop.permute.xlu0 %1751
    %1753 = vrot.lane.b32.xlu0 %v361, 120
    %v1754 = vpop.permute.xlu0 %1753
    %1755 = vrot.lane.b32.xlu0 %v360, 120
    %v1756 = vpop.permute.xlu0 %1755
    %1757 = vrot.lane.b32.xlu0 %v359, 120
    %v1758 = vpop.permute.xlu0 %1757
    %1759 = vrot.lane.b32.xlu0 %v358, 120
    %v1760 = vpop.permute.xlu0 %1759
    %1761 = vrot.lane.b32.xlu0 %v357, 120
    %v1762 = vpop.permute.xlu0 %1761
    %1763 = vrot.lane.b32.xlu0 %v356, 120
    %v1764 = vpop.permute.xlu0 %1763
    %1797 = vrot.lane.b32.xlu0 %v94, 2
    %v1798 = vpop.permute.xlu0 %1797
    %1799 = vrot.lane.b32.xlu0 %v95, 2
    %v1800 = vpop.permute.xlu0 %1799
    %1801 = vrot.lane.b32.xlu0 %v96, 2
    %v1802 = vpop.permute.xlu0 %1801
    %1803 = vrot.lane.b32.xlu0 %v97, 2
    %v1804 = vpop.permute.xlu0 %1803
    %1805 = vrot.lane.b32.xlu0 %v98, 2
    %v1806 = vpop.permute.xlu0 %1805
    %1807 = vrot.lane.b32.xlu0 %v99, 2
    %v1808 = vpop.permute.xlu0 %1807
    %1809 = vrot.lane.b32.xlu0 %v100, 2
    %v1810 = vpop.permute.xlu0 %1809
    %1811 = vrot.lane.b32.xlu0 %v101, 2
    %v1812 = vpop.permute.xlu0 %1811
    %1813 = vrot.lane.b32.xlu0 %v102, 2
    %v1814 = vpop.permute.xlu0 %1813
    %1815 = vrot.lane.b32.xlu0 %v103, 2
    %v1816 = vpop.permute.xlu0 %1815
    %1817 = vrot.lane.b32.xlu0 %v104, 2
    %v1818 = vpop.permute.xlu0 %1817
    %1819 = vrot.lane.b32.xlu0 %v105, 2
    %v1820 = vpop.permute.xlu0 %1819
    %1821 = vrot.lane.b32.xlu0 %v106, 2
    %v1822 = vpop.permute.xlu0 %1821
    %1823 = vrot.lane.b32.xlu0 %v107, 2
    %v1824 = vpop.permute.xlu0 %1823
    %1825 = vrot.lane.b32.xlu0 %v108, 2
    %v1826 = vpop.permute.xlu0 %1825
    %1827 = vrot.lane.b32.xlu0 %v109, 2
    %v1828 = vpop.permute.xlu0 %1827
    %1829 = vrot.lane.b32.xlu0 %v110, 2
    %v1830 = vpop.permute.xlu0 %1829
    %1831 = vrot.lane.b32.xlu0 %v111, 2
    %v1832 = vpop.permute.xlu0 %1831
    %1833 = vrot.lane.b32.xlu0 %v112, 2
    %v1834 = vpop.permute.xlu0 %1833
    %1835 = vrot.lane.b32.xlu0 %v113, 2
    %v1836 = vpop.permute.xlu0 %1835
    %1837 = vrot.lane.b32.xlu0 %v114, 2
    %v1838 = vpop.permute.xlu0 %1837
    %1839 = vrot.lane.b32.xlu0 %v115, 2
    %v1840 = vpop.permute.xlu0 %1839
    %1841 = vrot.lane.b32.xlu0 %v116, 2
    %v1842 = vpop.permute.xlu0 %1841
    %1843 = vrot.lane.b32.xlu0 %v117, 2
    %v1844 = vpop.permute.xlu0 %1843
    %1845 = vrot.lane.b32.xlu0 %v118, 2
    %v1846 = vpop.permute.xlu0 %1845
    %1847 = vrot.lane.b32.xlu0 %v119, 2
    %v1848 = vpop.permute.xlu0 %1847
    %1849 = vrot.lane.b32.xlu0 %v120, 2
    %v1850 = vpop.permute.xlu0 %1849
    %1851 = vrot.lane.b32.xlu0 %v121, 2
    %v1852 = vpop.permute.xlu0 %1851
    %1853 = vrot.lane.b32.xlu0 %v122, 2
    %v1854 = vpop.permute.xlu0 %1853
    %1855 = vrot.lane.b32.xlu0 %v123, 2
    %v1856 = vpop.permute.xlu0 %1855
    %1857 = vrot.lane.b32.xlu0 %v124, 2
    %v1858 = vpop.permute.xlu0 %1857
    %1859 = vrot.lane.b32.xlu0 %v125, 2
    %v1860 = vpop.permute.xlu0 %1859
    %1893 = vrot.lane.b32.xlu0 %v451, 12
    %v1894 = vpop.permute.xlu0 %1893
    %1895 = vrot.lane.b32.xlu0 %v450, 12
    %v1896 = vpop.permute.xlu0 %1895
    %1897 = vrot.lane.b32.xlu0 %v449, 12
    %v1898 = vpop.permute.xlu0 %1897
    %1899 = vrot.lane.b32.xlu0 %v448, 12
    %v1900 = vpop.permute.xlu0 %1899
    %1901 = vrot.lane.b32.xlu0 %v447, 12
    %v1902 = vpop.permute.xlu0 %1901
    %1903 = vrot.lane.b32.xlu0 %v446, 12
    %v1904 = vpop.permute.xlu0 %1903
    %1905 = vrot.lane.b32.xlu0 %v445, 12
    %v1906 = vpop.permute.xlu0 %1905
    %1907 = vrot.lane.b32.xlu0 %v444, 12
    %v1908 = vpop.permute.xlu0 %1907
    %1909 = vrot.lane.b32.xlu0 %v443, 12
    %v1910 = vpop.permute.xlu0 %1909
    %1911 = vrot.lane.b32.xlu0 %v442, 12
    %v1912 = vpop.permute.xlu0 %1911
    %1913 = vrot.lane.b32.xlu0 %v441, 12
    %v1914 = vpop.permute.xlu0 %1913
    %1915 = vrot.lane.b32.xlu0 %v440, 12
    %v1916 = vpop.permute.xlu0 %1915
    %1917 = vrot.lane.b32.xlu0 %v439, 12
    %v1918 = vpop.permute.xlu0 %1917
    %1919 = vrot.lane.b32.xlu0 %v438, 12
    %v1920 = vpop.permute.xlu0 %1919
    %1921 = vrot.lane.b32.xlu0 %v437, 12
    %v1922 = vpop.permute.xlu0 %1921
    %1923 = vrot.lane.b32.xlu0 %v436, 12
    %v1924 = vpop.permute.xlu0 %1923
    %1925 = vrot.lane.b32.xlu0 %v435, 12
    %v1926 = vpop.permute.xlu0 %1925
    %1927 = vrot.lane.b32.xlu0 %v434, 12
    %v1928 = vpop.permute.xlu0 %1927
    %1929 = vrot.lane.b32.xlu0 %v433, 12
    %v1930 = vpop.permute.xlu0 %1929
    %1931 = vrot.lane.b32.xlu0 %v432, 12
    %v1932 = vpop.permute.xlu0 %1931
    %1933 = vrot.lane.b32.xlu0 %v431, 12
    %v1934 = vpop.permute.xlu0 %1933
    %1935 = vrot.lane.b32.xlu0 %v430, 12
    %v1936 = vpop.permute.xlu0 %1935
    %1937 = vrot.lane.b32.xlu0 %v429, 12
    %v1938 = vpop.permute.xlu0 %1937
    %1939 = vrot.lane.b32.xlu0 %v428, 12
    %v1940 = vpop.permute.xlu0 %1939
    %1941 = vrot.lane.b32.xlu0 %v427, 12
    %v1942 = vpop.permute.xlu0 %1941
    %1943 = vrot.lane.b32.xlu0 %v426, 12
    %v1944 = vpop.permute.xlu0 %1943
    %1945 = vrot.lane.b32.xlu0 %v425, 12
    %v1946 = vpop.permute.xlu0 %1945
    %1947 = vrot.lane.b32.xlu0 %v424, 12
    %v1948 = vpop.permute.xlu0 %1947
    %1949 = vrot.lane.b32.xlu0 %v423, 12
    %v1950 = vpop.permute.xlu0 %1949
    %1951 = vrot.lane.b32.xlu0 %v422, 12
    %v1952 = vpop.permute.xlu0 %1951
    %1953 = vrot.lane.b32.xlu0 %v421, 12
    %v1954 = vpop.permute.xlu0 %1953
    %1955 = vrot.lane.b32.xlu0 %v452, 12
    %v1956 = vpop.permute.xlu0 %1955
    %1989 = vrot.lane.b32.xlu0 %v191, 22
    %v1990 = vpop.permute.xlu0 %1989
    %1991 = vrot.lane.b32.xlu0 %v190, 22
    %v1992 = vpop.permute.xlu0 %1991
    %1993 = vrot.lane.b32.xlu0 %v189, 22
    %v1994 = vpop.permute.xlu0 %1993
    %1995 = vrot.lane.b32.xlu0 %v188, 22
    %v1996 = vpop.permute.xlu0 %1995
    %1997 = vrot.lane.b32.xlu0 %v187, 22
    %v1998 = vpop.permute.xlu0 %1997
    %1999 = vrot.lane.b32.xlu0 %v186, 22
    %v2000 = vpop.permute.xlu0 %1999
    %2001 = vrot.lane.b32.xlu0 %v185, 22
    %v2002 = vpop.permute.xlu0 %2001
    %2003 = vrot.lane.b32.xlu0 %v184, 22
    %v2004 = vpop.permute.xlu0 %2003
    %2005 = vrot.lane.b32.xlu0 %v183, 22
    %v2006 = vpop.permute.xlu0 %2005
    %2007 = vrot.lane.b32.xlu0 %v182, 22
    %v2008 = vpop.permute.xlu0 %2007
    %2009 = vrot.lane.b32.xlu0 %v181, 22
    %v2010 = vpop.permute.xlu0 %2009
    %2011 = vrot.lane.b32.xlu0 %v180, 22
    %v2012 = vpop.permute.xlu0 %2011
    %2013 = vrot.lane.b32.xlu0 %v179, 22
    %v2014 = vpop.permute.xlu0 %2013
    %2015 = vrot.lane.b32.xlu0 %v178, 22
    %v2016 = vpop.permute.xlu0 %2015
    %2017 = vrot.lane.b32.xlu0 %v177, 22
    %v2018 = vpop.permute.xlu0 %2017
    %2019 = vrot.lane.b32.xlu0 %v176, 22
    %v2020 = vpop.permute.xlu0 %2019
    %2021 = vrot.lane.b32.xlu0 %v175, 22
    %v2022 = vpop.permute.xlu0 %2021
    %2023 = vrot.lane.b32.xlu0 %v174, 22
    %v2024 = vpop.permute.xlu0 %2023
    %2025 = vrot.lane.b32.xlu0 %v173, 22
    %v2026 = vpop.permute.xlu0 %2025
    %2027 = vrot.lane.b32.xlu0 %v172, 22
    %v2028 = vpop.permute.xlu0 %2027
    %2029 = vrot.lane.b32.xlu0 %v171, 22
    %v2030 = vpop.permute.xlu0 %2029
    %2031 = vrot.lane.b32.xlu0 %v170, 22
    %v2032 = vpop.permute.xlu0 %2031
    %2033 = vrot.lane.b32.xlu0 %v169, 22
    %v2034 = vpop.permute.xlu0 %2033
    %2035 = vrot.lane.b32.xlu0 %v168, 22
    %v2036 = vpop.permute.xlu0 %2035
    %2037 = vrot.lane.b32.xlu0 %v167, 22
    %v2038 = vpop.permute.xlu0 %2037
    %2039 = vrot.lane.b32.xlu0 %v166, 22
    %v2040 = vpop.permute.xlu0 %2039
    %2041 = vrot.lane.b32.xlu0 %v165, 22
    %v2042 = vpop.permute.xlu0 %2041
    %2043 = vrot.lane.b32.xlu0 %v164, 22
    %v2044 = vpop.permute.xlu0 %2043
    %2045 = vrot.lane.b32.xlu0 %v163, 22
    %v2046 = vpop.permute.xlu0 %2045
    %2047 = vrot.lane.b32.xlu0 %v162, 22
    %v2048 = vpop.permute.xlu0 %2047
    %2049 = vrot.lane.b32.xlu0 %v161, 22
    %v2050 = vpop.permute.xlu0 %2049
    %2051 = vrot.lane.b32.xlu0 %v192, 22
    %v2052 = vpop.permute.xlu0 %2051
    %vm2085 = vcmask 80896
    %v2086 = vsel %vm2085, %v162, %v486
    %v2087 = vsel %vm2085, %v161, %v488
    %v2088 = vsel %vm2085, %v192, %v490
    %v2089 = vsel %vm2085, %v191, %v492
    %v2090 = vsel %vm2085, %v190, %v494
    %v2091 = vsel %vm2085, %v189, %v496
    %v2092 = vsel %vm2085, %v188, %v498
    %v2093 = vsel %vm2085, %v187, %v500
    %v2094 = vsel %vm2085, %v186, %v502
    %v2095 = vsel %vm2085, %v185, %v504
    %v2096 = vsel %vm2085, %v184, %v506
    %v2097 = vsel %vm2085, %v183, %v508
    %v2098 = vsel %vm2085, %v182, %v510
    %v2099 = vsel %vm2085, %v181, %v512
    %v2100 = vsel %vm2085, %v180, %v514
    %v2101 = vsel %vm2085, %v179, %v516
    %v2102 = vsel %vm2085, %v178, %v518
    %v2103 = vsel %vm2085, %v177, %v520
    %v2104 = vsel %vm2085, %v176, %v522
    %v2105 = vsel %vm2085, %v175, %v524
    %v2106 = vsel %vm2085, %v174, %v526
    %v2107 = vsel %vm2085, %v173, %v528
    %v2108 = vsel %vm2085, %v172, %v530
    %v2109 = vsel %vm2085, %v171, %v532
    %v2110 = vsel %vm2085, %v170, %v534
    %v2111 = vsel %vm2085, %v169, %v536
    %v2112 = vsel %vm2085, %v168, %v538
    %v2113 = vsel %vm2085, %v167, %v540
    %v2114 = vsel %vm2085, %v166, %v542
    %v2115 = vsel %vm2085, %v165, %v544
    %v2116 = vsel %vm2085, %v164, %v546
    %v2117 = vsel %vm2085, %v163, %v548
    %vm2118 = vcmask 162816
    %v2119 = vsel %vm2118, %v2086, %v614
    %v2120 = vsel %vm2118, %v2087, %v616
    %v2121 = vsel %vm2118, %v2088, %v618
    %v2122 = vsel %vm2118, %v2089, %v620
    %v2123 = vsel %vm2118, %v2090, %v622
    %v2124 = vsel %vm2118, %v2091, %v624
    %v2125 = vsel %vm2118, %v2092, %v626
    %v2126 = vsel %vm2118, %v2093, %v628
    %v2127 = vsel %vm2118, %v2094, %v630
    %v2128 = vsel %vm2118, %v2095, %v632
    %v2129 = vsel %vm2118, %v2096, %v634
    %v2130 = vsel %vm2118, %v2097, %v636
    %v2131 = vsel %vm2118, %v2098, %v638
    %v2132 = vsel %vm2118, %v2099, %v640
    %v2133 = vsel %vm2118, %v2100, %v642
    %v2134 = vsel %vm2118, %v2101, %v644
    %v2135 = vsel %vm2118, %v2102, %v646
    %v2136 = vsel %vm2118, %v2103, %v648
    %v2137 = vsel %vm2118, %v2104, %v650
    %v2138 = vsel %vm2118, %v2105, %v652
    %v2139 = vsel %vm2118, %v2106, %v654
    %v2140 = vsel %vm2118, %v2107, %v656
    %v2141 = vsel %vm2118, %v2108, %v658
    %v2142 = vsel %vm2118, %v2109, %v660
    %v2143 = vsel %vm2118, %v2110, %v662
    %v2144 = vsel %vm2118, %v2111, %v664
    %v2145 = vsel %vm2118, %v2112, %v666
    %v2146 = vsel %vm2118, %v2113, %v668
    %v2147 = vsel %vm2118, %v2114, %v670
    %v2148 = vsel %vm2118, %v2115, %v672
    %v2149 = vsel %vm2118, %v2116, %v674
    %v2150 = vsel %vm2118, %v2117, %v676
    %vm2151 = vcmask 244736
    %v2152 = vsel %vm2151, %v2119, %v742
    %v2153 = vsel %vm2151, %v2120, %v744
    %v2154 = vsel %vm2151, %v2121, %v746
    %v2155 = vsel %vm2151, %v2122, %v748
    %v2156 = vsel %vm2151, %v2123, %v750
    %v2157 = vsel %vm2151, %v2124, %v752
    %v2158 = vsel %vm2151, %v2125, %v754
    %v2159 = vsel %vm2151, %v2126, %v756
    %v2160 = vsel %vm2151, %v2127, %v758
    %v2161 = vsel %vm2151, %v2128, %v760
    %v2162 = vsel %vm2151, %v2129, %v762
    %v2163 = vsel %vm2151, %v2130, %v764
    %v2164 = vsel %vm2151, %v2131, %v766
    %v2165 = vsel %vm2151, %v2132, %v768
    %v2166 = vsel %vm2151, %v2133, %v770
    %v2167 = vsel %vm2151, %v2134, %v772
    %v2168 = vsel %vm2151, %v2135, %v774
    %v2169 = vsel %vm2151, %v2136, %v776
    %v2170 = vsel %vm2151, %v2137, %v778
    %v2171 = vsel %vm2151, %v2138, %v780
    %v2172 = vsel %vm2151, %v2139, %v782
    %v2173 = vsel %vm2151, %v2140, %v784
    %v2174 = vsel %vm2151, %v2141, %v786
    %v2175 = vsel %vm2151, %v2142, %v788
    %v2176 = vsel %vm2151, %v2143, %v790
    %v2177 = vsel %vm2151, %v2144, %v792
    %v2178 = vsel %vm2151, %v2145, %v794
    %v2179 = vsel %vm2151, %v2146, %v796
    %v2180 = vsel %vm2151, %v2147, %v798
    %v2181 = vsel %vm2151, %v2148, %v800
    %v2182 = vsel %vm2151, %v2149, %v802
    %v2183 = vsel %vm2151, %v2150, %v804
    %vm2184 = vcmask 326656
    %v2185 = vsel %vm2184, %v2152, %v870
    %v2186 = vsel %vm2184, %v2153, %v872
    %v2187 = vsel %vm2184, %v2154, %v874
    %v2188 = vsel %vm2184, %v2155, %v876
    %v2189 = vsel %vm2184, %v2156, %v878
    %v2190 = vsel %vm2184, %v2157, %v880
    %v2191 = vsel %vm2184, %v2158, %v882
    %v2192 = vsel %vm2184, %v2159, %v884
    %v2193 = vsel %vm2184, %v2160, %v886
    %v2194 = vsel %vm2184, %v2161, %v888
    %v2195 = vsel %vm2184, %v2162, %v890
    %v2196 = vsel %vm2184, %v2163, %v892
    %v2197 = vsel %vm2184, %v2164, %v894
    %v2198 = vsel %vm2184, %v2165, %v896
    %v2199 = vsel %vm2184, %v2166, %v898
    %v2200 = vsel %vm2184, %v2167, %v900
    %v2201 = vsel %vm2184, %v2168, %v902
    %v2202 = vsel %vm2184, %v2169, %v904
    %v2203 = vsel %vm2184, %v2170, %v906
    %v2204 = vsel %vm2184, %v2171, %v908
    %v2205 = vsel %vm2184, %v2172, %v910
    %v2206 = vsel %vm2184, %v2173, %v912
    %v2207 = vsel %vm2184, %v2174, %v914
    %v2208 = vsel %vm2184, %v2175, %v916
    %v2209 = vsel %vm2184, %v2176, %v918
    %v2210 = vsel %vm2184, %v2177, %v920
    %v2211 = vsel %vm2184, %v2178, %v922
    %v2212 = vsel %vm2184, %v2179, %v924
    %v2213 = vsel %vm2184, %v2180, %v926
    %v2214 = vsel %vm2184, %v2181, %v928
    %v2215 = vsel %vm2184, %v2182, %v930
    %v2216 = vsel %vm2184, %v2183, %v932
    %vm2217 = vcmask 408576
    %v2218 = vsel %vm2217, %v2185, %v998
    %v2219 = vsel %vm2217, %v2186, %v1000
    %v2220 = vsel %vm2217, %v2187, %v1002
    %v2221 = vsel %vm2217, %v2188, %v1004
    %v2222 = vsel %vm2217, %v2189, %v1006
    %v2223 = vsel %vm2217, %v2190, %v1008
    %v2224 = vsel %vm2217, %v2191, %v1010
    %v2225 = vsel %vm2217, %v2192, %v1012
    %v2226 = vsel %vm2217, %v2193, %v1014
    %v2227 = vsel %vm2217, %v2194, %v1016
    %v2228 = vsel %vm2217, %v2195, %v1018
    %v2229 = vsel %vm2217, %v2196, %v1020
    %v2230 = vsel %vm2217, %v2197, %v1022
    %v2231 = vsel %vm2217, %v2198, %v1024
    %v2232 = vsel %vm2217, %v2199, %v1026
    %v2233 = vsel %vm2217, %v2200, %v1028
    %v2234 = vsel %vm2217, %v2201, %v1030
    %v2235 = vsel %vm2217, %v2202, %v1032
    %v2236 = vsel %vm2217, %v2203, %v1034
    %v2237 = vsel %vm2217, %v2204, %v1036
    %v2238 = vsel %vm2217, %v2205, %v1038
    %v2239 = vsel %vm2217, %v2206, %v1040
    %v2240 = vsel %vm2217, %v2207, %v1042
    %v2241 = vsel %vm2217, %v2208, %v1044
    %v2242 = vsel %vm2217, %v2209, %v1046
    %v2243 = vsel %vm2217, %v2210, %v1048
    %v2244 = vsel %vm2217, %v2211, %v1050
    %v2245 = vsel %vm2217, %v2212, %v1052
    %v2246 = vsel %vm2217, %v2213, %v1054
    %v2247 = vsel %vm2217, %v2214, %v1056
    %v2248 = vsel %vm2217, %v2215, %v1058
    %v2249 = vsel %vm2217, %v2216, %v1060
    %vm2250 = vcmask 490496
    %v2251 = vsel %vm2250, %v2218, %v1126
    %v2252 = vsel %vm2250, %v2219, %v1128
    %v2253 = vsel %vm2250, %v2220, %v1130
    %v2254 = vsel %vm2250, %v2221, %v1132
    %v2255 = vsel %vm2250, %v2222, %v1134
    %v2256 = vsel %vm2250, %v2223, %v1136
    %v2257 = vsel %vm2250, %v2224, %v1138
    %v2258 = vsel %vm2250, %v2225, %v1140
    %v2259 = vsel %vm2250, %v2226, %v1142
    %v2260 = vsel %vm2250, %v2227, %v1144
    %v2261 = vsel %vm2250, %v2228, %v1146
    %v2262 = vsel %vm2250, %v2229, %v1148
    %v2263 = vsel %vm2250, %v2230, %v1150
    %v2264 = vsel %vm2250, %v2231, %v1152
    %v2265 = vsel %vm2250, %v2232, %v1154
    %v2266 = vsel %vm2250, %v2233, %v1156
    %v2267 = vsel %vm2250, %v2234, %v1158
    %v2268 = vsel %vm2250, %v2235, %v1160
    %v2269 = vsel %vm2250, %v2236, %v1162
    %v2270 = vsel %vm2250, %v2237, %v1164
    %v2271 = vsel %vm2250, %v2238, %v1166
    %v2272 = vsel %vm2250, %v2239, %v1168
    %v2273 = vsel %vm2250, %v2240, %v1170
    %v2274 = vsel %vm2250, %v2241, %v1172
    %v2275 = vsel %vm2250, %v2242, %v1174
    %v2276 = vsel %vm2250, %v2243, %v1176
    %v2277 = vsel %vm2250, %v2244, %v1178
    %v2278 = vsel %vm2250, %v2245, %v1180
    %v2279 = vsel %vm2250, %v2246, %v1182
    %v2280 = vsel %vm2250, %v2247, %v1184
    %v2281 = vsel %vm2250, %v2248, %v1186
    %v2282 = vsel %vm2250, %v2249, %v1188
    %vm2283 = vcmask 572416
    %v2284 = vsel %vm2283, %v2251, %v1222
    %v2285 = vsel %vm2283, %v2252, %v1224
    %v2286 = vsel %vm2283, %v2253, %v1226
    %v2287 = vsel %vm2283, %v2254, %v1228
    %v2288 = vsel %vm2283, %v2255, %v1230
    %v2289 = vsel %vm2283, %v2256, %v1232
    %v2290 = vsel %vm2283, %v2257, %v1234
    %v2291 = vsel %vm2283, %v2258, %v1236
    %v2292 = vsel %vm2283, %v2259, %v1238
    %v2293 = vsel %vm2283, %v2260, %v1240
    %v2294 = vsel %vm2283, %v2261, %v1242
    %v2295 = vsel %vm2283, %v2262, %v1244
    %v2296 = vsel %vm2283, %v2263, %v1246
    %v2297 = vsel %vm2283, %v2264, %v1248
    %v2298 = vsel %vm2283, %v2265, %v1250
    %v2299 = vsel %vm2283, %v2266, %v1252
    %v2300 = vsel %vm2283, %v2267, %v1254
    %v2301 = vsel %vm2283, %v2268, %v1256
    %v2302 = vsel %vm2283, %v2269, %v1258
    %v2303 = vsel %vm2283, %v2270, %v1260
    %v2304 = vsel %vm2283, %v2271, %v1262
    %v2305 = vsel %vm2283, %v2272, %v1264
    %v2306 = vsel %vm2283, %v2273, %v1266
    %v2307 = vsel %vm2283, %v2274, %v1268
    %v2308 = vsel %vm2283, %v2275, %v1270
    %v2309 = vsel %vm2283, %v2276, %v1272
    %v2310 = vsel %vm2283, %v2277, %v1274
    %v2311 = vsel %vm2283, %v2278, %v1276
    %v2312 = vsel %vm2283, %v2279, %v1278
    %v2313 = vsel %vm2283, %v2280, %v1280
    %v2314 = vsel %vm2283, %v2281, %v1282
    %v2315 = vsel %vm2283, %v2282, %v1284
    %vm2316 = vcmask 654336
    %v2317 = vsel %vm2316, %v2284, %v1318
    %v2318 = vsel %vm2316, %v2285, %v1320
    %v2319 = vsel %vm2316, %v2286, %v1322
    %v2320 = vsel %vm2316, %v2287, %v1324
    %v2321 = vsel %vm2316, %v2288, %v1326
    %v2322 = vsel %vm2316, %v2289, %v1328
    %v2323 = vsel %vm2316, %v2290, %v1330
    %v2324 = vsel %vm2316, %v2291, %v1332
    %v2325 = vsel %vm2316, %v2292, %v1334
    %v2326 = vsel %vm2316, %v2293, %v1336
    %v2327 = vsel %vm2316, %v2294, %v1338
    %v2328 = vsel %vm2316, %v2295, %v1340
    %v2329 = vsel %vm2316, %v2296, %v1342
    %v2330 = vsel %vm2316, %v2297, %v1344
    %v2331 = vsel %vm2316, %v2298, %v1346
    %v2332 = vsel %vm2316, %v2299, %v1348
    %v2333 = vsel %vm2316, %v2300, %v1350
    %v2334 = vsel %vm2316, %v2301, %v1352
    %v2335 = vsel %vm2316, %v2302, %v1354
    %v2336 = vsel %vm2316, %v2303, %v1356
    %v2337 = vsel %vm2316, %v2304, %v1358
    %v2338 = vsel %vm2316, %v2305, %v1360
    %v2339 = vsel %vm2316, %v2306, %v1362
    %v2340 = vsel %vm2316, %v2307, %v1364
    %v2341 = vsel %vm2316, %v2308, %v1366
    %v2342 = vsel %vm2316, %v2309, %v1368
    %v2343 = vsel %vm2316, %v2310, %v1370
    %v2344 = vsel %vm2316, %v2311, %v1372
    %v2345 = vsel %vm2316, %v2312, %v1374
    %v2346 = vsel %vm2316, %v2313, %v1376
    %v2347 = vsel %vm2316, %v2314, %v1378
    %v2348 = vsel %vm2316, %v2315, %v1380
    %vm2349 = vcmask 736256
    %v2350 = vsel %vm2349, %v2317, %v1414
    %v2351 = vsel %vm2349, %v2318, %v1416
    %v2352 = vsel %vm2349, %v2319, %v1418
    %v2353 = vsel %vm2349, %v2320, %v1420
    %v2354 = vsel %vm2349, %v2321, %v1422
    %v2355 = vsel %vm2349, %v2322, %v1424
    %v2356 = vsel %vm2349, %v2323, %v1426
    %v2357 = vsel %vm2349, %v2324, %v1428
    %v2358 = vsel %vm2349, %v2325, %v1430
    %v2359 = vsel %vm2349, %v2326, %v1432
    %v2360 = vsel %vm2349, %v2327, %v1434
    %v2361 = vsel %vm2349, %v2328, %v1436
    %v2362 = vsel %vm2349, %v2329, %v1438
    %v2363 = vsel %vm2349, %v2330, %v1440
    %v2364 = vsel %vm2349, %v2331, %v1442
    %v2365 = vsel %vm2349, %v2332, %v1444
    %v2366 = vsel %vm2349, %v2333, %v1446
    %v2367 = vsel %vm2349, %v2334, %v1448
    %v2368 = vsel %vm2349, %v2335, %v1450
    %v2369 = vsel %vm2349, %v2336, %v1452
    %v2370 = vsel %vm2349, %v2337, %v1454
    %v2371 = vsel %vm2349, %v2338, %v1456
    %v2372 = vsel %vm2349, %v2339, %v1458
    %v2373 = vsel %vm2349, %v2340, %v1460
    %v2374 = vsel %vm2349, %v2341, %v1462
    %v2375 = vsel %vm2349, %v2342, %v1464
    %v2376 = vsel %vm2349, %v2343, %v1466
    %v2377 = vsel %vm2349, %v2344, %v1468
    %v2378 = vsel %vm2349, %v2345, %v1470
    %v2379 = vsel %vm2349, %v2346, %v1472
    %v2380 = vsel %vm2349, %v2347, %v1474
    %v2381 = vsel %vm2349, %v2348, %v1476
    %vm2382 = vcmask 818176
    %v2383 = vsel %vm2382, %v2350, %v1510
    %v2384 = vsel %vm2382, %v2351, %v1512
    %v2385 = vsel %vm2382, %v2352, %v1514
    %v2386 = vsel %vm2382, %v2353, %v1516
    %v2387 = vsel %vm2382, %v2354, %v1518
    %v2388 = vsel %vm2382, %v2355, %v1520
    %v2389 = vsel %vm2382, %v2356, %v1522
    %v2390 = vsel %vm2382, %v2357, %v1524
    %v2391 = vsel %vm2382, %v2358, %v1526
    %v2392 = vsel %vm2382, %v2359, %v1528
    %v2393 = vsel %vm2382, %v2360, %v1530
    %v2394 = vsel %vm2382, %v2361, %v1532
    %v2395 = vsel %vm2382, %v2362, %v1534
    %v2396 = vsel %vm2382, %v2363, %v1536
    %v2397 = vsel %vm2382, %v2364, %v1538
    %v2398 = vsel %vm2382, %v2365, %v1540
    %v2399 = vsel %vm2382, %v2366, %v1542
    %v2400 = vsel %vm2382, %v2367, %v1544
    %v2401 = vsel %vm2382, %v2368, %v1546
    %v2402 = vsel %vm2382, %v2369, %v1548
    %v2403 = vsel %vm2382, %v2370, %v1550
    %v2404 = vsel %vm2382, %v2371, %v1552
    %v2405 = vsel %vm2382, %v2372, %v1554
    %v2406 = vsel %vm2382, %v2373, %v1556
    %v2407 = vsel %vm2382, %v2374, %v1558
    %v2408 = vsel %vm2382, %v2375, %v1560
    %v2409 = vsel %vm2382, %v2376, %v1562
    %v2410 = vsel %vm2382, %v2377, %v1564
    %v2411 = vsel %vm2382, %v2378, %v1566
    %v2412 = vsel %vm2382, %v2379, %v1568
    %v2413 = vsel %vm2382, %v2380, %v1570
    %v2414 = vsel %vm2382, %v2381, %v1572
    %vm2415 = vcmask 900096
    %v2416 = vsel %vm2415, %v2383, %v1606
    %v2417 = vsel %vm2415, %v2384, %v1608
    %v2418 = vsel %vm2415, %v2385, %v1610
    %v2419 = vsel %vm2415, %v2386, %v1612
    %v2420 = vsel %vm2415, %v2387, %v1614
    %v2421 = vsel %vm2415, %v2388, %v1616
    %v2422 = vsel %vm2415, %v2389, %v1618
    %v2423 = vsel %vm2415, %v2390, %v1620
    %v2424 = vsel %vm2415, %v2391, %v1622
    %v2425 = vsel %vm2415, %v2392, %v1624
    %v2426 = vsel %vm2415, %v2393, %v1626
    %v2427 = vsel %vm2415, %v2394, %v1628
    %v2428 = vsel %vm2415, %v2395, %v1630
    %v2429 = vsel %vm2415, %v2396, %v1632
    %v2430 = vsel %vm2415, %v2397, %v1634
    %v2431 = vsel %vm2415, %v2398, %v1636
    %v2432 = vsel %vm2415, %v2399, %v1638
    %v2433 = vsel %vm2415, %v2400, %v1640
    %v2434 = vsel %vm2415, %v2401, %v1642
    %v2435 = vsel %vm2415, %v2402, %v1644
    %v2436 = vsel %vm2415, %v2403, %v1646
    %v2437 = vsel %vm2415, %v2404, %v1648
    %v2438 = vsel %vm2415, %v2405, %v1650
    %v2439 = vsel %vm2415, %v2406, %v1652
    %v2440 = vsel %vm2415, %v2407, %v1654
    %v2441 = vsel %vm2415, %v2408, %v1656
    %v2442 = vsel %vm2415, %v2409, %v1658
    %v2443 = vsel %vm2415, %v2410, %v1660
    %v2444 = vsel %vm2415, %v2411, %v1662
    %v2445 = vsel %vm2415, %v2412, %v1664
    %v2446 = vsel %vm2415, %v2413, %v1666
    %v2447 = vsel %vm2415, %v2414, %v1668
    %vm2448 = vcmask 982016
    %v2449 = vsel %vm2448, %v2416, %v1702
    %v2450 = vsel %vm2448, %v2417, %v1704
    %v2451 = vsel %vm2448, %v2418, %v1706
    %v2452 = vsel %vm2448, %v2419, %v1708
    %v2453 = vsel %vm2448, %v2420, %v1710
    %v2454 = vsel %vm2448, %v2421, %v1712
    %v2455 = vsel %vm2448, %v2422, %v1714
    %v2456 = vsel %vm2448, %v2423, %v1716
    %v2457 = vsel %vm2448, %v2424, %v1718
    %v2458 = vsel %vm2448, %v2425, %v1720
    %v2459 = vsel %vm2448, %v2426, %v1722
    %v2460 = vsel %vm2448, %v2427, %v1724
    %v2461 = vsel %vm2448, %v2428, %v1726
    %v2462 = vsel %vm2448, %v2429, %v1728
    %v2463 = vsel %vm2448, %v2430, %v1730
    %v2464 = vsel %vm2448, %v2431, %v1732
    %v2465 = vsel %vm2448, %v2432, %v1734
    %v2466 = vsel %vm2448, %v2433, %v1736
    %v2467 = vsel %vm2448, %v2434, %v1738
    %v2468 = vsel %vm2448, %v2435, %v1740
    %v2469 = vsel %vm2448, %v2436, %v1742
    %v2470 = vsel %vm2448, %v2437, %v1744
    %v2471 = vsel %vm2448, %v2438, %v1746
    %v2472 = vsel %vm2448, %v2439, %v1748
    %v2473 = vsel %vm2448, %v2440, %v1750
    %v2474 = vsel %vm2448, %v2441, %v1752
    %v2475 = vsel %vm2448, %v2442, %v1754
    %v2476 = vsel %vm2448, %v2443, %v1756
    %v2477 = vsel %vm2448, %v2444, %v1758
    %v2478 = vsel %vm2448, %v2445, %v1760
    %v2479 = vsel %vm2448, %v2446, %v1762
    %v2480 = vsel %vm2448, %v2447, %v1764
    %vm2481 = vcmask 15360
    %v2482 = vsel %vm2481, %v1702, %v1798
    %v2483 = vsel %vm2481, %v1704, %v1800
    %v2484 = vsel %vm2481, %v1706, %v1802
    %v2485 = vsel %vm2481, %v1708, %v1804
    %v2486 = vsel %vm2481, %v1710, %v1806
    %v2487 = vsel %vm2481, %v1712, %v1808
    %v2488 = vsel %vm2481, %v1714, %v1810
    %v2489 = vsel %vm2481, %v1716, %v1812
    %v2490 = vsel %vm2481, %v1718, %v1814
    %v2491 = vsel %vm2481, %v1720, %v1816
    %v2492 = vsel %vm2481, %v1722, %v1818
    %v2493 = vsel %vm2481, %v1724, %v1820
    %v2494 = vsel %vm2481, %v1726, %v1822
    %v2495 = vsel %vm2481, %v1728, %v1824
    %v2496 = vsel %vm2481, %v1730, %v1826
    %v2497 = vsel %vm2481, %v1732, %v1828
    %v2498 = vsel %vm2481, %v1734, %v1830
    %v2499 = vsel %vm2481, %v1736, %v1832
    %v2500 = vsel %vm2481, %v1738, %v1834
    %v2501 = vsel %vm2481, %v1740, %v1836
    %v2502 = vsel %vm2481, %v1742, %v1838
    %v2503 = vsel %vm2481, %v1744, %v1840
    %v2504 = vsel %vm2481, %v1746, %v1842
    %v2505 = vsel %vm2481, %v1748, %v1844
    %v2506 = vsel %vm2481, %v1750, %v1846
    %v2507 = vsel %vm2481, %v1752, %v1848
    %v2508 = vsel %vm2481, %v1754, %v1850
    %v2509 = vsel %vm2481, %v1756, %v1852
    %v2510 = vsel %vm2481, %v1758, %v1854
    %v2511 = vsel %vm2481, %v1760, %v1856
    %v2512 = vsel %vm2481, %v1762, %v1858
    %v2513 = vsel %vm2481, %v1764, %v1860
    %vm2514 = vcmask 97280
    %v2515 = vsel %vm2514, %v2482, %v1894
    %v2516 = vsel %vm2514, %v2483, %v1896
    %v2517 = vsel %vm2514, %v2484, %v1898
    %v2518 = vsel %vm2514, %v2485, %v1900
    %v2519 = vsel %vm2514, %v2486, %v1902
    %v2520 = vsel %vm2514, %v2487, %v1904
    %v2521 = vsel %vm2514, %v2488, %v1906
    %v2522 = vsel %vm2514, %v2489, %v1908
    %v2523 = vsel %vm2514, %v2490, %v1910
    %v2524 = vsel %vm2514, %v2491, %v1912
    %v2525 = vsel %vm2514, %v2492, %v1914
    %v2526 = vsel %vm2514, %v2493, %v1916
    %v2527 = vsel %vm2514, %v2494, %v1918
    %v2528 = vsel %vm2514, %v2495, %v1920
    %v2529 = vsel %vm2514, %v2496, %v1922
    %v2530 = vsel %vm2514, %v2497, %v1924
    %v2531 = vsel %vm2514, %v2498, %v1926
    %v2532 = vsel %vm2514, %v2499, %v1928
    %v2533 = vsel %vm2514, %v2500, %v1930
    %v2534 = vsel %vm2514, %v2501, %v1932
    %v2535 = vsel %vm2514, %v2502, %v1934
    %v2536 = vsel %vm2514, %v2503, %v1936
    %v2537 = vsel %vm2514, %v2504, %v1938
    %v2538 = vsel %vm2514, %v2505, %v1940
    %v2539 = vsel %vm2514, %v2506, %v1942
    %v2540 = vsel %vm2514, %v2507, %v1944
    %v2541 = vsel %vm2514, %v2508, %v1946
    %v2542 = vsel %vm2514, %v2509, %v1948
    %v2543 = vsel %vm2514, %v2510, %v1950
    %v2544 = vsel %vm2514, %v2511, %v1952
    %v2545 = vsel %vm2514, %v2512, %v1954
    %v2546 = vsel %vm2514, %v2513, %v1956
    %vm2547 = vcmask 179200
    %v2548 = vsel %vm2547, %v2515, %v1990
    %v2549 = vsel %vm2547, %v2516, %v1992
    %v2550 = vsel %vm2547, %v2517, %v1994
    %v2551 = vsel %vm2547, %v2518, %v1996
    %v2552 = vsel %vm2547, %v2519, %v1998
    %v2553 = vsel %vm2547, %v2520, %v2000
    %v2554 = vsel %vm2547, %v2521, %v2002
    %v2555 = vsel %vm2547, %v2522, %v2004
    %v2556 = vsel %vm2547, %v2523, %v2006
    %v2557 = vsel %vm2547, %v2524, %v2008
    %v2558 = vsel %vm2547, %v2525, %v2010
    %v2559 = vsel %vm2547, %v2526, %v2012
    %v2560 = vsel %vm2547, %v2527, %v2014
    %v2561 = vsel %vm2547, %v2528, %v2016
    %v2562 = vsel %vm2547, %v2529, %v2018
    %v2563 = vsel %vm2547, %v2530, %v2020
    %v2564 = vsel %vm2547, %v2531, %v2022
    %v2565 = vsel %vm2547, %v2532, %v2024
    %v2566 = vsel %vm2547, %v2533, %v2026
    %v2567 = vsel %vm2547, %v2534, %v2028
    %v2568 = vsel %vm2547, %v2535, %v2030
    %v2569 = vsel %vm2547, %v2536, %v2032
    %v2570 = vsel %vm2547, %v2537, %v2034
    %v2571 = vsel %vm2547, %v2538, %v2036
    %v2572 = vsel %vm2547, %v2539, %v2038
    %v2573 = vsel %vm2547, %v2540, %v2040
    %v2574 = vsel %vm2547, %v2541, %v2042
    %v2575 = vsel %vm2547, %v2542, %v2044
    %v2576 = vsel %vm2547, %v2543, %v2046
    %v2577 = vsel %vm2547, %v2544, %v2048
    %v2578 = vsel %vm2547, %v2545, %v2050
    %v2579 = vsel %vm2547, %v2546, %v2052
    %2580 = vrot.lane.b32.xlu0 %v321, 10
    %v2581 = vpop.permute.xlu0 %2580
    %2582 = vrot.lane.b32.xlu0 %v320, 10
    %v2583 = vpop.permute.xlu0 %2582
    %2584 = vrot.lane.b32.xlu0 %v319, 10
    %v2585 = vpop.permute.xlu0 %2584
    %2586 = vrot.lane.b32.xlu0 %v318, 10
    %v2587 = vpop.permute.xlu0 %2586
    %2588 = vrot.lane.b32.xlu0 %v317, 10
    %v2589 = vpop.permute.xlu0 %2588
    %2590 = vrot.lane.b32.xlu0 %v316, 10
    %v2591 = vpop.permute.xlu0 %2590
    %2592 = vrot.lane.b32.xlu0 %v315, 10
    %v2593 = vpop.permute.xlu0 %2592
    %2594 = vrot.lane.b32.xlu0 %v314, 10
    %v2595 = vpop.permute.xlu0 %2594
    %2596 = vrot.lane.b32.xlu0 %v313, 10
    %v2597 = vpop.permute.xlu0 %2596
    %2598 = vrot.lane.b32.xlu0 %v312, 10
    %v2599 = vpop.permute.xlu0 %2598
    %2600 = vrot.lane.b32.xlu0 %v311, 10
    %v2601 = vpop.permute.xlu0 %2600
    %2602 = vrot.lane.b32.xlu0 %v310, 10
    %v2603 = vpop.permute.xlu0 %2602
    %2604 = vrot.lane.b32.xlu0 %v309, 10
    %v2605 = vpop.permute.xlu0 %2604
    %2606 = vrot.lane.b32.xlu0 %v308, 10
    %v2607 = vpop.permute.xlu0 %2606
    %2608 = vrot.lane.b32.xlu0 %v307, 10
    %v2609 = vpop.permute.xlu0 %2608
    %2610 = vrot.lane.b32.xlu0 %v306, 10
    %v2611 = vpop.permute.xlu0 %2610
    %2612 = vrot.lane.b32.xlu0 %v305, 10
    %v2613 = vpop.permute.xlu0 %2612
    %2614 = vrot.lane.b32.xlu0 %v304, 10
    %v2615 = vpop.permute.xlu0 %2614
    %2616 = vrot.lane.b32.xlu0 %v303, 10
    %v2617 = vpop.permute.xlu0 %2616
    %2618 = vrot.lane.b32.xlu0 %v302, 10
    %v2619 = vpop.permute.xlu0 %2618
    %2620 = vrot.lane.b32.xlu0 %v301, 10
    %v2621 = vpop.permute.xlu0 %2620
    %2622 = vrot.lane.b32.xlu0 %v300, 10
    %v2623 = vpop.permute.xlu0 %2622
    %2624 = vrot.lane.b32.xlu0 %v299, 10
    %v2625 = vpop.permute.xlu0 %2624
    %2626 = vrot.lane.b32.xlu0 %v298, 10
    %v2627 = vpop.permute.xlu0 %2626
    %2628 = vrot.lane.b32.xlu0 %v297, 10
    %v2629 = vpop.permute.xlu0 %2628
    %2630 = vrot.lane.b32.xlu0 %v296, 10
    %v2631 = vpop.permute.xlu0 %2630
    %2632 = vrot.lane.b32.xlu0 %v295, 10
    %v2633 = vpop.permute.xlu0 %2632
    %2634 = vrot.lane.b32.xlu0 %v294, 10
    %v2635 = vpop.permute.xlu0 %2634
    %2636 = vrot.lane.b32.xlu0 %v293, 10
    %v2637 = vpop.permute.xlu0 %2636
    %2638 = vrot.lane.b32.xlu0 %v292, 10
    %v2639 = vpop.permute.xlu0 %2638
    %2640 = vrot.lane.b32.xlu0 %v291, 10
    %v2641 = vpop.permute.xlu0 %2640
    %2642 = vrot.lane.b32.xlu0 %v322, 10
    %v2643 = vpop.permute.xlu0 %2642
    %2676 = vrot.lane.b32.xlu0 %v190, 20
    %v2677 = vpop.permute.xlu0 %2676
    %2678 = vrot.lane.b32.xlu0 %v189, 20
    %v2679 = vpop.permute.xlu0 %2678
    %2680 = vrot.lane.b32.xlu0 %v188, 20
    %v2681 = vpop.permute.xlu0 %2680
    %2682 = vrot.lane.b32.xlu0 %v187, 20
    %v2683 = vpop.permute.xlu0 %2682
    %2684 = vrot.lane.b32.xlu0 %v186, 20
    %v2685 = vpop.permute.xlu0 %2684
    %2686 = vrot.lane.b32.xlu0 %v185, 20
    %v2687 = vpop.permute.xlu0 %2686
    %2688 = vrot.lane.b32.xlu0 %v184, 20
    %v2689 = vpop.permute.xlu0 %2688
    %2690 = vrot.lane.b32.xlu0 %v183, 20
    %v2691 = vpop.permute.xlu0 %2690
    %2692 = vrot.lane.b32.xlu0 %v182, 20
    %v2693 = vpop.permute.xlu0 %2692
    %2694 = vrot.lane.b32.xlu0 %v181, 20
    %v2695 = vpop.permute.xlu0 %2694
    %2696 = vrot.lane.b32.xlu0 %v180, 20
    %v2697 = vpop.permute.xlu0 %2696
    %2698 = vrot.lane.b32.xlu0 %v179, 20
    %v2699 = vpop.permute.xlu0 %2698
    %2700 = vrot.lane.b32.xlu0 %v178, 20
    %v2701 = vpop.permute.xlu0 %2700
    %2702 = vrot.lane.b32.xlu0 %v177, 20
    %v2703 = vpop.permute.xlu0 %2702
    %2704 = vrot.lane.b32.xlu0 %v176, 20
    %v2705 = vpop.permute.xlu0 %2704
    %2706 = vrot.lane.b32.xlu0 %v175, 20
    %v2707 = vpop.permute.xlu0 %2706
    %2708 = vrot.lane.b32.xlu0 %v174, 20
    %v2709 = vpop.permute.xlu0 %2708
    %2710 = vrot.lane.b32.xlu0 %v173, 20
    %v2711 = vpop.permute.xlu0 %2710
    %2712 = vrot.lane.b32.xlu0 %v172, 20
    %v2713 = vpop.permute.xlu0 %2712
    %2714 = vrot.lane.b32.xlu0 %v171, 20
    %v2715 = vpop.permute.xlu0 %2714
    %2716 = vrot.lane.b32.xlu0 %v170, 20
    %v2717 = vpop.permute.xlu0 %2716
    %2718 = vrot.lane.b32.xlu0 %v169, 20
    %v2719 = vpop.permute.xlu0 %2718
    %2720 = vrot.lane.b32.xlu0 %v168, 20
    %v2721 = vpop.permute.xlu0 %2720
    %2722 = vrot.lane.b32.xlu0 %v167, 20
    %v2723 = vpop.permute.xlu0 %2722
    %2724 = vrot.lane.b32.xlu0 %v166, 20
    %v2725 = vpop.permute.xlu0 %2724
    %2726 = vrot.lane.b32.xlu0 %v165, 20
    %v2727 = vpop.permute.xlu0 %2726
    %2728 = vrot.lane.b32.xlu0 %v164, 20
    %v2729 = vpop.permute.xlu0 %2728
    %2730 = vrot.lane.b32.xlu0 %v163, 20
    %v2731 = vpop.permute.xlu0 %2730
    %2732 = vrot.lane.b32.xlu0 %v162, 20
    %v2733 = vpop.permute.xlu0 %2732
    %2734 = vrot.lane.b32.xlu0 %v161, 20
    %v2735 = vpop.permute.xlu0 %2734
    %2736 = vrot.lane.b32.xlu0 %v192, 20
    %v2737 = vpop.permute.xlu0 %2736
    %2738 = vrot.lane.b32.xlu0 %v191, 20
    %v2739 = vpop.permute.xlu0 %2738
    %2772 = vrot.lane.b32.xlu0 %v255, 30
    %v2773 = vpop.permute.xlu0 %2772
    %2774 = vrot.lane.b32.xlu0 %v254, 30
    %v2775 = vpop.permute.xlu0 %2774
    %2776 = vrot.lane.b32.xlu0 %v253, 30
    %v2777 = vpop.permute.xlu0 %2776
    %2778 = vrot.lane.b32.xlu0 %v252, 30
    %v2779 = vpop.permute.xlu0 %2778
    %2780 = vrot.lane.b32.xlu0 %v251, 30
    %v2781 = vpop.permute.xlu0 %2780
    %2782 = vrot.lane.b32.xlu0 %v250, 30
    %v2783 = vpop.permute.xlu0 %2782
    %2784 = vrot.lane.b32.xlu0 %v249, 30
    %v2785 = vpop.permute.xlu0 %2784
    %2786 = vrot.lane.b32.xlu0 %v248, 30
    %v2787 = vpop.permute.xlu0 %2786
    %2788 = vrot.lane.b32.xlu0 %v247, 30
    %v2789 = vpop.permute.xlu0 %2788
    %2790 = vrot.lane.b32.xlu0 %v246, 30
    %v2791 = vpop.permute.xlu0 %2790
    %2792 = vrot.lane.b32.xlu0 %v245, 30
    %v2793 = vpop.permute.xlu0 %2792
    %2794 = vrot.lane.b32.xlu0 %v244, 30
    %v2795 = vpop.permute.xlu0 %2794
    %2796 = vrot.lane.b32.xlu0 %v243, 30
    %v2797 = vpop.permute.xlu0 %2796
    %2798 = vrot.lane.b32.xlu0 %v242, 30
    %v2799 = vpop.permute.xlu0 %2798
    %2800 = vrot.lane.b32.xlu0 %v241, 30
    %v2801 = vpop.permute.xlu0 %2800
    %2802 = vrot.lane.b32.xlu0 %v240, 30
    %v2803 = vpop.permute.xlu0 %2802
    %2804 = vrot.lane.b32.xlu0 %v239, 30
    %v2805 = vpop.permute.xlu0 %2804
    %2806 = vrot.lane.b32.xlu0 %v238, 30
    %v2807 = vpop.permute.xlu0 %2806
    %2808 = vrot.lane.b32.xlu0 %v237, 30
    %v2809 = vpop.permute.xlu0 %2808
    %2810 = vrot.lane.b32.xlu0 %v236, 30
    %v2811 = vpop.permute.xlu0 %2810
    %2812 = vrot.lane.b32.xlu0 %v235, 30
    %v2813 = vpop.permute.xlu0 %2812
    %2814 = vrot.lane.b32.xlu0 %v234, 30
    %v2815 = vpop.permute.xlu0 %2814
    %2816 = vrot.lane.b32.xlu0 %v233, 30
    %v2817 = vpop.permute.xlu0 %2816
    %2818 = vrot.lane.b32.xlu0 %v232, 30
    %v2819 = vpop.permute.xlu0 %2818
    %2820 = vrot.lane.b32.xlu0 %v231, 30
    %v2821 = vpop.permute.xlu0 %2820
    %2822 = vrot.lane.b32.xlu0 %v230, 30
    %v2823 = vpop.permute.xlu0 %2822
    %2824 = vrot.lane.b32.xlu0 %v229, 30
    %v2825 = vpop.permute.xlu0 %2824
    %2826 = vrot.lane.b32.xlu0 %v228, 30
    %v2827 = vpop.permute.xlu0 %2826
    %2828 = vrot.lane.b32.xlu0 %v227, 30
    %v2829 = vpop.permute.xlu0 %2828
    %2830 = vrot.lane.b32.xlu0 %v226, 30
    %v2831 = vpop.permute.xlu0 %2830
    %2832 = vrot.lane.b32.xlu0 %v257, 30
    %v2833 = vpop.permute.xlu0 %2832
    %2834 = vrot.lane.b32.xlu0 %v256, 30
    %v2835 = vpop.permute.xlu0 %2834
    %2868 = vrot.lane.b32.xlu0 %v320, 40
    %v2869 = vpop.permute.xlu0 %2868
    %2870 = vrot.lane.b32.xlu0 %v319, 40
    %v2871 = vpop.permute.xlu0 %2870
    %2872 = vrot.lane.b32.xlu0 %v318, 40
    %v2873 = vpop.permute.xlu0 %2872
    %2874 = vrot.lane.b32.xlu0 %v317, 40
    %v2875 = vpop.permute.xlu0 %2874
    %2876 = vrot.lane.b32.xlu0 %v316, 40
    %v2877 = vpop.permute.xlu0 %2876
    %2878 = vrot.lane.b32.xlu0 %v315, 40
    %v2879 = vpop.permute.xlu0 %2878
    %2880 = vrot.lane.b32.xlu0 %v314, 40
    %v2881 = vpop.permute.xlu0 %2880
    %2882 = vrot.lane.b32.xlu0 %v313, 40
    %v2883 = vpop.permute.xlu0 %2882
    %2884 = vrot.lane.b32.xlu0 %v312, 40
    %v2885 = vpop.permute.xlu0 %2884
    %2886 = vrot.lane.b32.xlu0 %v311, 40
    %v2887 = vpop.permute.xlu0 %2886
    %2888 = vrot.lane.b32.xlu0 %v310, 40
    %v2889 = vpop.permute.xlu0 %2888
    %2890 = vrot.lane.b32.xlu0 %v309, 40
    %v2891 = vpop.permute.xlu0 %2890
    %2892 = vrot.lane.b32.xlu0 %v308, 40
    %v2893 = vpop.permute.xlu0 %2892
    %2894 = vrot.lane.b32.xlu0 %v307, 40
    %v2895 = vpop.permute.xlu0 %2894
    %2896 = vrot.lane.b32.xlu0 %v306, 40
    %v2897 = vpop.permute.xlu0 %2896
    %2898 = vrot.lane.b32.xlu0 %v305, 40
    %v2899 = vpop.permute.xlu0 %2898
    %2900 = vrot.lane.b32.xlu0 %v304, 40
    %v2901 = vpop.permute.xlu0 %2900
    %2902 = vrot.lane.b32.xlu0 %v303, 40
    %v2903 = vpop.permute.xlu0 %2902
    %2904 = vrot.lane.b32.xlu0 %v302, 40
    %v2905 = vpop.permute.xlu0 %2904
    %2906 = vrot.lane.b32.xlu0 %v301, 40
    %v2907 = vpop.permute.xlu0 %2906
    %2908 = vrot.lane.b32.xlu0 %v300, 40
    %v2909 = vpop.permute.xlu0 %2908
    %2910 = vrot.lane.b32.xlu0 %v299, 40
    %v2911 = vpop.permute.xlu0 %2910
    %2912 = vrot.lane.b32.xlu0 %v298, 40
    %v2913 = vpop.permute.xlu0 %2912
    %2914 = vrot.lane.b32.xlu0 %v297, 40
    %v2915 = vpop.permute.xlu0 %2914
    %2916 = vrot.lane.b32.xlu0 %v296, 40
    %v2917 = vpop.permute.xlu0 %2916
    %2918 = vrot.lane.b32.xlu0 %v295, 40
    %v2919 = vpop.permute.xlu0 %2918
    %2920 = vrot.lane.b32.xlu0 %v294, 40
    %v2921 = vpop.permute.xlu0 %2920
    %2922 = vrot.lane.b32.xlu0 %v293, 40
    %v2923 = vpop.permute.xlu0 %2922
    %2924 = vrot.lane.b32.xlu0 %v292, 40
    %v2925 = vpop.permute.xlu0 %2924
    %2926 = vrot.lane.b32.xlu0 %v291, 40
    %v2927 = vpop.permute.xlu0 %2926
    %2928 = vrot.lane.b32.xlu0 %v322, 40
    %v2929 = vpop.permute.xlu0 %2928
    %2930 = vrot.lane.b32.xlu0 %v321, 40
    %v2931 = vpop.permute.xlu0 %2930
    %2964 = vrot.lane.b32.xlu0 %v385, 50
    %v2965 = vpop.permute.xlu0 %2964
    %2966 = vrot.lane.b32.xlu0 %v384, 50
    %v2967 = vpop.permute.xlu0 %2966
    %2968 = vrot.lane.b32.xlu0 %v383, 50
    %v2969 = vpop.permute.xlu0 %2968
    %2970 = vrot.lane.b32.xlu0 %v382, 50
    %v2971 = vpop.permute.xlu0 %2970
    %2972 = vrot.lane.b32.xlu0 %v381, 50
    %v2973 = vpop.permute.xlu0 %2972
    %2974 = vrot.lane.b32.xlu0 %v380, 50
    %v2975 = vpop.permute.xlu0 %2974
    %2976 = vrot.lane.b32.xlu0 %v379, 50
    %v2977 = vpop.permute.xlu0 %2976
    %2978 = vrot.lane.b32.xlu0 %v378, 50
    %v2979 = vpop.permute.xlu0 %2978
    %2980 = vrot.lane.b32.xlu0 %v377, 50
    %v2981 = vpop.permute.xlu0 %2980
    %2982 = vrot.lane.b32.xlu0 %v376, 50
    %v2983 = vpop.permute.xlu0 %2982
    %2984 = vrot.lane.b32.xlu0 %v375, 50
    %v2985 = vpop.permute.xlu0 %2984
    %2986 = vrot.lane.b32.xlu0 %v374, 50
    %v2987 = vpop.permute.xlu0 %2986
    %2988 = vrot.lane.b32.xlu0 %v373, 50
    %v2989 = vpop.permute.xlu0 %2988
    %2990 = vrot.lane.b32.xlu0 %v372, 50
    %v2991 = vpop.permute.xlu0 %2990
    %2992 = vrot.lane.b32.xlu0 %v371, 50
    %v2993 = vpop.permute.xlu0 %2992
    %2994 = vrot.lane.b32.xlu0 %v370, 50
    %v2995 = vpop.permute.xlu0 %2994
    %2996 = vrot.lane.b32.xlu0 %v369, 50
    %v2997 = vpop.permute.xlu0 %2996
    %2998 = vrot.lane.b32.xlu0 %v368, 50
    %v2999 = vpop.permute.xlu0 %2998
    %3000 = vrot.lane.b32.xlu0 %v367, 50
    %v3001 = vpop.permute.xlu0 %3000
    %3002 = vrot.lane.b32.xlu0 %v366, 50
    %v3003 = vpop.permute.xlu0 %3002
    %3004 = vrot.lane.b32.xlu0 %v365, 50
    %v3005 = vpop.permute.xlu0 %3004
    %3006 = vrot.lane.b32.xlu0 %v364, 50
    %v3007 = vpop.permute.xlu0 %3006
    %3008 = vrot.lane.b32.xlu0 %v363, 50
    %v3009 = vpop.permute.xlu0 %3008
    %3010 = vrot.lane.b32.xlu0 %v362, 50
    %v3011 = vpop.permute.xlu0 %3010
    %3012 = vrot.lane.b32.xlu0 %v361, 50
    %v3013 = vpop.permute.xlu0 %3012
    %3014 = vrot.lane.b32.xlu0 %v360, 50
    %v3015 = vpop.permute.xlu0 %3014
    %3016 = vrot.lane.b32.xlu0 %v359, 50
    %v3017 = vpop.permute.xlu0 %3016
    %3018 = vrot.lane.b32.xlu0 %v358, 50
    %v3019 = vpop.permute.xlu0 %3018
    %3020 = vrot.lane.b32.xlu0 %v357, 50
    %v3021 = vpop.permute.xlu0 %3020
    %3022 = vrot.lane.b32.xlu0 %v356, 50
    %v3023 = vpop.permute.xlu0 %3022
    %3024 = vrot.lane.b32.xlu0 %v387, 50
    %v3025 = vpop.permute.xlu0 %3024
    %3026 = vrot.lane.b32.xlu0 %v386, 50
    %v3027 = vpop.permute.xlu0 %3026
    %3060 = vrot.lane.b32.xlu0 %v96, 60
    %v3061 = vpop.permute.xlu0 %3060
    %3062 = vrot.lane.b32.xlu0 %v97, 60
    %v3063 = vpop.permute.xlu0 %3062
    %3064 = vrot.lane.b32.xlu0 %v98, 60
    %v3065 = vpop.permute.xlu0 %3064
    %3066 = vrot.lane.b32.xlu0 %v99, 60
    %v3067 = vpop.permute.xlu0 %3066
    %3068 = vrot.lane.b32.xlu0 %v100, 60
    %v3069 = vpop.permute.xlu0 %3068
    %3070 = vrot.lane.b32.xlu0 %v101, 60
    %v3071 = vpop.permute.xlu0 %3070
    %3072 = vrot.lane.b32.xlu0 %v102, 60
    %v3073 = vpop.permute.xlu0 %3072
    %3074 = vrot.lane.b32.xlu0 %v103, 60
    %v3075 = vpop.permute.xlu0 %3074
    %3076 = vrot.lane.b32.xlu0 %v104, 60
    %v3077 = vpop.permute.xlu0 %3076
    %3078 = vrot.lane.b32.xlu0 %v105, 60
    %v3079 = vpop.permute.xlu0 %3078
    %3080 = vrot.lane.b32.xlu0 %v106, 60
    %v3081 = vpop.permute.xlu0 %3080
    %3082 = vrot.lane.b32.xlu0 %v107, 60
    %v3083 = vpop.permute.xlu0 %3082
    %3084 = vrot.lane.b32.xlu0 %v108, 60
    %v3085 = vpop.permute.xlu0 %3084
    %3086 = vrot.lane.b32.xlu0 %v109, 60
    %v3087 = vpop.permute.xlu0 %3086
    %3088 = vrot.lane.b32.xlu0 %v110, 60
    %v3089 = vpop.permute.xlu0 %3088
    %3090 = vrot.lane.b32.xlu0 %v111, 60
    %v3091 = vpop.permute.xlu0 %3090
    %3092 = vrot.lane.b32.xlu0 %v112, 60
    %v3093 = vpop.permute.xlu0 %3092
    %3094 = vrot.lane.b32.xlu0 %v113, 60
    %v3095 = vpop.permute.xlu0 %3094
    %3096 = vrot.lane.b32.xlu0 %v114, 60
    %v3097 = vpop.permute.xlu0 %3096
    %3098 = vrot.lane.b32.xlu0 %v115, 60
    %v3099 = vpop.permute.xlu0 %3098
    %3100 = vrot.lane.b32.xlu0 %v116, 60
    %v3101 = vpop.permute.xlu0 %3100
    %3102 = vrot.lane.b32.xlu0 %v117, 60
    %v3103 = vpop.permute.xlu0 %3102
    %3104 = vrot.lane.b32.xlu0 %v118, 60
    %v3105 = vpop.permute.xlu0 %3104
    %3106 = vrot.lane.b32.xlu0 %v119, 60
    %v3107 = vpop.permute.xlu0 %3106
    %3108 = vrot.lane.b32.xlu0 %v120, 60
    %v3109 = vpop.permute.xlu0 %3108
    %3110 = vrot.lane.b32.xlu0 %v121, 60
    %v3111 = vpop.permute.xlu0 %3110
    %3112 = vrot.lane.b32.xlu0 %v122, 60
    %v3113 = vpop.permute.xlu0 %3112
    %3114 = vrot.lane.b32.xlu0 %v123, 60
    %v3115 = vpop.permute.xlu0 %3114
    %3116 = vrot.lane.b32.xlu0 %v124, 60
    %v3117 = vpop.permute.xlu0 %3116
    %3118 = vrot.lane.b32.xlu0 %v125, 60
    %v3119 = vpop.permute.xlu0 %3118
    %3120 = vrot.lane.b32.xlu0 %v94, 60
    %v3121 = vpop.permute.xlu0 %3120
    %3122 = vrot.lane.b32.xlu0 %v95, 60
    %v3123 = vpop.permute.xlu0 %3122
    %3156 = vrot.lane.b32.xlu0 %v449, 70
    %v3157 = vpop.permute.xlu0 %3156
    %3158 = vrot.lane.b32.xlu0 %v448, 70
    %v3159 = vpop.permute.xlu0 %3158
    %3160 = vrot.lane.b32.xlu0 %v447, 70
    %v3161 = vpop.permute.xlu0 %3160
    %3162 = vrot.lane.b32.xlu0 %v446, 70
    %v3163 = vpop.permute.xlu0 %3162
    %3164 = vrot.lane.b32.xlu0 %v445, 70
    %v3165 = vpop.permute.xlu0 %3164
    %3166 = vrot.lane.b32.xlu0 %v444, 70
    %v3167 = vpop.permute.xlu0 %3166
    %3168 = vrot.lane.b32.xlu0 %v443, 70
    %v3169 = vpop.permute.xlu0 %3168
    %3170 = vrot.lane.b32.xlu0 %v442, 70
    %v3171 = vpop.permute.xlu0 %3170
    %3172 = vrot.lane.b32.xlu0 %v441, 70
    %v3173 = vpop.permute.xlu0 %3172
    %3174 = vrot.lane.b32.xlu0 %v440, 70
    %v3175 = vpop.permute.xlu0 %3174
    %3176 = vrot.lane.b32.xlu0 %v439, 70
    %v3177 = vpop.permute.xlu0 %3176
    %3178 = vrot.lane.b32.xlu0 %v438, 70
    %v3179 = vpop.permute.xlu0 %3178
    %3180 = vrot.lane.b32.xlu0 %v437, 70
    %v3181 = vpop.permute.xlu0 %3180
    %3182 = vrot.lane.b32.xlu0 %v436, 70
    %v3183 = vpop.permute.xlu0 %3182
    %3184 = vrot.lane.b32.xlu0 %v435, 70
    %v3185 = vpop.permute.xlu0 %3184
    %3186 = vrot.lane.b32.xlu0 %v434, 70
    %v3187 = vpop.permute.xlu0 %3186
    %3188 = vrot.lane.b32.xlu0 %v433, 70
    %v3189 = vpop.permute.xlu0 %3188
    %3190 = vrot.lane.b32.xlu0 %v432, 70
    %v3191 = vpop.permute.xlu0 %3190
    %3192 = vrot.lane.b32.xlu0 %v431, 70
    %v3193 = vpop.permute.xlu0 %3192
    %3194 = vrot.lane.b32.xlu0 %v430, 70
    %v3195 = vpop.permute.xlu0 %3194
    %3196 = vrot.lane.b32.xlu0 %v429, 70
    %v3197 = vpop.permute.xlu0 %3196
    %3198 = vrot.lane.b32.xlu0 %v428, 70
    %v3199 = vpop.permute.xlu0 %3198
    %3200 = vrot.lane.b32.xlu0 %v427, 70
    %v3201 = vpop.permute.xlu0 %3200
    %3202 = vrot.lane.b32.xlu0 %v426, 70
    %v3203 = vpop.permute.xlu0 %3202
    %3204 = vrot.lane.b32.xlu0 %v425, 70
    %v3205 = vpop.permute.xlu0 %3204
    %3206 = vrot.lane.b32.xlu0 %v424, 70
    %v3207 = vpop.permute.xlu0 %3206
    %3208 = vrot.lane.b32.xlu0 %v423, 70
    %v3209 = vpop.permute.xlu0 %3208
    %3210 = vrot.lane.b32.xlu0 %v422, 70
    %v3211 = vpop.permute.xlu0 %3210
    %3212 = vrot.lane.b32.xlu0 %v421, 70
    %v3213 = vpop.permute.xlu0 %3212
    %3214 = vrot.lane.b32.xlu0 %v452, 70
    %v3215 = vpop.permute.xlu0 %3214
    %3216 = vrot.lane.b32.xlu0 %v451, 70
    %v3217 = vpop.permute.xlu0 %3216
    %3218 = vrot.lane.b32.xlu0 %v450, 70
    %v3219 = vpop.permute.xlu0 %3218
    %3252 = vrot.lane.b32.xlu0 %v189, 80
    %v3253 = vpop.permute.xlu0 %3252
    %3254 = vrot.lane.b32.xlu0 %v188, 80
    %v3255 = vpop.permute.xlu0 %3254
    %3256 = vrot.lane.b32.xlu0 %v187, 80
    %v3257 = vpop.permute.xlu0 %3256
    %3258 = vrot.lane.b32.xlu0 %v186, 80
    %v3259 = vpop.permute.xlu0 %3258
    %3260 = vrot.lane.b32.xlu0 %v185, 80
    %v3261 = vpop.permute.xlu0 %3260
    %3262 = vrot.lane.b32.xlu0 %v184, 80
    %v3263 = vpop.permute.xlu0 %3262
    %3264 = vrot.lane.b32.xlu0 %v183, 80
    %v3265 = vpop.permute.xlu0 %3264
    %3266 = vrot.lane.b32.xlu0 %v182, 80
    %v3267 = vpop.permute.xlu0 %3266
    %3268 = vrot.lane.b32.xlu0 %v181, 80
    %v3269 = vpop.permute.xlu0 %3268
    %3270 = vrot.lane.b32.xlu0 %v180, 80
    %v3271 = vpop.permute.xlu0 %3270
    %3272 = vrot.lane.b32.xlu0 %v179, 80
    %v3273 = vpop.permute.xlu0 %3272
    %3274 = vrot.lane.b32.xlu0 %v178, 80
    %v3275 = vpop.permute.xlu0 %3274
    %3276 = vrot.lane.b32.xlu0 %v177, 80
    %v3277 = vpop.permute.xlu0 %3276
    %3278 = vrot.lane.b32.xlu0 %v176, 80
    %v3279 = vpop.permute.xlu0 %3278
    %3280 = vrot.lane.b32.xlu0 %v175, 80
    %v3281 = vpop.permute.xlu0 %3280
    %3282 = vrot.lane.b32.xlu0 %v174, 80
    %v3283 = vpop.permute.xlu0 %3282
    %3284 = vrot.lane.b32.xlu0 %v173, 80
    %v3285 = vpop.permute.xlu0 %3284
    %3286 = vrot.lane.b32.xlu0 %v172, 80
    %v3287 = vpop.permute.xlu0 %3286
    %3288 = vrot.lane.b32.xlu0 %v171, 80
    %v3289 = vpop.permute.xlu0 %3288
    %3290 = vrot.lane.b32.xlu0 %v170, 80
    %v3291 = vpop.permute.xlu0 %3290
    %3292 = vrot.lane.b32.xlu0 %v169, 80
    %v3293 = vpop.permute.xlu0 %3292
    %3294 = vrot.lane.b32.xlu0 %v168, 80
    %v3295 = vpop.permute.xlu0 %3294
    %3296 = vrot.lane.b32.xlu0 %v167, 80
    %v3297 = vpop.permute.xlu0 %3296
    %3298 = vrot.lane.b32.xlu0 %v166, 80
    %v3299 = vpop.permute.xlu0 %3298
    %3300 = vrot.lane.b32.xlu0 %v165, 80
    %v3301 = vpop.permute.xlu0 %3300
    %3302 = vrot.lane.b32.xlu0 %v164, 80
    %v3303 = vpop.permute.xlu0 %3302
    %3304 = vrot.lane.b32.xlu0 %v163, 80
    %v3305 = vpop.permute.xlu0 %3304
    %3306 = vrot.lane.b32.xlu0 %v162, 80
    %v3307 = vpop.permute.xlu0 %3306
    %3308 = vrot.lane.b32.xlu0 %v161, 80
    %v3309 = vpop.permute.xlu0 %3308
    %3310 = vrot.lane.b32.xlu0 %v192, 80
    %v3311 = vpop.permute.xlu0 %3310
    %3312 = vrot.lane.b32.xlu0 %v191, 80
    %v3313 = vpop.permute.xlu0 %3312
    %3314 = vrot.lane.b32.xlu0 %v190, 80
    %v3315 = vpop.permute.xlu0 %3314
    %3348 = vrot.lane.b32.xlu0 %v254, 90
    %v3349 = vpop.permute.xlu0 %3348
    %3350 = vrot.lane.b32.xlu0 %v253, 90
    %v3351 = vpop.permute.xlu0 %3350
    %3352 = vrot.lane.b32.xlu0 %v252, 90
    %v3353 = vpop.permute.xlu0 %3352
    %3354 = vrot.lane.b32.xlu0 %v251, 90
    %v3355 = vpop.permute.xlu0 %3354
    %3356 = vrot.lane.b32.xlu0 %v250, 90
    %v3357 = vpop.permute.xlu0 %3356
    %3358 = vrot.lane.b32.xlu0 %v249, 90
    %v3359 = vpop.permute.xlu0 %3358
    %3360 = vrot.lane.b32.xlu0 %v248, 90
    %v3361 = vpop.permute.xlu0 %3360
    %3362 = vrot.lane.b32.xlu0 %v247, 90
    %v3363 = vpop.permute.xlu0 %3362
    %3364 = vrot.lane.b32.xlu0 %v246, 90
    %v3365 = vpop.permute.xlu0 %3364
    %3366 = vrot.lane.b32.xlu0 %v245, 90
    %v3367 = vpop.permute.xlu0 %3366
    %3368 = vrot.lane.b32.xlu0 %v244, 90
    %v3369 = vpop.permute.xlu0 %3368
    %3370 = vrot.lane.b32.xlu0 %v243, 90
    %v3371 = vpop.permute.xlu0 %3370
    %3372 = vrot.lane.b32.xlu0 %v242, 90
    %v3373 = vpop.permute.xlu0 %3372
    %3374 = vrot.lane.b32.xlu0 %v241, 90
    %v3375 = vpop.permute.xlu0 %3374
    %3376 = vrot.lane.b32.xlu0 %v240, 90
    %v3377 = vpop.permute.xlu0 %3376
    %3378 = vrot.lane.b32.xlu0 %v239, 90
    %v3379 = vpop.permute.xlu0 %3378
    %3380 = vrot.lane.b32.xlu0 %v238, 90
    %v3381 = vpop.permute.xlu0 %3380
    %3382 = vrot.lane.b32.xlu0 %v237, 90
    %v3383 = vpop.permute.xlu0 %3382
    %3384 = vrot.lane.b32.xlu0 %v236, 90
    %v3385 = vpop.permute.xlu0 %3384
    %3386 = vrot.lane.b32.xlu0 %v235, 90
    %v3387 = vpop.permute.xlu0 %3386
    %3388 = vrot.lane.b32.xlu0 %v234, 90
    %v3389 = vpop.permute.xlu0 %3388
    %3390 = vrot.lane.b32.xlu0 %v233, 90
    %v3391 = vpop.permute.xlu0 %3390
    %3392 = vrot.lane.b32.xlu0 %v232, 90
    %v3393 = vpop.permute.xlu0 %3392
    %3394 = vrot.lane.b32.xlu0 %v231, 90
    %v3395 = vpop.permute.xlu0 %3394
    %3396 = vrot.lane.b32.xlu0 %v230, 90
    %v3397 = vpop.permute.xlu0 %3396
    %3398 = vrot.lane.b32.xlu0 %v229, 90
    %v3399 = vpop.permute.xlu0 %3398
    %3400 = vrot.lane.b32.xlu0 %v228, 90
    %v3401 = vpop.permute.xlu0 %3400
    %3402 = vrot.lane.b32.xlu0 %v227, 90
    %v3403 = vpop.permute.xlu0 %3402
    %3404 = vrot.lane.b32.xlu0 %v226, 90
    %v3405 = vpop.permute.xlu0 %3404
    %3406 = vrot.lane.b32.xlu0 %v257, 90
    %v3407 = vpop.permute.xlu0 %3406
    %3408 = vrot.lane.b32.xlu0 %v256, 90
    %v3409 = vpop.permute.xlu0 %3408
    %3410 = vrot.lane.b32.xlu0 %v255, 90
    %v3411 = vpop.permute.xlu0 %3410
    %3444 = vrot.lane.b32.xlu0 %v319, 100
    %v3445 = vpop.permute.xlu0 %3444
    %3446 = vrot.lane.b32.xlu0 %v318, 100
    %v3447 = vpop.permute.xlu0 %3446
    %3448 = vrot.lane.b32.xlu0 %v317, 100
    %v3449 = vpop.permute.xlu0 %3448
    %3450 = vrot.lane.b32.xlu0 %v316, 100
    %v3451 = vpop.permute.xlu0 %3450
    %3452 = vrot.lane.b32.xlu0 %v315, 100
    %v3453 = vpop.permute.xlu0 %3452
    %3454 = vrot.lane.b32.xlu0 %v314, 100
    %v3455 = vpop.permute.xlu0 %3454
    %3456 = vrot.lane.b32.xlu0 %v313, 100
    %v3457 = vpop.permute.xlu0 %3456
    %3458 = vrot.lane.b32.xlu0 %v312, 100
    %v3459 = vpop.permute.xlu0 %3458
    %3460 = vrot.lane.b32.xlu0 %v311, 100
    %v3461 = vpop.permute.xlu0 %3460
    %3462 = vrot.lane.b32.xlu0 %v310, 100
    %v3463 = vpop.permute.xlu0 %3462
    %3464 = vrot.lane.b32.xlu0 %v309, 100
    %v3465 = vpop.permute.xlu0 %3464
    %3466 = vrot.lane.b32.xlu0 %v308, 100
    %v3467 = vpop.permute.xlu0 %3466
    %3468 = vrot.lane.b32.xlu0 %v307, 100
    %v3469 = vpop.permute.xlu0 %3468
    %3470 = vrot.lane.b32.xlu0 %v306, 100
    %v3471 = vpop.permute.xlu0 %3470
    %3472 = vrot.lane.b32.xlu0 %v305, 100
    %v3473 = vpop.permute.xlu0 %3472
    %3474 = vrot.lane.b32.xlu0 %v304, 100
    %v3475 = vpop.permute.xlu0 %3474
    %3476 = vrot.lane.b32.xlu0 %v303, 100
    %v3477 = vpop.permute.xlu0 %3476
    %3478 = vrot.lane.b32.xlu0 %v302, 100
    %v3479 = vpop.permute.xlu0 %3478
    %3480 = vrot.lane.b32.xlu0 %v301, 100
    %v3481 = vpop.permute.xlu0 %3480
    %3482 = vrot.lane.b32.xlu0 %v300, 100
    %v3483 = vpop.permute.xlu0 %3482
    %3484 = vrot.lane.b32.xlu0 %v299, 100
    %v3485 = vpop.permute.xlu0 %3484
    %3486 = vrot.lane.b32.xlu0 %v298, 100
    %v3487 = vpop.permute.xlu0 %3486
    %3488 = vrot.lane.b32.xlu0 %v297, 100
    %v3489 = vpop.permute.xlu0 %3488
    %3490 = vrot.lane.b32.xlu0 %v296, 100
    %v3491 = vpop.permute.xlu0 %3490
    %3492 = vrot.lane.b32.xlu0 %v295, 100
    %v3493 = vpop.permute.xlu0 %3492
    %3494 = vrot.lane.b32.xlu0 %v294, 100
    %v3495 = vpop.permute.xlu0 %3494
    %3496 = vrot.lane.b32.xlu0 %v293, 100
    %v3497 = vpop.permute.xlu0 %3496
    %3498 = vrot.lane.b32.xlu0 %v292, 100
    %v3499 = vpop.permute.xlu0 %3498
    %3500 = vrot.lane.b32.xlu0 %v291, 100
    %v3501 = vpop.permute.xlu0 %3500
    %3502 = vrot.lane.b32.xlu0 %v322, 100
    %v3503 = vpop.permute.xlu0 %3502
    %3504 = vrot.lane.b32.xlu0 %v321, 100
    %v3505 = vpop.permute.xlu0 %3504
    %3506 = vrot.lane.b32.xlu0 %v320, 100
    %v3507 = vpop.permute.xlu0 %3506
    %v3540 = vsel %vm2085, %v256, %v2581
    %v3541 = vsel %vm2085, %v255, %v2583
    %v3542 = vsel %vm2085, %v254, %v2585
    %v3543 = vsel %vm2085, %v253, %v2587
    %v3544 = vsel %vm2085, %v252, %v2589
    %v3545 = vsel %vm2085, %v251, %v2591
    %v3546 = vsel %vm2085, %v250, %v2593
    %v3547 = vsel %vm2085, %v249, %v2595
    %v3548 = vsel %vm2085, %v248, %v2597
    %v3549 = vsel %vm2085, %v247, %v2599
    %v3550 = vsel %vm2085, %v246, %v2601
    %v3551 = vsel %vm2085, %v245, %v2603
    %v3552 = vsel %vm2085, %v244, %v2605
    %v3553 = vsel %vm2085, %v243, %v2607
    %v3554 = vsel %vm2085, %v242, %v2609
    %v3555 = vsel %vm2085, %v241, %v2611
    %v3556 = vsel %vm2085, %v240, %v2613
    %v3557 = vsel %vm2085, %v239, %v2615
    %v3558 = vsel %vm2085, %v238, %v2617
    %v3559 = vsel %vm2085, %v237, %v2619
    %v3560 = vsel %vm2085, %v236, %v2621
    %v3561 = vsel %vm2085, %v235, %v2623
    %v3562 = vsel %vm2085, %v234, %v2625
    %v3563 = vsel %vm2085, %v233, %v2627
    %v3564 = vsel %vm2085, %v232, %v2629
    %v3565 = vsel %vm2085, %v231, %v2631
    %v3566 = vsel %vm2085, %v230, %v2633
    %v3567 = vsel %vm2085, %v229, %v2635
    %v3568 = vsel %vm2085, %v228, %v2637
    %v3569 = vsel %vm2085, %v227, %v2639
    %v3570 = vsel %vm2085, %v226, %v2641
    %v3571 = vsel %vm2085, %v257, %v2643
    %v3572 = vsel %vm2118, %v3540, %v2677
    %v3573 = vsel %vm2118, %v3541, %v2679
    %v3574 = vsel %vm2118, %v3542, %v2681
    %v3575 = vsel %vm2118, %v3543, %v2683
    %v3576 = vsel %vm2118, %v3544, %v2685
    %v3577 = vsel %vm2118, %v3545, %v2687
    %v3578 = vsel %vm2118, %v3546, %v2689
    %v3579 = vsel %vm2118, %v3547, %v2691
    %v3580 = vsel %vm2118, %v3548, %v2693
    %v3581 = vsel %vm2118, %v3549, %v2695
    %v3582 = vsel %vm2118, %v3550, %v2697
    %v3583 = vsel %vm2118, %v3551, %v2699
    %v3584 = vsel %vm2118, %v3552, %v2701
    %v3585 = vsel %vm2118, %v3553, %v2703
    %v3586 = vsel %vm2118, %v3554, %v2705
    %v3587 = vsel %vm2118, %v3555, %v2707
    %v3588 = vsel %vm2118, %v3556, %v2709
    %v3589 = vsel %vm2118, %v3557, %v2711
    %v3590 = vsel %vm2118, %v3558, %v2713
    %v3591 = vsel %vm2118, %v3559, %v2715
    %v3592 = vsel %vm2118, %v3560, %v2717
    %v3593 = vsel %vm2118, %v3561, %v2719
    %v3594 = vsel %vm2118, %v3562, %v2721
    %v3595 = vsel %vm2118, %v3563, %v2723
    %v3596 = vsel %vm2118, %v3564, %v2725
    %v3597 = vsel %vm2118, %v3565, %v2727
    %v3598 = vsel %vm2118, %v3566, %v2729
    %v3599 = vsel %vm2118, %v3567, %v2731
    %v3600 = vsel %vm2118, %v3568, %v2733
    %v3601 = vsel %vm2118, %v3569, %v2735
    %v3602 = vsel %vm2118, %v3570, %v2737
    %v3603 = vsel %vm2118, %v3571, %v2739
    %v3604 = vsel %vm2151, %v3572, %v2773
    %v3605 = vsel %vm2151, %v3573, %v2775
    %v3606 = vsel %vm2151, %v3574, %v2777
    %v3607 = vsel %vm2151, %v3575, %v2779
    %v3608 = vsel %vm2151, %v3576, %v2781
    %v3609 = vsel %vm2151, %v3577, %v2783
    %v3610 = vsel %vm2151, %v3578, %v2785
    %v3611 = vsel %vm2151, %v3579, %v2787
    %v3612 = vsel %vm2151, %v3580, %v2789
    %v3613 = vsel %vm2151, %v3581, %v2791
    %v3614 = vsel %vm2151, %v3582, %v2793
    %v3615 = vsel %vm2151, %v3583, %v2795
    %v3616 = vsel %vm2151, %v3584, %v2797
    %v3617 = vsel %vm2151, %v3585, %v2799
    %v3618 = vsel %vm2151, %v3586, %v2801
    %v3619 = vsel %vm2151, %v3587, %v2803
    %v3620 = vsel %vm2151, %v3588, %v2805
    %v3621 = vsel %vm2151, %v3589, %v2807
    %v3622 = vsel %vm2151, %v3590, %v2809
    %v3623 = vsel %vm2151, %v3591, %v2811
    %v3624 = vsel %vm2151, %v3592, %v2813
    %v3625 = vsel %vm2151, %v3593, %v2815
    %v3626 = vsel %vm2151, %v3594, %v2817
    %v3627 = vsel %vm2151, %v3595, %v2819
    %v3628 = vsel %vm2151, %v3596, %v2821
    %v3629 = vsel %vm2151, %v3597, %v2823
    %v3630 = vsel %vm2151, %v3598, %v2825
    %v3631 = vsel %vm2151, %v3599, %v2827
    %v3632 = vsel %vm2151, %v3600, %v2829
    %v3633 = vsel %vm2151, %v3601, %v2831
    %v3634 = vsel %vm2151, %v3602, %v2833
    %v3635 = vsel %vm2151, %v3603, %v2835
    %v3636 = vsel %vm2184, %v3604, %v2869
    %v3637 = vsel %vm2184, %v3605, %v2871
    %v3638 = vsel %vm2184, %v3606, %v2873
    %v3639 = vsel %vm2184, %v3607, %v2875
    %v3640 = vsel %vm2184, %v3608, %v2877
    %v3641 = vsel %vm2184, %v3609, %v2879
    %v3642 = vsel %vm2184, %v3610, %v2881
    %v3643 = vsel %vm2184, %v3611, %v2883
    %v3644 = vsel %vm2184, %v3612, %v2885
    %v3645 = vsel %vm2184, %v3613, %v2887
    %v3646 = vsel %vm2184, %v3614, %v2889
    %v3647 = vsel %vm2184, %v3615, %v2891
    %v3648 = vsel %vm2184, %v3616, %v2893
    %v3649 = vsel %vm2184, %v3617, %v2895
    %v3650 = vsel %vm2184, %v3618, %v2897
    %v3651 = vsel %vm2184, %v3619, %v2899
    %v3652 = vsel %vm2184, %v3620, %v2901
    %v3653 = vsel %vm2184, %v3621, %v2903
    %v3654 = vsel %vm2184, %v3622, %v2905
    %v3655 = vsel %vm2184, %v3623, %v2907
    %v3656 = vsel %vm2184, %v3624, %v2909
    %v3657 = vsel %vm2184, %v3625, %v2911
    %v3658 = vsel %vm2184, %v3626, %v2913
    %v3659 = vsel %vm2184, %v3627, %v2915
    %v3660 = vsel %vm2184, %v3628, %v2917
    %v3661 = vsel %vm2184, %v3629, %v2919
    %v3662 = vsel %vm2184, %v3630, %v2921
    %v3663 = vsel %vm2184, %v3631, %v2923
    %v3664 = vsel %vm2184, %v3632, %v2925
    %v3665 = vsel %vm2184, %v3633, %v2927
    %v3666 = vsel %vm2184, %v3634, %v2929
    %v3667 = vsel %vm2184, %v3635, %v2931
    %v3668 = vsel %vm2217, %v3636, %v2965
    %v3669 = vsel %vm2217, %v3637, %v2967
    %v3670 = vsel %vm2217, %v3638, %v2969
    %v3671 = vsel %vm2217, %v3639, %v2971
    %v3672 = vsel %vm2217, %v3640, %v2973
    %v3673 = vsel %vm2217, %v3641, %v2975
    %v3674 = vsel %vm2217, %v3642, %v2977
    %v3675 = vsel %vm2217, %v3643, %v2979
    %v3676 = vsel %vm2217, %v3644, %v2981
    %v3677 = vsel %vm2217, %v3645, %v2983
    %v3678 = vsel %vm2217, %v3646, %v2985
    %v3679 = vsel %vm2217, %v3647, %v2987
    %v3680 = vsel %vm2217, %v3648, %v2989
    %v3681 = vsel %vm2217, %v3649, %v2991
    %v3682 = vsel %vm2217, %v3650, %v2993
    %v3683 = vsel %vm2217, %v3651, %v2995
    %v3684 = vsel %vm2217, %v3652, %v2997
    %v3685 = vsel %vm2217, %v3653, %v2999
    %v3686 = vsel %vm2217, %v3654, %v3001
    %v3687 = vsel %vm2217, %v3655, %v3003
    %v3688 = vsel %vm2217, %v3656, %v3005
    %v3689 = vsel %vm2217, %v3657, %v3007
    %v3690 = vsel %vm2217, %v3658, %v3009
    %v3691 = vsel %vm2217, %v3659, %v3011
    %v3692 = vsel %vm2217, %v3660, %v3013
    %v3693 = vsel %vm2217, %v3661, %v3015
    %v3694 = vsel %vm2217, %v3662, %v3017
    %v3695 = vsel %vm2217, %v3663, %v3019
    %v3696 = vsel %vm2217, %v3664, %v3021
    %v3697 = vsel %vm2217, %v3665, %v3023
    %v3698 = vsel %vm2217, %v3666, %v3025
    %v3699 = vsel %vm2217, %v3667, %v3027
    %v3700 = vsel %vm2250, %v3668, %v3061
    %v3701 = vsel %vm2250, %v3669, %v3063
    %v3702 = vsel %vm2250, %v3670, %v3065
    %v3703 = vsel %vm2250, %v3671, %v3067
    %v3704 = vsel %vm2250, %v3672, %v3069
    %v3705 = vsel %vm2250, %v3673, %v3071
    %v3706 = vsel %vm2250, %v3674, %v3073
    %v3707 = vsel %vm2250, %v3675, %v3075
    %v3708 = vsel %vm2250, %v3676, %v3077
    %v3709 = vsel %vm2250, %v3677, %v3079
    %v3710 = vsel %vm2250, %v3678, %v3081
    %v3711 = vsel %vm2250, %v3679, %v3083
    %v3712 = vsel %vm2250, %v3680, %v3085
    %v3713 = vsel %vm2250, %v3681, %v3087
    %v3714 = vsel %vm2250, %v3682, %v3089
    %v3715 = vsel %vm2250, %v3683, %v3091
    %v3716 = vsel %vm2250, %v3684, %v3093
    %v3717 = vsel %vm2250, %v3685, %v3095
    %v3718 = vsel %vm2250, %v3686, %v3097
    %v3719 = vsel %vm2250, %v3687, %v3099
    %v3720 = vsel %vm2250, %v3688, %v3101
    %v3721 = vsel %vm2250, %v3689, %v3103
    %v3722 = vsel %vm2250, %v3690, %v3105
    %v3723 = vsel %vm2250, %v3691, %v3107
    %v3724 = vsel %vm2250, %v3692, %v3109
    %v3725 = vsel %vm2250, %v3693, %v3111
    %v3726 = vsel %vm2250, %v3694, %v3113
    %v3727 = vsel %vm2250, %v3695, %v3115
    %v3728 = vsel %vm2250, %v3696, %v3117
    %v3729 = vsel %vm2250, %v3697, %v3119
    %v3730 = vsel %vm2250, %v3698, %v3121
    %v3731 = vsel %vm2250, %v3699, %v3123
    %v3732 = vsel %vm2283, %v3700, %v3157
    %v3733 = vsel %vm2283, %v3701, %v3159
    %v3734 = vsel %vm2283, %v3702, %v3161
    %v3735 = vsel %vm2283, %v3703, %v3163
    %v3736 = vsel %vm2283, %v3704, %v3165
    %v3737 = vsel %vm2283, %v3705, %v3167
    %v3738 = vsel %vm2283, %v3706, %v3169
    %v3739 = vsel %vm2283, %v3707, %v3171
    %v3740 = vsel %vm2283, %v3708, %v3173
    %v3741 = vsel %vm2283, %v3709, %v3175
    %v3742 = vsel %vm2283, %v3710, %v3177
    %v3743 = vsel %vm2283, %v3711, %v3179
    %v3744 = vsel %vm2283, %v3712, %v3181
    %v3745 = vsel %vm2283, %v3713, %v3183
    %v3746 = vsel %vm2283, %v3714, %v3185
    %v3747 = vsel %vm2283, %v3715, %v3187
    %v3748 = vsel %vm2283, %v3716, %v3189
    %v3749 = vsel %vm2283, %v3717, %v3191
    %v3750 = vsel %vm2283, %v3718, %v3193
    %v3751 = vsel %vm2283, %v3719, %v3195
    %v3752 = vsel %vm2283, %v3720, %v3197
    %v3753 = vsel %vm2283, %v3721, %v3199
    %v3754 = vsel %vm2283, %v3722, %v3201
    %v3755 = vsel %vm2283, %v3723, %v3203
    %v3756 = vsel %vm2283, %v3724, %v3205
    %v3757 = vsel %vm2283, %v3725, %v3207
    %v3758 = vsel %vm2283, %v3726, %v3209
    %v3759 = vsel %vm2283, %v3727, %v3211
    %v3760 = vsel %vm2283, %v3728, %v3213
    %v3761 = vsel %vm2283, %v3729, %v3215
    %v3762 = vsel %vm2283, %v3730, %v3217
    %v3763 = vsel %vm2283, %v3731, %v3219
    %v3764 = vsel %vm2316, %v3732, %v3253
    %v3765 = vsel %vm2316, %v3733, %v3255
    %v3766 = vsel %vm2316, %v3734, %v3257
    %v3767 = vsel %vm2316, %v3735, %v3259
    %v3768 = vsel %vm2316, %v3736, %v3261
    %v3769 = vsel %vm2316, %v3737, %v3263
    %v3770 = vsel %vm2316, %v3738, %v3265
    %v3771 = vsel %vm2316, %v3739, %v3267
    %v3772 = vsel %vm2316, %v3740, %v3269
    %v3773 = vsel %vm2316, %v3741, %v3271
    %v3774 = vsel %vm2316, %v3742, %v3273
    %v3775 = vsel %vm2316, %v3743, %v3275
    %v3776 = vsel %vm2316, %v3744, %v3277
    %v3777 = vsel %vm2316, %v3745, %v3279
    %v3778 = vsel %vm2316, %v3746, %v3281
    %v3779 = vsel %vm2316, %v3747, %v3283
    %v3780 = vsel %vm2316, %v3748, %v3285
    %v3781 = vsel %vm2316, %v3749, %v3287
    %v3782 = vsel %vm2316, %v3750, %v3289
    %v3783 = vsel %vm2316, %v3751, %v3291
    %v3784 = vsel %vm2316, %v3752, %v3293
    %v3785 = vsel %vm2316, %v3753, %v3295
    %v3786 = vsel %vm2316, %v3754, %v3297
    %v3787 = vsel %vm2316, %v3755, %v3299
    %v3788 = vsel %vm2316, %v3756, %v3301
    %v3789 = vsel %vm2316, %v3757, %v3303
    %v3790 = vsel %vm2316, %v3758, %v3305
    %v3791 = vsel %vm2316, %v3759, %v3307
    %v3792 = vsel %vm2316, %v3760, %v3309
    %v3793 = vsel %vm2316, %v3761, %v3311
    %v3794 = vsel %vm2316, %v3762, %v3313
    %v3795 = vsel %vm2316, %v3763, %v3315
    %v3796 = vsel %vm2349, %v3764, %v3349
    %v3797 = vsel %vm2349, %v3765, %v3351
    %v3798 = vsel %vm2349, %v3766, %v3353
    %v3799 = vsel %vm2349, %v3767, %v3355
    %v3800 = vsel %vm2349, %v3768, %v3357
    %v3801 = vsel %vm2349, %v3769, %v3359
    %v3802 = vsel %vm2349, %v3770, %v3361
    %v3803 = vsel %vm2349, %v3771, %v3363
    %v3804 = vsel %vm2349, %v3772, %v3365
    %v3805 = vsel %vm2349, %v3773, %v3367
    %v3806 = vsel %vm2349, %v3774, %v3369
    %v3807 = vsel %vm2349, %v3775, %v3371
    %v3808 = vsel %vm2349, %v3776, %v3373
    %v3809 = vsel %vm2349, %v3777, %v3375
    %v3810 = vsel %vm2349, %v3778, %v3377
    %v3811 = vsel %vm2349, %v3779, %v3379
    %v3812 = vsel %vm2349, %v3780, %v3381
    %v3813 = vsel %vm2349, %v3781, %v3383
    %v3814 = vsel %vm2349, %v3782, %v3385
    %v3815 = vsel %vm2349, %v3783, %v3387
    %v3816 = vsel %vm2349, %v3784, %v3389
    %v3817 = vsel %vm2349, %v3785, %v3391
    %v3818 = vsel %vm2349, %v3786, %v3393
    %v3819 = vsel %vm2349, %v3787, %v3395
    %v3820 = vsel %vm2349, %v3788, %v3397
    %v3821 = vsel %vm2349, %v3789, %v3399
    %v3822 = vsel %vm2349, %v3790, %v3401
    %v3823 = vsel %vm2349, %v3791, %v3403
    %v3824 = vsel %vm2349, %v3792, %v3405
    %v3825 = vsel %vm2349, %v3793, %v3407
    %v3826 = vsel %vm2349, %v3794, %v3409
    %v3827 = vsel %vm2349, %v3795, %v3411
    %v3828 = vsel %vm2382, %v3796, %v3445
    %v3829 = vsel %vm2382, %v3797, %v3447
    %v3830 = vsel %vm2382, %v3798, %v3449
    %v3831 = vsel %vm2382, %v3799, %v3451
    %v3832 = vsel %vm2382, %v3800, %v3453
    %v3833 = vsel %vm2382, %v3801, %v3455
    %v3834 = vsel %vm2382, %v3802, %v3457
    %v3835 = vsel %vm2382, %v3803, %v3459
    %v3836 = vsel %vm2382, %v3804, %v3461
    %v3837 = vsel %vm2382, %v3805, %v3463
    %v3838 = vsel %vm2382, %v3806, %v3465
    %v3839 = vsel %vm2382, %v3807, %v3467
    %v3840 = vsel %vm2382, %v3808, %v3469
    %v3841 = vsel %vm2382, %v3809, %v3471
    %v3842 = vsel %vm2382, %v3810, %v3473
    %v3843 = vsel %vm2382, %v3811, %v3475
    %v3844 = vsel %vm2382, %v3812, %v3477
    %v3845 = vsel %vm2382, %v3813, %v3479
    %v3846 = vsel %vm2382, %v3814, %v3481
    %v3847 = vsel %vm2382, %v3815, %v3483
    %v3848 = vsel %vm2382, %v3816, %v3485
    %v3849 = vsel %vm2382, %v3817, %v3487
    %v3850 = vsel %vm2382, %v3818, %v3489
    %v3851 = vsel %vm2382, %v3819, %v3491
    %v3852 = vsel %vm2382, %v3820, %v3493
    %v3853 = vsel %vm2382, %v3821, %v3495
    %v3854 = vsel %vm2382, %v3822, %v3497
    %v3855 = vsel %vm2382, %v3823, %v3499
    %v3856 = vsel %vm2382, %v3824, %v3501
    %v3857 = vsel %vm2382, %v3825, %v3503
    %v3858 = vsel %vm2382, %v3826, %v3505
    %v3859 = vsel %vm2382, %v3827, %v3507
    %3892 = vrot.lane.b32.xlu0 %v3828, 32
    %v3893 = vpop.permute.xlu0 %3892
    %3894 = vrot.lane.b32.xlu0 %v3829, 32
    %v3895 = vpop.permute.xlu0 %3894
    %3896 = vrot.lane.b32.xlu0 %v3830, 32
    %v3897 = vpop.permute.xlu0 %3896
    %3898 = vrot.lane.b32.xlu0 %v3831, 32
    %v3899 = vpop.permute.xlu0 %3898
    %3900 = vrot.lane.b32.xlu0 %v3832, 32
    %v3901 = vpop.permute.xlu0 %3900
    %3902 = vrot.lane.b32.xlu0 %v3833, 32
    %v3903 = vpop.permute.xlu0 %3902
    %3904 = vrot.lane.b32.xlu0 %v3834, 32
    %v3905 = vpop.permute.xlu0 %3904
    %3906 = vrot.lane.b32.xlu0 %v3835, 32
    %v3907 = vpop.permute.xlu0 %3906
    %3908 = vrot.lane.b32.xlu0 %v3836, 32
    %v3909 = vpop.permute.xlu0 %3908
    %3910 = vrot.lane.b32.xlu0 %v3837, 32
    %v3911 = vpop.permute.xlu0 %3910
    %3912 = vrot.lane.b32.xlu0 %v3838, 32
    %v3913 = vpop.permute.xlu0 %3912
    %3914 = vrot.lane.b32.xlu0 %v3839, 32
    %v3915 = vpop.permute.xlu0 %3914
    %3916 = vrot.lane.b32.xlu0 %v3840, 32
    %v3917 = vpop.permute.xlu0 %3916
    %3918 = vrot.lane.b32.xlu0 %v3841, 32
    %v3919 = vpop.permute.xlu0 %3918
    %3920 = vrot.lane.b32.xlu0 %v3842, 32
    %v3921 = vpop.permute.xlu0 %3920
    %3922 = vrot.lane.b32.xlu0 %v3843, 32
    %v3923 = vpop.permute.xlu0 %3922
    %3924 = vrot.lane.b32.xlu0 %v3844, 32
    %v3925 = vpop.permute.xlu0 %3924
    %3926 = vrot.lane.b32.xlu0 %v3845, 32
    %v3927 = vpop.permute.xlu0 %3926
    %3928 = vrot.lane.b32.xlu0 %v3846, 32
    %v3929 = vpop.permute.xlu0 %3928
    %3930 = vrot.lane.b32.xlu0 %v3847, 32
    %v3931 = vpop.permute.xlu0 %3930
    %3932 = vrot.lane.b32.xlu0 %v3848, 32
    %v3933 = vpop.permute.xlu0 %3932
    %3934 = vrot.lane.b32.xlu0 %v3849, 32
    %v3935 = vpop.permute.xlu0 %3934
    %3936 = vrot.lane.b32.xlu0 %v3850, 32
    %v3937 = vpop.permute.xlu0 %3936
    %3938 = vrot.lane.b32.xlu0 %v3851, 32
    %v3939 = vpop.permute.xlu0 %3938
    %3940 = vrot.lane.b32.xlu0 %v3852, 32
    %v3941 = vpop.permute.xlu0 %3940
    %3942 = vrot.lane.b32.xlu0 %v3853, 32
    %v3943 = vpop.permute.xlu0 %3942
    %3944 = vrot.lane.b32.xlu0 %v3854, 32
    %v3945 = vpop.permute.xlu0 %3944
    %3946 = vrot.lane.b32.xlu0 %v3855, 32
    %v3947 = vpop.permute.xlu0 %3946
    %3948 = vrot.lane.b32.xlu0 %v3856, 32
    %v3949 = vpop.permute.xlu0 %3948
    %3950 = vrot.lane.b32.xlu0 %v3857, 32
    %v3951 = vpop.permute.xlu0 %3950
    %3952 = vrot.lane.b32.xlu0 %v3858, 32
    %v3953 = vpop.permute.xlu0 %3952
    %3954 = vrot.lane.b32.xlu0 %v3859, 32
    %v3955 = vpop.permute.xlu0 %3954
    %vm3988 = vcmask 261120
    %v3989 = vsel %vm3988, %v2548, %v3893
    %v3990 = vsel %vm3988, %v2549, %v3895
    %v3991 = vsel %vm3988, %v2550, %v3897
    %v3992 = vsel %vm3988, %v2551, %v3899
    %v3993 = vsel %vm3988, %v2552, %v3901
    %v3994 = vsel %vm3988, %v2553, %v3903
    %v3995 = vsel %vm3988, %v2554, %v3905
    %v3996 = vsel %vm3988, %v2555, %v3907
    %v3997 = vsel %vm3988, %v2556, %v3909
    %v3998 = vsel %vm3988, %v2557, %v3911
    %v3999 = vsel %vm3988, %v2558, %v3913
    %v4000 = vsel %vm3988, %v2559, %v3915
    %v4001 = vsel %vm3988, %v2560, %v3917
    %v4002 = vsel %vm3988, %v2561, %v3919
    %v4003 = vsel %vm3988, %v2562, %v3921
    %v4004 = vsel %vm3988, %v2563, %v3923
    %v4005 = vsel %vm3988, %v2564, %v3925
    %v4006 = vsel %vm3988, %v2565, %v3927
    %v4007 = vsel %vm3988, %v2566, %v3929
    %v4008 = vsel %vm3988, %v2567, %v3931
    %v4009 = vsel %vm3988, %v2568, %v3933
    %v4010 = vsel %vm3988, %v2569, %v3935
    %v4011 = vsel %vm3988, %v2570, %v3937
    %v4012 = vsel %vm3988, %v2571, %v3939
    %v4013 = vsel %vm3988, %v2572, %v3941
    %v4014 = vsel %vm3988, %v2573, %v3943
    %v4015 = vsel %vm3988, %v2574, %v3945
    %v4016 = vsel %vm3988, %v2575, %v3947
    %v4017 = vsel %vm3988, %v2576, %v3949
    %v4018 = vsel %vm3988, %v2577, %v3951
    %v4019 = vsel %vm3988, %v2578, %v3953
    %v4020 = vsel %vm3988, %v2579, %v3955
    %v4021 = vld [vmem:[#allocation2] sm:$0xff]
    %v4022 = vld [vmem:[#allocation2 + $0x8] sm:$0xff]
    %v4023 = vld [vmem:[#allocation2 + $0x10] sm:$0xff]
    %v4024 = vld [vmem:[#allocation2 + $0x18] sm:$0xff]
    %v4025 = vld [vmem:[#allocation2 + $0x20] sm:$0xff]
    %v4026 = vld [vmem:[#allocation2 + $0x28] sm:$0xff]
    %v4027 = vld [vmem:[#allocation2 + $0x30] sm:$0xff]
    %v4028 = vld [vmem:[#allocation2 + $0x38] sm:$0xff]
    %v4029 = vld [vmem:[#allocation2 + $0x40] sm:$0xff]
    %v4030 = vld [vmem:[#allocation2 + $0x48] sm:$0xff]
    %v4031 = vld [vmem:[#allocation2 + $0x50] sm:$0xff]
    %v4032 = vld [vmem:[#allocation2 + $0x58] sm:$0xff]
    %v4033 = vld [vmem:[#allocation2 + $0x60] sm:$0xff]
    %v4034 = vld [vmem:[#allocation2 + $0x68] sm:$0xff]
    %v4035 = vld [vmem:[#allocation2 + $0x70] sm:$0xff]
    %v4036 = vld [vmem:[#allocation2 + $0x78] sm:$0xff]
    %v4037 = vld [vmem:[#allocation2 + $0x80] sm:$0xff]
    %v4038 = vld [vmem:[#allocation2 + $0x88] sm:$0xff]
    %v4039 = vld [vmem:[#allocation2 + $0x90] sm:$0xff]
    %v4040 = vld [vmem:[#allocation2 + $0x98] sm:$0xff]
    %v4041 = vld [vmem:[#allocation2 + $0xa0] sm:$0xff]
    %v4042 = vld [vmem:[#allocation2 + $0xa8] sm:$0xff]
    %v4043 = vld [vmem:[#allocation2 + $0xb0] sm:$0xff]
    %v4044 = vld [vmem:[#allocation2 + $0xb8] sm:$0xff]
    %v4045 = vld [vmem:[#allocation2 + $0xc0] sm:$0xff]
    %v4046 = vld [vmem:[#allocation2 + $0xc8] sm:$0xff]
    %v4047 = vld [vmem:[#allocation2 + $0xd0] sm:$0xff]
    %v4048 = vld [vmem:[#allocation2 + $0xd8] sm:$0xff]
    %v4049 = vld [vmem:[#allocation2 + $0xe0] sm:$0xff]
    %v4050 = vld [vmem:[#allocation2 + $0xe8] sm:$0xff]
    %v4051 = vld [vmem:[#allocation2 + $0xf0] sm:$0xff]
    %v4052 = vld [vmem:[#allocation2 + $0xf8] sm:$0xff]
    %v4053 = vld [vmem:[#allocation2 + $0x100] sm:$0xff]
    %v4054 = vld [vmem:[#allocation2 + $0x108] sm:$0xff]
    %v4055 = vld [vmem:[#allocation2 + $0x110] sm:$0xff]
    %v4056 = vld [vmem:[#allocation2 + $0x118] sm:$0xff]
    %v4057 = vld [vmem:[#allocation2 + $0x120] sm:$0xff]
    %v4058 = vld [vmem:[#allocation2 + $0x128] sm:$0xff]
    %v4059 = vld [vmem:[#allocation2 + $0x130] sm:$0xff]
    %v4060 = vld [vmem:[#allocation2 + $0x138] sm:$0xff]
    %v4061 = vld [vmem:[#allocation2 + $0x140] sm:$0xff]
    %v4062 = vld [vmem:[#allocation2 + $0x148] sm:$0xff]
    %v4063 = vld [vmem:[#allocation2 + $0x150] sm:$0xff]
    %v4064 = vld [vmem:[#allocation2 + $0x158] sm:$0xff]
    %v4065 = vld [vmem:[#allocation2 + $0x160] sm:$0xff]
    %v4066 = vld [vmem:[#allocation2 + $0x168] sm:$0xff]
    %v4067 = vld [vmem:[#allocation2 + $0x170] sm:$0xff]
    %v4068 = vld [vmem:[#allocation2 + $0x178] sm:$0xff]
    %v4069 = vld [vmem:[#allocation2 + $0x180] sm:$0xff]
    %v4070 = vld [vmem:[#allocation2 + $0x188] sm:$0xff]
    %v4071 = vld [vmem:[#allocation2 + $0x190] sm:$0xff]
    %v4072 = vld [vmem:[#allocation2 + $0x198] sm:$0xff]
    %v4073 = vld [vmem:[#allocation2 + $0x1a0] sm:$0xff]
    %v4074 = vld [vmem:[#allocation2 + $0x1a8] sm:$0xff]
    %v4075 = vld [vmem:[#allocation2 + $0x1b0] sm:$0xff]
    %v4076 = vld [vmem:[#allocation2 + $0x1b8] sm:$0xff]
    %v4077 = vld [vmem:[#allocation2 + $0x1c0] sm:$0xff]
    %v4078 = vld [vmem:[#allocation2 + $0x1c8] sm:$0xff]
    %v4079 = vld [vmem:[#allocation2 + $0x1d0] sm:$0xff]
    %v4080 = vld [vmem:[#allocation2 + $0x1d8] sm:$0xff]
    %v4081 = vld [vmem:[#allocation2 + $0x1e0] sm:$0xff]
    %v4082 = vld [vmem:[#allocation2 + $0x1e8] sm:$0xff]
    %v4083 = vld [vmem:[#allocation2 + $0x1f0] sm:$0xff]
    %v4084 = vld [vmem:[#allocation2 + $0x1f8] sm:$0xff]
    %v4085 = vld [vmem:[#allocation2 + $0x200] sm:$0xff]
    %v4086 = vld [vmem:[#allocation2 + $0x208] sm:$0xff]
    %v4087 = vld [vmem:[#allocation2 + $0x210] sm:$0xff]
    %v4088 = vld [vmem:[#allocation2 + $0x218] sm:$0xff]
    %v4089 = vld [vmem:[#allocation2 + $0x220] sm:$0xff]
    %v4090 = vld [vmem:[#allocation2 + $0x228] sm:$0xff]
    %v4091 = vld [vmem:[#allocation2 + $0x230] sm:$0xff]
    %v4092 = vld [vmem:[#allocation2 + $0x238] sm:$0xff]
    %v4093 = vld [vmem:[#allocation2 + $0x240] sm:$0xff]
    %v4094 = vld [vmem:[#allocation2 + $0x248] sm:$0xff]
    %v4095 = vld [vmem:[#allocation2 + $0x250] sm:$0xff]
    %v4096 = vld [vmem:[#allocation2 + $0x258] sm:$0xff]
    %v4097 = vld [vmem:[#allocation2 + $0x260] sm:$0xff]
    %v4098 = vld [vmem:[#allocation2 + $0x268] sm:$0xff]
    %v4099 = vld [vmem:[#allocation2 + $0x270] sm:$0xff]
    %v4100 = vld [vmem:[#allocation2 + $0x278] sm:$0xff]
    %v4101 = vld [vmem:[#allocation2 + $0x280] sm:$0xff]
    %v4102 = vld [vmem:[#allocation2 + $0x288] sm:$0xff]
    %v4103 = vld [vmem:[#allocation2 + $0x290] sm:$0xff]
    %v4104 = vld [vmem:[#allocation2 + $0x298] sm:$0xff]
    %v4105 = vld [vmem:[#allocation2 + $0x2a0] sm:$0xff]
    %v4106 = vld [vmem:[#allocation2 + $0x2a8] sm:$0xff]
    %v4107 = vld [vmem:[#allocation2 + $0x2b0] sm:$0xff]
    %v4108 = vld [vmem:[#allocation2 + $0x2b8] sm:$0xff]
    %v4109 = vld [vmem:[#allocation2 + $0x2c0] sm:$0xff]
    %v4110 = vld [vmem:[#allocation2 + $0x2c8] sm:$0xff]
    %v4111 = vld [vmem:[#allocation2 + $0x2d0] sm:$0xff]
    %v4112 = vld [vmem:[#allocation2 + $0x2d8] sm:$0xff]
    %v4113 = vld [vmem:[#allocation2 + $0x2e0] sm:$0xff]
    %v4114 = vld [vmem:[#allocation2 + $0x2e8] sm:$0xff]
    %v4115 = vld [vmem:[#allocation2 + $0x2f0] sm:$0xff]
    %v4116 = vld [vmem:[#allocation2 + $0x2f8] sm:$0xff]
    %v4117 = vmul.f32 %v2449, %v4021
    %v4118 = vmul.f32 %v3989, %v4022
    %v4119 = vmul.f32 %v3893, %v4023
    %v4120 = vmul.f32 %v2450, %v4024
    %v4121 = vmul.f32 %v3990, %v4025
    %v4122 = vmul.f32 %v3895, %v4026
    %v4123 = vmul.f32 %v2451, %v4027
    %v4124 = vmul.f32 %v3991, %v4028
    %v4125 = vmul.f32 %v3897, %v4029
    %v4126 = vmul.f32 %v2452, %v4030
    %v4127 = vmul.f32 %v3992, %v4031
    %v4128 = vmul.f32 %v3899, %v4032
    %v4129 = vmul.f32 %v2453, %v4033
    %v4130 = vmul.f32 %v3993, %v4034
    %v4131 = vmul.f32 %v3901, %v4035
    %v4132 = vmul.f32 %v2454, %v4036
    %v4133 = vmul.f32 %v3994, %v4037
    %v4134 = vmul.f32 %v3903, %v4038
    %v4135 = vmul.f32 %v2455, %v4039
    %v4136 = vmul.f32 %v3995, %v4040
    %v4137 = vmul.f32 %v3905, %v4041
    %v4138 = vmul.f32 %v2456, %v4042
    %v4139 = vmul.f32 %v3996, %v4043
    %v4140 = vmul.f32 %v3907, %v4044
    %v4141 = vmul.f32 %v2457, %v4045
    %v4142 = vmul.f32 %v3997, %v4046
    %v4143 = vmul.f32 %v3909, %v4047
    %v4144 = vmul.f32 %v2458, %v4048
    %v4145 = vmul.f32 %v3998, %v4049
    %v4146 = vmul.f32 %v3911, %v4050
    %v4147 = vmul.f32 %v2459, %v4051
    %v4148 = vmul.f32 %v3999, %v4052
    %v4149 = vmul.f32 %v3913, %v4053
    %v4150 = vmul.f32 %v2460, %v4054
    %v4151 = vmul.f32 %v4000, %v4055
    %v4152 = vmul.f32 %v3915, %v4056
    %v4153 = vmul.f32 %v2461, %v4057
    %v4154 = vmul.f32 %v4001, %v4058
    %v4155 = vmul.f32 %v3917, %v4059
    %v4156 = vmul.f32 %v2462, %v4060
    %v4157 = vmul.f32 %v4002, %v4061
    %v4158 = vmul.f32 %v3919, %v4062
    %v4159 = vmul.f32 %v2463, %v4063
    %v4160 = vmul.f32 %v4003, %v4064
    %v4161 = vmul.f32 %v3921, %v4065
    %v4162 = vmul.f32 %v2464, %v4066
    %v4163 = vmul.f32 %v4004, %v4067
    %v4164 = vmul.f32 %v3923, %v4068
    %v4165 = vmul.f32 %v2465, %v4069
    %v4166 = vmul.f32 %v4005, %v4070
    %v4167 = vmul.f32 %v3925, %v4071
    %v4168 = vmul.f32 %v2466, %v4072
    %v4169 = vmul.f32 %v4006, %v4073
    %v4170 = vmul.f32 %v3927, %v4074
    %v4171 = vmul.f32 %v2467, %v4075
    %v4172 = vmul.f32 %v4007, %v4076
    %v4173 = vmul.f32 %v3929, %v4077
    %v4174 = vmul.f32 %v2468, %v4078
    %v4175 = vmul.f32 %v4008, %v4079
    %v4176 = vmul.f32 %v3931, %v4080
    %v4177 = vmul.f32 %v2469, %v4081
    %v4178 = vmul.f32 %v4009, %v4082
    %v4179 = vmul.f32 %v3933, %v4083
    %v4180 = vmul.f32 %v2470, %v4084
    %v4181 = vmul.f32 %v4010, %v4085
    %v4182 = vmul.f32 %v3935, %v4086
    %v4183 = vmul.f32 %v2471, %v4087
    %v4184 = vmul.f32 %v4011, %v4088
    %v4185 = vmul.f32 %v3937, %v4089
    %v4186 = vmul.f32 %v2472, %v4090
    %v4187 = vmul.f32 %v4012, %v4091
    %v4188 = vmul.f32 %v3939, %v4092
    %v4189 = vmul.f32 %v2473, %v4093
    %v4190 = vmul.f32 %v4013, %v4094
    %v4191 = vmul.f32 %v3941, %v4095
    %v4192 = vmul.f32 %v2474, %v4096
    %v4193 = vmul.f32 %v4014, %v4097
    %v4194 = vmul.f32 %v3943, %v4098
    %v4195 = vmul.f32 %v2475, %v4099
    %v4196 = vmul.f32 %v4015, %v4100
    %v4197 = vmul.f32 %v3945, %v4101
    %v4198 = vmul.f32 %v2476, %v4102
    %v4199 = vmul.f32 %v4016, %v4103
    %v4200 = vmul.f32 %v3947, %v4104
    %v4201 = vmul.f32 %v2477, %v4105
    %v4202 = vmul.f32 %v4017, %v4106
    %v4203 = vmul.f32 %v3949, %v4107
    %v4204 = vmul.f32 %v2478, %v4108
    %v4205 = vmul.f32 %v4018, %v4109
    %v4206 = vmul.f32 %v3951, %v4110
    %v4207 = vmul.f32 %v2479, %v4111
    %v4208 = vmul.f32 %v4019, %v4112
    %v4209 = vmul.f32 %v3953, %v4113
    %v4210 = vmul.f32 %v2480, %v4114
    %v4211 = vmul.f32 %v4020, %v4115
    %v4212 = vmul.f32 %v3955, %v4116
    %v4213 = vpack.c.bf16 %v4120, %v4117
    %v4214 = vpack.c.bf16 %v4121, %v4118
    %v4215 = vpack.c.bf16 %v4122, %v4119
    %v4216 = vpack.c.bf16 %v4126, %v4123
    %v4217 = vpack.c.bf16 %v4127, %v4124
    %v4218 = vpack.c.bf16 %v4128, %v4125
    %v4219 = vpack.c.bf16 %v4132, %v4129
    %v4220 = vpack.c.bf16 %v4133, %v4130
    %v4221 = vpack.c.bf16 %v4134, %v4131
    %v4222 = vpack.c.bf16 %v4138, %v4135
    %v4223 = vpack.c.bf16 %v4139, %v4136
    %v4224 = vpack.c.bf16 %v4140, %v4137
    %v4225 = vpack.c.bf16 %v4144, %v4141
    %v4226 = vpack.c.bf16 %v4145, %v4142
    %v4227 = vpack.c.bf16 %v4146, %v4143
    %v4228 = vpack.c.bf16 %v4150, %v4147
    %v4229 = vpack.c.bf16 %v4151, %v4148
    %v4230 = vpack.c.bf16 %v4152, %v4149
    %v4231 = vpack.c.bf16 %v4156, %v4153
    %v4232 = vpack.c.bf16 %v4157, %v4154
    %v4233 = vpack.c.bf16 %v4158, %v4155
    %v4234 = vpack.c.bf16 %v4162, %v4159
    %v4235 = vpack.c.bf16 %v4163, %v4160
    %v4236 = vpack.c.bf16 %v4164, %v4161
    %v4237 = vpack.c.bf16 %v4168, %v4165
    %v4238 = vpack.c.bf16 %v4169, %v4166
    %v4239 = vpack.c.bf16 %v4170, %v4167
    %v4240 = vpack.c.bf16 %v4174, %v4171
    %v4241 = vpack.c.bf16 %v4175, %v4172
    %v4242 = vpack.c.bf16 %v4176, %v4173
    %v4243 = vpack.c.bf16 %v4180, %v4177
    %v4244 = vpack.c.bf16 %v4181, %v4178
    %v4245 = vpack.c.bf16 %v4182, %v4179
    %v4246 = vpack.c.bf16 %v4186, %v4183
    %v4247 = vpack.c.bf16 %v4187, %v4184
    %v4248 = vpack.c.bf16 %v4188, %v4185
    %v4249 = vpack.c.bf16 %v4192, %v4189
    %v4250 = vpack.c.bf16 %v4193, %v4190
    %v4251 = vpack.c.bf16 %v4194, %v4191
    %v4252 = vpack.c.bf16 %v4198, %v4195
    %v4253 = vpack.c.bf16 %v4199, %v4196
    %v4254 = vpack.c.bf16 %v4200, %v4197
    %v4255 = vpack.c.bf16 %v4204, %v4201
    %v4256 = vpack.c.bf16 %v4205, %v4202
    %v4257 = vpack.c.bf16 %v4206, %v4203
    %v4258 = vpack.c.bf16 %v4210, %v4207
    %v4259 = vpack.c.bf16 %v4211, %v4208
    %v4260 = vpack.c.bf16 %v4212, %v4209
    %v4261 = vld [vmem:[#allocation4] sm:$0xf]
    %v4262 = vld [vmem:[#allocation4 + $0x4] sm:$0xf]
    %v4263 = vld [vmem:[#allocation4 + $0x8] sm:$0xf]
    %v4264 = vld [vmem:[#allocation4 + $0xc] sm:$0xf]
    %v4265 = vld [vmem:[#allocation4 + $0x10] sm:$0xf]
    %v4266 = vld [vmem:[#allocation4 + $0x14] sm:$0xf]
    %v4267 = vld [vmem:[#allocation4 + $0x18] sm:$0xf]
    %v4268 = vld [vmem:[#allocation4 + $0x1c] sm:$0xf]
    %v4269 = vld [vmem:[#allocation4 + $0x20] sm:$0xf]
    %v4270 = vld [vmem:[#allocation4 + $0x24] sm:$0xf]
    %v4271 = vld [vmem:[#allocation4 + $0x28] sm:$0xf]
    %v4272 = vld [vmem:[#allocation4 + $0x2c] sm:$0xf]
    %v4273 = vld [vmem:[#allocation4 + $0x30] sm:$0xf]
    %v4274 = vld [vmem:[#allocation4 + $0x34] sm:$0xf]
    %v4275 = vld [vmem:[#allocation4 + $0x38] sm:$0xf]
    %v4276 = vld [vmem:[#allocation4 + $0x3c] sm:$0xf]
    %v4277 = vld [vmem:[#allocation4 + $0x40] sm:$0xf]
    %v4278 = vld [vmem:[#allocation4 + $0x44] sm:$0xf]
    %v4279 = vld [vmem:[#allocation4 + $0x48] sm:$0xf]
    %v4280 = vld [vmem:[#allocation4 + $0x4c] sm:$0xf]
    %v4281 = vld [vmem:[#allocation4 + $0x50] sm:$0xf]
    %v4282 = vld [vmem:[#allocation4 + $0x54] sm:$0xf]
    %v4283 = vld [vmem:[#allocation4 + $0x58] sm:$0xf]
    %v4284 = vld [vmem:[#allocation4 + $0x5c] sm:$0xf]
    %v4285 = vld [vmem:[#allocation4 + $0x60] sm:$0xf]
    %v4286 = vld [vmem:[#allocation4 + $0x64] sm:$0xf]
    %v4287 = vld [vmem:[#allocation4 + $0x68] sm:$0xf]
    %v4288 = vld [vmem:[#allocation4 + $0x6c] sm:$0xf]
    %v4289 = vld [vmem:[#allocation4 + $0x70] sm:$0xf]
    %v4290 = vld [vmem:[#allocation4 + $0x74] sm:$0xf]
    %v4291 = vld [vmem:[#allocation4 + $0x78] sm:$0xf]
    %v4292 = vld [vmem:[#allocation4 + $0x7c] sm:$0xf]
    %v4293 = vld [vmem:[#allocation4 + $0x80] sm:$0xf]
    %v4294 = vld [vmem:[#allocation4 + $0x84] sm:$0x7]
    %v4295 = vld [vmem:[%s3] sm:$0x1]
    %v4296 = vlaneseq
    %v4297 = vshrl.u32 %v4296, 7
    %v4298 = vsub.s32 0, %v4297
    %v4299 = vrot.slane %v4295, %v4298
    %v4334 = vunpack.c.l.b16 %v4261
    %v4335 = vunpack.c.l.b16 %v4262
    %v4336 = vunpack.c.l.b16 %v4263
    %v4337 = vunpack.c.l.b16 %v4264
    %v4338 = vunpack.c.l.b16 %v4265
    %v4339 = vunpack.c.l.b16 %v4266
    %v4340 = vunpack.c.l.b16 %v4267
    %v4341 = vunpack.c.l.b16 %v4268
    %v4342 = vunpack.c.l.b16 %v4269
    %v4343 = vunpack.c.l.b16 %v4270
    %v4344 = vunpack.c.l.b16 %v4271
    %v4345 = vunpack.c.l.b16 %v4272
    %v4346 = vunpack.c.l.b16 %v4273
    %v4347 = vunpack.c.l.b16 %v4274
    %v4348 = vunpack.c.l.b16 %v4275
    %v4349 = vunpack.c.l.b16 %v4276
    %v4350 = vunpack.c.l.b16 %v4277
    %v4351 = vunpack.c.l.b16 %v4278
    %v4352 = vunpack.c.l.b16 %v4279
    %v4353 = vunpack.c.l.b16 %v4280
    %v4354 = vunpack.c.l.b16 %v4281
    %v4355 = vunpack.c.l.b16 %v4282
    %v4356 = vunpack.c.l.b16 %v4283
    %v4357 = vunpack.c.l.b16 %v4284
    %v4358 = vunpack.c.l.b16 %v4285
    %v4359 = vunpack.c.l.b16 %v4286
    %v4360 = vunpack.c.l.b16 %v4287
    %v4361 = vunpack.c.l.b16 %v4288
    %v4362 = vunpack.c.l.b16 %v4289
    %v4363 = vunpack.c.l.b16 %v4290
    %v4364 = vunpack.c.l.b16 %v4291
    %v4365 = vunpack.c.l.b16 %v4292
    %v4366 = vunpack.c.l.b16 %v4293
    %v4367 = vunpack.c.l.b16 %v4294
    %v4368 = vpack.c.b16 %v4335, %v4334
    %v4369 = vpack.c.b16 %v4337, %v4336
    %v4370 = vpack.c.b16 %v4339, %v4338
    %v4371 = vpack.c.b16 %v4341, %v4340
    %v4372 = vpack.c.b16 %v4343, %v4342
    %v4373 = vpack.c.b16 %v4345, %v4344
    %v4374 = vpack.c.b16 %v4347, %v4346
    %v4375 = vpack.c.b16 %v4349, %v4348
    %v4376 = vpack.c.b16 %v4351, %v4350
    %v4377 = vpack.c.b16 %v4353, %v4352
    %v4378 = vpack.c.b16 %v4355, %v4354
    %v4379 = vpack.c.b16 %v4357, %v4356
    %v4380 = vpack.c.b16 %v4359, %v4358
    %v4381 = vpack.c.b16 %v4361, %v4360
    %v4382 = vpack.c.b16 %v4363, %v4362
    %v4383 = vpack.c.b16 %v4365, %v4364
    %v4384 = vpack.c.b16 %v4367, %v4366
    %vm4401 = vcmask 113664
    %v4403 = vsel %vm4401, %v4215, 0
    %v4406 = vsel %vm4401, %v4218, 0
    %v4409 = vsel %vm4401, %v4221, 0
    %v4412 = vsel %vm4401, %v4224, 0
    %v4415 = vsel %vm4401, %v4227, 0
    %v4418 = vsel %vm4401, %v4230, 0
    %v4421 = vsel %vm4401, %v4233, 0
    %v4424 = vsel %vm4401, %v4236, 0
    %v4427 = vsel %vm4401, %v4239, 0
    %v4430 = vsel %vm4401, %v4242, 0
    %v4433 = vsel %vm4401, %v4245, 0
    %v4436 = vsel %vm4401, %v4248, 0
    %v4439 = vsel %vm4401, %v4251, 0
    %v4442 = vsel %vm4401, %v4254, 0
    %v4445 = vsel %vm4401, %v4257, 0
    %v4448 = vsel %vm4401, %v4260, 0
    %vm4450 = vcmask 1046528
    %v4452 = vsel %vm4450, %v4384, 0
    %4454 = vmatprep.subr.bf16.mxu0 0
    %4455 = vmatpush1.bf16.msra.mxu0 %v4368
    %4456 = vmatprep.subr.bf16.mxu0 0
    %4457 = vmatpush1.bf16.msra.mxu0 %v4369
    %4458 = vmatprep.subr.bf16.mxu0 0
    %4459 = vmatpush1.bf16.msra.mxu0 %v4370
    %4460 = vmatprep.subr.bf16.mxu0 0
    %4461 = vmatpush1.bf16.msra.mxu0 %v4371
    %4462 = vmatprep.subr.bf16.mxu0 0
    %4463 = vmatpush1.bf16.msra.mxu0 %v4372
    %4464 = vmatprep.subr.bf16.mxu0 0
    %4465 = vmatpush1.bf16.msra.mxu0 %v4373
    %4466 = vmatprep.subr.bf16.mxu0 0
    %4467 = vmatpush1.bf16.msra.mxu0 %v4374
    %4468 = vmatprep.subr.bf16.mxu0 0
    %4469 = vmatpush1.bf16.msra.mxu0 %v4375
    %4470 = vmatprep.subr.bf16.mxu0 0
    %4471 = vmatpush1.bf16.msra.mxu0 %v4376
    %4472 = vmatprep.subr.bf16.mxu0 0
    %4473 = vmatpush1.bf16.msra.mxu0 %v4377
    %4474 = vmatprep.subr.bf16.mxu0 0
    %4475 = vmatpush1.bf16.msra.mxu0 %v4378
    %4476 = vmatprep.subr.bf16.mxu0 0
    %4477 = vmatpush1.bf16.msra.mxu0 %v4379
    %4478 = vmatprep.subr.bf16.mxu0 0
    %4479 = vmatpush1.bf16.msra.mxu0 %v4380
    %4480 = vmatprep.subr.bf16.mxu0 0
    %4481 = vmatpush1.bf16.msra.mxu0 %v4381
    %4482 = vmatprep.subr.bf16.mxu0 0
    %4483 = vmatpush1.bf16.msra.mxu0 %v4382
    %4484 = vmatprep.subr.bf16.mxu0 0
    %4485 = vmatpush1.bf16.msra.mxu0 %v4383
    %4486 = vmatprep.mubr.bf16.mxu0 %v4214
    %4487 = vmatmul.mubr.bf16.gmra.mrb[0].mxu0 %v4213
    %v4488 = vpop.f32.mrb[0].mxu0
    %v4489 = vadd.f32 %v4299, %v4488
    %v4490 = vpop.f32.mrb[0].mxu0
    %v4491 = vpop.f32.mrb[0].mxu0
    %v4492 = vadd.f32 %v4299, %v4491
    %v4493 = vpop.f32.mrb[0].mxu0
    %4494 = vmatprep.mubr.bf16.mxu0 %v4217
    %4495 = vmatmul.mubr.bf16.gmra.mrb[0].mxu0 %v4216
    %v4496 = vpop.f32.mrb[0].mxu0
    %v4497 = vadd.f32 %v4299, %v4496
    %v4498 = vpop.f32.mrb[0].mxu0
    %v4499 = vpop.f32.mrb[0].mxu0
    %v4500 = vadd.f32 %v4299, %v4499
    %v4501 = vpop.f32.mrb[0].mxu0
    %4502 = vmatprep.mubr.bf16.mxu0 %v4220
    %4503 = vmatmul.mubr.bf16.gmra.mrb[0].mxu0 %v4219
    %v4504 = vpop.f32.mrb[0].mxu0
    %v4505 = vadd.f32 %v4299, %v4504
    %v4506 = vpop.f32.mrb[0].mxu0
    %v4507 = vpop.f32.mrb[0].mxu0
    %v4508 = vadd.f32 %v4299, %v4507
    %v4509 = vpop.f32.mrb[0].mxu0
    %4510 = vmatprep.mubr.bf16.mxu0 %v4223
    %4511 = vmatmul.mubr.bf16.gmra.mrb[0].mxu0 %v4222
    %v4512 = vpop.f32.mrb[0].mxu0
    %v4513 = vadd.f32 %v4299, %v4512
    %v4514 = vpop.f32.mrb[0].mxu0
    %v4515 = vpop.f32.mrb[0].mxu0
    %v4516 = vadd.f32 %v4299, %v4515
    %v4517 = vpop.f32.mrb[0].mxu0
    %4518 = vmatprep.mubr.bf16.mxu0 %v4226
    %4519 = vmatmul.mubr.bf16.gmra.mrb[0].mxu0 %v4225
    %v4520 = vpop.f32.mrb[0].mxu0
    %v4521 = vadd.f32 %v4299, %v4520
    %v4522 = vpop.f32.mrb[0].mxu0
    %v4523 = vpop.f32.mrb[0].mxu0
    %v4524 = vadd.f32 %v4299, %v4523
    %v4525 = vpop.f32.mrb[0].mxu0
    %4526 = vmatprep.mubr.bf16.mxu0 %v4229
    %4527 = vmatmul.mubr.bf16.gmra.mrb[0].mxu0 %v4228
    %v4528 = vpop.f32.mrb[0].mxu0
    %v4529 = vadd.f32 %v4299, %v4528
    %v4530 = vpop.f32.mrb[0].mxu0
    %v4531 = vpop.f32.mrb[0].mxu0
    %v4532 = vadd.f32 %v4299, %v4531
    %v4533 = vpop.f32.mrb[0].mxu0
    %4534 = vmatprep.mubr.bf16.mxu0 %v4232
    %4535 = vmatmul.mubr.bf16.gmra.mrb[0].mxu0 %v4231
    %v4536 = vpop.f32.mrb[0].mxu0
    %v4537 = vadd.f32 %v4299, %v4536
    %v4538 = vpop.f32.mrb[0].mxu0
    %v4539 = vpop.f32.mrb[0].mxu0
    %v4540 = vadd.f32 %v4299, %v4539
    %v4541 = vpop.f32.mrb[0].mxu0
    %4542 = vmatprep.mubr.bf16.mxu0 %v4235
    %4543 = vmatmul.mubr.bf16.gmra.mrb[0].mxu0 %v4234
    %v4544 = vpop.f32.mrb[0].mxu0
    %v4545 = vadd.f32 %v4299, %v4544
    %v4546 = vpop.f32.mrb[0].mxu0
    %v4547 = vpop.f32.mrb[0].mxu0
    %v4548 = vadd.f32 %v4299, %v4547
    %v4549 = vpop.f32.mrb[0].mxu0
    %4550 = vmatprep.mubr.bf16.mxu0 %v4238
    %4551 = vmatmul.mubr.bf16.gmra.mrb[0].mxu0 %v4237
    %v4552 = vpop.f32.mrb[0].mxu0
    %v4553 = vadd.f32 %v4299, %v4552
    %v4554 = vpop.f32.mrb[0].mxu0
    %v4555 = vpop.f32.mrb[0].mxu0
    %v4556 = vadd.f32 %v4299, %v4555
    %v4557 = vpop.f32.mrb[0].mxu0
    %4558 = vmatprep.mubr.bf16.mxu0 %v4241
    %4559 = vmatmul.mubr.bf16.gmra.mrb[0].mxu0 %v4240
    %v4560 = vpop.f32.mrb[0].mxu0
    %v4561 = vadd.f32 %v4299, %v4560
    %v4562 = vpop.f32.mrb[0].mxu0
    %v4563 = vpop.f32.mrb[0].mxu0
    %v4564 = vadd.f32 %v4299, %v4563
    %v4565 = vpop.f32.mrb[0].mxu0
    %4566 = vmatprep.mubr.bf16.mxu0 %v4244
    %4567 = vmatmul.mubr.bf16.gmra.mrb[0].mxu0 %v4243
    %v4568 = vpop.f32.mrb[0].mxu0
    %v4569 = vadd.f32 %v4299, %v4568
    %v4570 = vpop.f32.mrb[0].mxu0
    %v4571 = vpop.f32.mrb[0].mxu0
    %v4572 = vadd.f32 %v4299, %v4571
    %v4573 = vpop.f32.mrb[0].mxu0
    %4574 = vmatprep.mubr.bf16.mxu0 %v4247
    %4575 = vmatmul.mubr.bf16.gmra.mrb[0].mxu0 %v4246
    %v4576 = vpop.f32.mrb[0].mxu0
    %v4577 = vadd.f32 %v4299, %v4576
    %v4578 = vpop.f32.mrb[0].mxu0
    %v4579 = vpop.f32.mrb[0].mxu0
    %v4580 = vadd.f32 %v4299, %v4579
    %v4581 = vpop.f32.mrb[0].mxu0
    %4582 = vmatprep.mubr.bf16.mxu0 %v4250
    %4583 = vmatmul.mubr.bf16.gmra.mrb[0].mxu0 %v4249
    %v4584 = vpop.f32.mrb[0].mxu0
    %v4585 = vadd.f32 %v4299, %v4584
    %v4586 = vpop.f32.mrb[0].mxu0
    %v4587 = vpop.f32.mrb[0].mxu0
    %v4588 = vadd.f32 %v4299, %v4587
    %v4589 = vpop.f32.mrb[0].mxu0
    %4590 = vmatprep.mubr.bf16.mxu0 %v4253
    %4591 = vmatmul.mubr.bf16.gmra.mrb[0].mxu0 %v4252
    %v4592 = vpop.f32.mrb[0].mxu0
    %v4593 = vadd.f32 %v4299, %v4592
    %v4594 = vpop.f32.mrb[0].mxu0
    %v4595 = vpop.f32.mrb[0].mxu0
    %v4596 = vadd.f32 %v4299, %v4595
    %v4597 = vpop.f32.mrb[0].mxu0
    %4598 = vmatprep.mubr.bf16.mxu0 %v4256
    %4599 = vmatmul.mubr.bf16.gmra.mrb[0].mxu0 %v4255
    %v4600 = vpop.f32.mrb[0].mxu0
    %v4601 = vadd.f32 %v4299, %v4600
    %v4602 = vpop.f32.mrb[0].mxu0
    %v4603 = vpop.f32.mrb[0].mxu0
    %v4604 = vadd.f32 %v4299, %v4603
    %v4605 = vpop.f32.mrb[0].mxu0
    %4606 = vmatprep.mubr.bf16.mxu0 %v4259
    %4607 = vmatmul.mubr.bf16.gmra.mrb[0].mxu0 %v4258
    %v4608 = vpop.f32.mrb[0].mxu0
    %v4609 = vadd.f32 %v4299, %v4608
    %v4610 = vpop.f32.mrb[0].mxu0
    %v4611 = vpop.f32.mrb[0].mxu0
    %v4612 = vadd.f32 %v4299, %v4611
    %v4613 = vpop.f32.mrb[0].mxu0
    %4614 = vdwg.mxu0
    %4615 = vmatprep.subr.bf16.mxu0 0
    %4616 = vmatpush1.bf16.msra.mxu0 %v4452
    %4617 = vmatprep.subr.bf16.mxu0 0
    %4618 = vmatpush1.bf16.msra.mxu0 0
    %4619 = vmatprep.subr.bf16.mxu0 0
    %4620 = vmatpush1.bf16.msra.mxu0 0
    %4621 = vmatprep.subr.bf16.mxu0 0
    %4622 = vmatpush1.bf16.msra.mxu0 0
    %4623 = vmatprep.subr.bf16.mxu0 0
    %4624 = vmatpush1.bf16.msra.mxu0 0
    %4625 = vmatprep.subr.bf16.mxu0 0
    %4626 = vmatpush1.bf16.msra.mxu0 0
    %4627 = vmatprep.subr.bf16.mxu0 0
    %4628 = vmatpush1.bf16.msra.mxu0 0
    %4629 = vmatprep.subr.bf16.mxu0 0
    %4630 = vmatpush1.bf16.msra.mxu0 0
    %4631 = vmatprep.subr.bf16.mxu0 0
    %4632 = vmatpush1.bf16.msra.mxu0 0
    %4633 = vmatprep.subr.bf16.mxu0 0
    %4634 = vmatpush1.bf16.msra.mxu0 0
    %4635 = vmatprep.subr.bf16.mxu0 0
    %4636 = vmatpush1.bf16.msra.mxu0 0
    %4637 = vmatprep.subr.bf16.mxu0 0
    %4638 = vmatpush1.bf16.msra.mxu0 0
    %4639 = vmatprep.subr.bf16.mxu0 0
    %4640 = vmatpush1.bf16.msra.mxu0 0
    %4641 = vmatprep.subr.bf16.mxu0 0
    %4642 = vmatpush1.bf16.msra.mxu0 0
    %4643 = vmatprep.subr.bf16.mxu0 0
    %4644 = vmatpush1.bf16.msra.mxu0 0
    %4645 = vmatprep.subr.bf16.mxu0 0
    %4646 = vmatpush1.bf16.msra.mxu0 0
    %4647 = vmatprep.mubr.bf16.mxu0 0
    %4648 = vmatmul.mubr.bf16.gmra.mrb[0].mxu0 %v4403
    %v4649 = vpop.f32.mrb[0].mxu0
    %v4650 = vadd.f32 %v4489, %v4649
    %v4651 = vpop.f32.mrb[0].mxu0
    %v4652 = vpop.f32.mrb[0].mxu0
    %v4653 = vadd.f32 %v4492, %v4652
    %v4654 = vpop.f32.mrb[0].mxu0
    %4655 = vmatprep.mubr.bf16.mxu0 0
    %4656 = vmatmul.mubr.bf16.gmra.mrb[0].mxu0 %v4406
    %v4657 = vpop.f32.mrb[0].mxu0
    %v4658 = vadd.f32 %v4497, %v4657
    %v4659 = vpop.f32.mrb[0].mxu0
    %v4660 = vpop.f32.mrb[0].mxu0
    %v4661 = vadd.f32 %v4500, %v4660
    %v4662 = vpop.f32.mrb[0].mxu0
    %4663 = vmatprep.mubr.bf16.mxu0 0
    %4664 = vmatmul.mubr.bf16.gmra.mrb[0].mxu0 %v4409
    %v4665 = vpop.f32.mrb[0].mxu0
    %v4666 = vadd.f32 %v4505, %v4665
    %v4667 = vpop.f32.mrb[0].mxu0
    %v4668 = vpop.f32.mrb[0].mxu0
    %v4669 = vadd.f32 %v4508, %v4668
    %v4670 = vpop.f32.mrb[0].mxu0
    %4671 = vmatprep.mubr.bf16.mxu0 0
    %4672 = vmatmul.mubr.bf16.gmra.mrb[0].mxu0 %v4412
    %v4673 = vpop.f32.mrb[0].mxu0
    %v4674 = vadd.f32 %v4513, %v4673
    %v4675 = vpop.f32.mrb[0].mxu0
    %v4676 = vpop.f32.mrb[0].mxu0
    %v4677 = vadd.f32 %v4516, %v4676
    %v4678 = vpop.f32.mrb[0].mxu0
    %4679 = vmatprep.mubr.bf16.mxu0 0
    %4680 = vmatmul.mubr.bf16.gmra.mrb[0].mxu0 %v4415
    %v4681 = vpop.f32.mrb[0].mxu0
    %v4682 = vadd.f32 %v4521, %v4681
    %v4683 = vpop.f32.mrb[0].mxu0
    %v4684 = vpop.f32.mrb[0].mxu0
    %v4685 = vadd.f32 %v4524, %v4684
    %v4686 = vpop.f32.mrb[0].mxu0
    %4687 = vmatprep.mubr.bf16.mxu0 0
    %4688 = vmatmul.mubr.bf16.gmra.mrb[0].mxu0 %v4418
    %v4689 = vpop.f32.mrb[0].mxu0
    %v4690 = vadd.f32 %v4529, %v4689
    %v4691 = vpop.f32.mrb[0].mxu0
    %v4692 = vpop.f32.mrb[0].mxu0
    %v4693 = vadd.f32 %v4532, %v4692
    %v4694 = vpop.f32.mrb[0].mxu0
    %4695 = vmatprep.mubr.bf16.mxu0 0
    %4696 = vmatmul.mubr.bf16.gmra.mrb[0].mxu0 %v4421
    %v4697 = vpop.f32.mrb[0].mxu0
    %v4698 = vadd.f32 %v4537, %v4697
    %v4699 = vpop.f32.mrb[0].mxu0
    %v4700 = vpop.f32.mrb[0].mxu0
    %v4701 = vadd.f32 %v4540, %v4700
    %v4702 = vpop.f32.mrb[0].mxu0
    %4703 = vmatprep.mubr.bf16.mxu0 0
    %4704 = vmatmul.mubr.bf16.gmra.mrb[0].mxu0 %v4424
    %v4705 = vpop.f32.mrb[0].mxu0
    %v4706 = vadd.f32 %v4545, %v4705
    %v4707 = vpop.f32.mrb[0].mxu0
    %v4708 = vpop.f32.mrb[0].mxu0
    %v4709 = vadd.f32 %v4548, %v4708
    %v4710 = vpop.f32.mrb[0].mxu0
    %4711 = vmatprep.mubr.bf16.mxu0 0
    %4712 = vmatmul.mubr.bf16.gmra.mrb[0].mxu0 %v4427
    %v4713 = vpop.f32.mrb[0].mxu0
    %v4714 = vadd.f32 %v4553, %v4713
    %v4715 = vpop.f32.mrb[0].mxu0
    %v4716 = vpop.f32.mrb[0].mxu0
    %v4717 = vadd.f32 %v4556, %v4716
    %v4718 = vpop.f32.mrb[0].mxu0
    %4719 = vmatprep.mubr.bf16.mxu0 0
    %4720 = vmatmul.mubr.bf16.gmra.mrb[0].mxu0 %v4430
    %v4721 = vpop.f32.mrb[0].mxu0
    %v4722 = vadd.f32 %v4561, %v4721
    %v4723 = vpop.f32.mrb[0].mxu0
    %v4724 = vpop.f32.mrb[0].mxu0
    %v4725 = vadd.f32 %v4564, %v4724
    %v4726 = vpop.f32.mrb[0].mxu0
    %4727 = vmatprep.mubr.bf16.mxu0 0
    %4728 = vmatmul.mubr.bf16.gmra.mrb[0].mxu0 %v4433
    %v4729 = vpop.f32.mrb[0].mxu0
    %v4730 = vadd.f32 %v4569, %v4729
    %v4731 = vpop.f32.mrb[0].mxu0
    %v4732 = vpop.f32.mrb[0].mxu0
    %v4733 = vadd.f32 %v4572, %v4732
    %v4734 = vpop.f32.mrb[0].mxu0
    %4735 = vmatprep.mubr.bf16.mxu0 0
    %4736 = vmatmul.mubr.bf16.gmra.mrb[0].mxu0 %v4436
    %v4737 = vpop.f32.mrb[0].mxu0
    %v4738 = vadd.f32 %v4577, %v4737
    %v4739 = vpop.f32.mrb[0].mxu0
    %v4740 = vpop.f32.mrb[0].mxu0
    %v4741 = vadd.f32 %v4580, %v4740
    %v4742 = vpop.f32.mrb[0].mxu0
    %4743 = vmatprep.mubr.bf16.mxu0 0
    %4744 = vmatmul.mubr.bf16.gmra.mrb[0].mxu0 %v4439
    %v4745 = vpop.f32.mrb[0].mxu0
    %v4746 = vadd.f32 %v4585, %v4745
    %v4747 = vpop.f32.mrb[0].mxu0
    %v4748 = vpop.f32.mrb[0].mxu0
    %v4749 = vadd.f32 %v4588, %v4748
    %v4750 = vpop.f32.mrb[0].mxu0
    %4751 = vmatprep.mubr.bf16.mxu0 0
    %4752 = vmatmul.mubr.bf16.gmra.mrb[0].mxu0 %v4442
    %v4753 = vpop.f32.mrb[0].mxu0
    %v4754 = vadd.f32 %v4593, %v4753
    %v4755 = vpop.f32.mrb[0].mxu0
    %v4756 = vpop.f32.mrb[0].mxu0
    %v4757 = vadd.f32 %v4596, %v4756
    %v4758 = vpop.f32.mrb[0].mxu0
    %4759 = vmatprep.mubr.bf16.mxu0 0
    %4760 = vmatmul.mubr.bf16.gmra.mrb[0].mxu0 %v4445
    %v4761 = vpop.f32.mrb[0].mxu0
    %v4762 = vadd.f32 %v4601, %v4761
    %v4763 = vpop.f32.mrb[0].mxu0
    %v4764 = vpop.f32.mrb[0].mxu0
    %v4765 = vadd.f32 %v4604, %v4764
    %v4766 = vpop.f32.mrb[0].mxu0
    %4767 = vmatprep.mubr.bf16.mxu0 0
    %4768 = vmatmul.mubr.bf16.gmra.mrb[0].mxu0 %v4448
    %v4769 = vpop.f32.mrb[0].mxu0
    %v4770 = vadd.f32 %v4609, %v4769
    %v4771 = vpop.f32.mrb[0].mxu0
    %v4772 = vpop.f32.mrb[0].mxu0
    %v4773 = vadd.f32 %v4612, %v4772
    %v4774 = vpop.f32.mrb[0].mxu0
    %4775 = vdwg.mxu0
    %v4776 = vmax.f32 %v4650, 0.0
    %v4777 = vmax.f32 %v4653, 0.0
    %v4778 = vmax.f32 %v4658, 0.0
    %v4779 = vmax.f32 %v4661, 0.0
    %v4780 = vmax.f32 %v4666, 0.0
    %v4781 = vmax.f32 %v4669, 0.0
    %v4782 = vmax.f32 %v4674, 0.0
    %v4783 = vmax.f32 %v4677, 0.0
    %v4784 = vmax.f32 %v4682, 0.0
    %v4785 = vmax.f32 %v4685, 0.0
    %v4786 = vmax.f32 %v4690, 0.0
    %v4787 = vmax.f32 %v4693, 0.0
    %v4788 = vmax.f32 %v4698, 0.0
    %v4789 = vmax.f32 %v4701, 0.0
    %v4790 = vmax.f32 %v4706, 0.0
    %v4791 = vmax.f32 %v4709, 0.0
    %v4792 = vmax.f32 %v4714, 0.0
    %v4793 = vmax.f32 %v4717, 0.0
    %v4794 = vmax.f32 %v4722, 0.0
    %v4795 = vmax.f32 %v4725, 0.0
    %v4796 = vmax.f32 %v4730, 0.0
    %v4797 = vmax.f32 %v4733, 0.0
    %v4798 = vmax.f32 %v4738, 0.0
    %v4799 = vmax.f32 %v4741, 0.0
    %v4800 = vmax.f32 %v4746, 0.0
    %v4801 = vmax.f32 %v4749, 0.0
    %v4802 = vmax.f32 %v4754, 0.0
    %v4803 = vmax.f32 %v4757, 0.0
    %v4804 = vmax.f32 %v4762, 0.0
    %v4805 = vmax.f32 %v4765, 0.0
    %v4806 = vmax.f32 %v4770, 0.0
    %v4807 = vmax.f32 %v4773, 0.0
    %v4808 = vld [vmem:[%s3 + $0x1] sm:$0x1]
    %v4809 = vlaneseq
    %v4810 = vshrl.u32 %v4809, 7
    %v4811 = vsub.s32 0, %v4810
    %v4812 = vrot.slane %v4808, %v4811
    %v4813 = vmul.f32 %v4776, %v4812
    %v4814 = vmul.f32 %v4777, %v4812
    %v4815 = vmul.f32 %v4778, %v4812
    %v4816 = vmul.f32 %v4779, %v4812
    %v4817 = vmul.f32 %v4780, %v4812
    %v4818 = vmul.f32 %v4781, %v4812
    %v4819 = vmul.f32 %v4782, %v4812
    %v4820 = vmul.f32 %v4783, %v4812
    %v4821 = vmul.f32 %v4784, %v4812
    %v4822 = vmul.f32 %v4785, %v4812
    %v4823 = vmul.f32 %v4786, %v4812
    %v4824 = vmul.f32 %v4787, %v4812
    %v4825 = vmul.f32 %v4788, %v4812
    %v4826 = vmul.f32 %v4789, %v4812
    %v4827 = vmul.f32 %v4790, %v4812
    %v4828 = vmul.f32 %v4791, %v4812
    %v4829 = vmul.f32 %v4792, %v4812
    %v4830 = vmul.f32 %v4793, %v4812
    %v4831 = vmul.f32 %v4794, %v4812
    %v4832 = vmul.f32 %v4795, %v4812
    %v4833 = vmul.f32 %v4796, %v4812
    %v4834 = vmul.f32 %v4797, %v4812
    %v4835 = vmul.f32 %v4798, %v4812
    %v4836 = vmul.f32 %v4799, %v4812
    %v4837 = vmul.f32 %v4800, %v4812
    %v4838 = vmul.f32 %v4801, %v4812
    %v4839 = vmul.f32 %v4802, %v4812
    %v4840 = vmul.f32 %v4803, %v4812
    %v4841 = vmul.f32 %v4804, %v4812
    %v4842 = vmul.f32 %v4805, %v4812
    %v4843 = vmul.f32 %v4806, %v4812
    %v4844 = vmul.f32 %v4807, %v4812
    %v4845 = vld [vmem:[%s3 + $0x2] sm:$0x1]
    %v4846 = vlaneseq
    %v4847 = vshrl.u32 %v4846, 7
    %v4848 = vsub.s32 0, %v4847
    %v4849 = vrot.slane %v4845, %v4848
    %v4850 = vadd.f32 %v4813, %v4849
    %v4851 = vadd.f32 %v4814, %v4849
    %v4852 = vadd.f32 %v4815, %v4849
    %v4853 = vadd.f32 %v4816, %v4849
    %v4854 = vadd.f32 %v4817, %v4849
    %v4855 = vadd.f32 %v4818, %v4849
    %v4856 = vadd.f32 %v4819, %v4849
    %v4857 = vadd.f32 %v4820, %v4849
    %v4858 = vadd.f32 %v4821, %v4849
    %v4859 = vadd.f32 %v4822, %v4849
    %v4860 = vadd.f32 %v4823, %v4849
    %v4861 = vadd.f32 %v4824, %v4849
    %v4862 = vadd.f32 %v4825, %v4849
    %v4863 = vadd.f32 %v4826, %v4849
    %v4864 = vadd.f32 %v4827, %v4849
    %v4865 = vadd.f32 %v4828, %v4849
    %v4866 = vadd.f32 %v4829, %v4849
    %v4867 = vadd.f32 %v4830, %v4849
    %v4868 = vadd.f32 %v4831, %v4849
    %v4869 = vadd.f32 %v4832, %v4849
    %v4870 = vadd.f32 %v4833, %v4849
    %v4871 = vadd.f32 %v4834, %v4849
    %v4872 = vadd.f32 %v4835, %v4849
    %v4873 = vadd.f32 %v4836, %v4849
    %v4874 = vadd.f32 %v4837, %v4849
    %v4875 = vadd.f32 %v4838, %v4849
    %v4876 = vadd.f32 %v4839, %v4849
    %v4877 = vadd.f32 %v4840, %v4849
    %v4878 = vadd.f32 %v4841, %v4849
    %v4879 = vadd.f32 %v4842, %v4849
    %v4880 = vadd.f32 %v4843, %v4849
    %v4881 = vadd.f32 %v4844, %v4849
    %v4882 = vrot.slane %v4850, 1
    %v4883 = vrot.slane %v4851, 1
    %v4884 = vrot.slane %v4852, 1
    %v4885 = vrot.slane %v4853, 1
    %v4886 = vrot.slane %v4854, 1
    %v4887 = vrot.slane %v4855, 1
    %v4888 = vrot.slane %v4856, 1
    %v4889 = vrot.slane %v4857, 1
    %v4890 = vrot.slane %v4858, 1
    %v4891 = vrot.slane %v4859, 1
    %v4892 = vrot.slane %v4860, 1
    %v4893 = vrot.slane %v4861, 1
    %v4894 = vrot.slane %v4862, 1
    %v4895 = vrot.slane %v4863, 1
    %v4896 = vrot.slane %v4864, 1
    %v4897 = vrot.slane %v4865, 1
    %v4898 = vrot.slane %v4866, 1
    %v4899 = vrot.slane %v4867, 1
    %v4900 = vrot.slane %v4868, 1
    %v4901 = vrot.slane %v4869, 1
    %v4902 = vrot.slane %v4870, 1
    %v4903 = vrot.slane %v4871, 1
    %v4904 = vrot.slane %v4872, 1
    %v4905 = vrot.slane %v4873, 1
    %v4906 = vrot.slane %v4874, 1
    %v4907 = vrot.slane %v4875, 1
    %v4908 = vrot.slane %v4876, 1
    %v4909 = vrot.slane %v4877, 1
    %v4910 = vrot.slane %v4878, 1
    %v4911 = vrot.slane %v4879, 1
    %v4912 = vrot.slane %v4880, 1
    %v4913 = vrot.slane %v4881, 1
    %v4914 = vsel %vm420, %v4912, %v4913
    %v4915 = vsel %vm420, %v4911, %v4912
    %v4916 = vsel %vm420, %v4910, %v4911
    %v4917 = vsel %vm420, %v4909, %v4910
    %v4918 = vsel %vm420, %v4908, %v4909
    %v4919 = vsel %vm420, %v4907, %v4908
    %v4920 = vsel %vm420, %v4906, %v4907
    %v4921 = vsel %vm420, %v4905, %v4906
    %v4922 = vsel %vm420, %v4904, %v4905
    %v4923 = vsel %vm420, %v4903, %v4904
    %v4924 = vsel %vm420, %v4902, %v4903
    %v4925 = vsel %vm420, %v4901, %v4902
    %v4926 = vsel %vm420, %v4900, %v4901
    %v4927 = vsel %vm420, %v4899, %v4900
    %v4928 = vsel %vm420, %v4898, %v4899
    %v4929 = vsel %vm420, %v4897, %v4898
    %v4930 = vsel %vm420, %v4896, %v4897
    %v4931 = vsel %vm420, %v4895, %v4896
    %v4932 = vsel %vm420, %v4894, %v4895
    %v4933 = vsel %vm420, %v4893, %v4894
    %v4934 = vsel %vm420, %v4892, %v4893
    %v4935 = vsel %vm420, %v4891, %v4892
    %v4936 = vsel %vm420, %v4890, %v4891
    %v4937 = vsel %vm420, %v4889, %v4890
    %v4938 = vsel %vm420, %v4888, %v4889
    %v4939 = vsel %vm420, %v4887, %v4888
    %v4940 = vsel %vm420, %v4886, %v4887
    %v4941 = vsel %vm420, %v4885, %v4886
    %v4942 = vsel %vm420, %v4884, %v4885
    %v4943 = vsel %vm420, %v4883, %v4884
    %v4944 = vsel %vm420, %v4882, %v4883
    %v4945 = vsel %vm420, %v4913, %v4882
    %v4946 = vmax.f32 %v4850, %v4944
    %v4947 = vmax.f32 %v4851, %v4943
    %v4948 = vmax.f32 %v4852, %v4942
    %v4949 = vmax.f32 %v4853, %v4941
    %v4950 = vmax.f32 %v4854, %v4940
    %v4951 = vmax.f32 %v4855, %v4939
    %v4952 = vmax.f32 %v4856, %v4938
    %v4953 = vmax.f32 %v4857, %v4937
    %v4954 = vmax.f32 %v4858, %v4936
    %v4955 = vmax.f32 %v4859, %v4935
    %v4956 = vmax.f32 %v4860, %v4934
    %v4957 = vmax.f32 %v4861, %v4933
    %v4958 = vmax.f32 %v4862, %v4932
    %v4959 = vmax.f32 %v4863, %v4931
    %v4960 = vmax.f32 %v4864, %v4930
    %v4961 = vmax.f32 %v4865, %v4929
    %v4962 = vmax.f32 %v4866, %v4928
    %v4963 = vmax.f32 %v4867, %v4927
    %v4964 = vmax.f32 %v4868, %v4926
    %v4965 = vmax.f32 %v4869, %v4925
    %v4966 = vmax.f32 %v4870, %v4924
    %v4967 = vmax.f32 %v4871, %v4923
    %v4968 = vmax.f32 %v4872, %v4922
    %v4969 = vmax.f32 %v4873, %v4921
    %v4970 = vmax.f32 %v4874, %v4920
    %v4971 = vmax.f32 %v4875, %v4919
    %v4972 = vmax.f32 %v4876, %v4918
    %v4973 = vmax.f32 %v4877, %v4917
    %v4974 = vmax.f32 %v4878, %v4916
    %v4975 = vmax.f32 %v4879, %v4915
    %v4976 = vmax.f32 %v4880, %v4914
    %v4977 = vmax.f32 %v4881, %v4945
    %v4978 = vrot.slane %v4946, 4
    %v4979 = vrot.slane %v4947, 4
    %v4980 = vrot.slane %v4948, 4
    %v4981 = vrot.slane %v4949, 4
    %v4982 = vrot.slane %v4950, 4
    %v4983 = vrot.slane %v4951, 4
    %v4984 = vrot.slane %v4952, 4
    %v4985 = vrot.slane %v4953, 4
    %v4986 = vrot.slane %v4954, 4
    %v4987 = vrot.slane %v4955, 4
    %v4988 = vrot.slane %v4956, 4
    %v4989 = vrot.slane %v4957, 4
    %v4990 = vrot.slane %v4958, 4
    %v4991 = vrot.slane %v4959, 4
    %v4992 = vrot.slane %v4960, 4
    %v4993 = vrot.slane %v4961, 4
    %v4994 = vrot.slane %v4962, 4
    %v4995 = vrot.slane %v4963, 4
    %v4996 = vrot.slane %v4964, 4
    %v4997 = vrot.slane %v4965, 4
    %v4998 = vrot.slane %v4966, 4
    %v4999 = vrot.slane %v4967, 4
    %v5000 = vrot.slane %v4968, 4
    %v5001 = vrot.slane %v4969, 4
    %v5002 = vrot.slane %v4970, 4
    %v5003 = vrot.slane %v4971, 4
    %v5004 = vrot.slane %v4972, 4
    %v5005 = vrot.slane %v4973, 4
    %v5006 = vrot.slane %v4974, 4
    %v5007 = vrot.slane %v4975, 4
    %v5008 = vrot.slane %v4976, 4
    %v5009 = vrot.slane %v4977, 4
    %v5010 = vsel %vm225, %v5008, %v5009
    %v5011 = vsel %vm225, %v5007, %v5008
    %v5012 = vsel %vm225, %v5006, %v5007
    %v5013 = vsel %vm225, %v5005, %v5006
    %v5014 = vsel %vm225, %v5004, %v5005
    %v5015 = vsel %vm225, %v5003, %v5004
    %v5016 = vsel %vm225, %v5002, %v5003
    %v5017 = vsel %vm225, %v5001, %v5002
    %v5018 = vsel %vm225, %v5000, %v5001
    %v5019 = vsel %vm225, %v4999, %v5000
    %v5020 = vsel %vm225, %v4998, %v4999
    %v5021 = vsel %vm225, %v4997, %v4998
    %v5022 = vsel %vm225, %v4996, %v4997
    %v5023 = vsel %vm225, %v4995, %v4996
    %v5024 = vsel %vm225, %v4994, %v4995
    %v5025 = vsel %vm225, %v4993, %v4994
    %v5026 = vsel %vm225, %v4992, %v4993
    %v5027 = vsel %vm225, %v4991, %v4992
    %v5028 = vsel %vm225, %v4990, %v4991
    %v5029 = vsel %vm225, %v4989, %v4990
    %v5030 = vsel %vm225, %v4988, %v4989
    %v5031 = vsel %vm225, %v4987, %v4988
    %v5032 = vsel %vm225, %v4986, %v4987
    %v5033 = vsel %vm225, %v4985, %v4986
    %v5034 = vsel %vm225, %v4984, %v4985
    %v5035 = vsel %vm225, %v4983, %v4984
    %v5036 = vsel %vm225, %v4982, %v4983
    %v5037 = vsel %vm225, %v4981, %v4982
    %v5038 = vsel %vm225, %v4980, %v4981
    %v5039 = vsel %vm225, %v4979, %v4980
    %v5040 = vsel %vm225, %v4978, %v4979
    %v5041 = vsel %vm225, %v5009, %v4978
    %v5042 = vmax.f32 %v4946, %v5040
    %v5043 = vmax.f32 %v4947, %v5039
    %v5044 = vmax.f32 %v4948, %v5038
    %v5045 = vmax.f32 %v4949, %v5037
    %v5046 = vmax.f32 %v4950, %v5036
    %v5047 = vmax.f32 %v4951, %v5035
    %v5048 = vmax.f32 %v4952, %v5034
    %v5049 = vmax.f32 %v4953, %v5033
    %v5050 = vmax.f32 %v4954, %v5032
    %v5051 = vmax.f32 %v4955, %v5031
    %v5052 = vmax.f32 %v4956, %v5030
    %v5053 = vmax.f32 %v4957, %v5029
    %v5054 = vmax.f32 %v4958, %v5028
    %v5055 = vmax.f32 %v4959, %v5027
    %v5056 = vmax.f32 %v4960, %v5026
    %v5057 = vmax.f32 %v4961, %v5025
    %v5058 = vmax.f32 %v4962, %v5024
    %v5059 = vmax.f32 %v4963, %v5023
    %v5060 = vmax.f32 %v4964, %v5022
    %v5061 = vmax.f32 %v4965, %v5021
    %v5062 = vmax.f32 %v4966, %v5020
    %v5063 = vmax.f32 %v4967, %v5019
    %v5064 = vmax.f32 %v4968, %v5018
    %v5065 = vmax.f32 %v4969, %v5017
    %v5066 = vmax.f32 %v4970, %v5016
    %v5067 = vmax.f32 %v4971, %v5015
    %v5068 = vmax.f32 %v4972, %v5014
    %v5069 = vmax.f32 %v4973, %v5013
    %v5070 = vmax.f32 %v4974, %v5012
    %v5071 = vmax.f32 %v4975, %v5011
    %v5072 = vmax.f32 %v4976, %v5010
    %v5073 = vmax.f32 %v4977, %v5041
    %v5074 = vmax.f32 %v5042, %v5044
    %v5075 = vmax.f32 %v5043, %v5045
    %v5076 = vmax.f32 %v5044, %v5046
    %v5077 = vmax.f32 %v5045, %v5047
    %v5078 = vmax.f32 %v5046, %v5048
    %v5079 = vmax.f32 %v5047, %v5049
    %v5080 = vmax.f32 %v5048, %v5050
    %v5081 = vmax.f32 %v5049, %v5051
    %v5082 = vmax.f32 %v5050, %v5052
    %v5083 = vmax.f32 %v5051, %v5053
    %v5084 = vmax.f32 %v5052, %v5054
    %v5085 = vmax.f32 %v5053, %v5055
    %v5086 = vmax.f32 %v5054, %v5056
    %v5087 = vmax.f32 %v5055, %v5057
    %v5088 = vmax.f32 %v5056, %v5058
    %v5089 = vmax.f32 %v5057, %v5059
    %v5090 = vmax.f32 %v5058, %v5060
    %v5091 = vmax.f32 %v5059, %v5061
    %v5092 = vmax.f32 %v5060, %v5062
    %v5093 = vmax.f32 %v5061, %v5063
    %v5094 = vmax.f32 %v5062, %v5064
    %v5095 = vmax.f32 %v5063, %v5065
    %v5096 = vmax.f32 %v5064, %v5066
    %v5097 = vmax.f32 %v5065, %v5067
    %v5098 = vmax.f32 %v5066, %v5068
    %v5099 = vmax.f32 %v5067, %v5069
    %v5100 = vmax.f32 %v5068, %v5070
    %v5101 = vmax.f32 %v5069, %v5071
    %v5102 = vmax.f32 %v5070, %v5072
    %v5103 = vmax.f32 %v5071, %v5073
    %v5104 = vmax.f32 %v5072, %v5042
    %v5105 = vmax.f32 %v5073, %v5043
    %v5106 = vld [vmem:[#allocation6] sm:$0xff]
    %v5107 = vld [vmem:[#allocation6 + $0x8] sm:$0xff]
    %v5108 = vld [vmem:[#allocation6 + $0x10] sm:$0xff]
    %v5109 = vld [vmem:[#allocation6 + $0x18] sm:$0xff]
    %v5110 = vld [vmem:[#allocation6 + $0x20] sm:$0xff]
    %v5111 = vld [vmem:[#allocation6 + $0x28] sm:$0xff]
    %v5112 = vld [vmem:[#allocation6 + $0x30] sm:$0xff]
    %v5113 = vld [vmem:[#allocation6 + $0x38] sm:$0xff]
    %v5114 = vld [vmem:[#allocation6 + $0x40] sm:$0xff]
    %v5115 = vpack.c.bf16 %v5075, %v5074
    %v5116 = vpack.c.bf16 %v5077, %v5076
    %v5117 = vpack.c.bf16 %v5079, %v5078
    %v5118 = vpack.c.bf16 %v5081, %v5080
    %v5119 = vpack.c.bf16 %v5083, %v5082
    %v5120 = vpack.c.bf16 %v5085, %v5084
    %v5121 = vpack.c.bf16 %v5087, %v5086
    %v5122 = vpack.c.bf16 %v5089, %v5088
    %v5123 = vpack.c.bf16 %v5091, %v5090
    %v5124 = vpack.c.bf16 %v5093, %v5092
    %v5125 = vpack.c.bf16 %v5095, %v5094
    %v5126 = vpack.c.bf16 %v5097, %v5096
    %v5127 = vpack.c.bf16 %v5099, %v5098
    %v5128 = vpack.c.bf16 %v5101, %v5100
    %v5129 = vpack.c.bf16 %v5103, %v5102
    %v5130 = vpack.c.bf16 %v5105, %v5104
    %v5140 = vunpack.c.l.b16 %v5106
    %v5141 = vunpack.c.h.b16 %v5106
    %v5142 = vunpack.c.l.b16 %v5107
    %v5143 = vunpack.c.h.b16 %v5107
    %v5144 = vunpack.c.l.b16 %v5108
    %v5145 = vunpack.c.h.b16 %v5108
    %v5146 = vunpack.c.l.b16 %v5109
    %v5147 = vunpack.c.h.b16 %v5109
    %v5148 = vunpack.c.l.b16 %v5110
    %v5149 = vunpack.c.h.b16 %v5110
    %v5150 = vunpack.c.l.b16 %v5111
    %v5151 = vunpack.c.h.b16 %v5111
    %v5152 = vunpack.c.l.b16 %v5112
    %v5153 = vunpack.c.h.b16 %v5112
    %v5154 = vunpack.c.l.b16 %v5113
    %v5155 = vunpack.c.h.b16 %v5113
    %v5156 = vunpack.c.l.b16 %v5114
    %v5157 = vunpack.c.h.b16 %v5114
    %v5158 = vpack.c.b16 %v5142, %v5140
    %v5159 = vpack.c.b16 %v5143, %v5141
    %v5160 = vpack.c.b16 %v5146, %v5144
    %v5161 = vpack.c.b16 %v5147, %v5145
    %v5162 = vpack.c.b16 %v5150, %v5148
    %v5163 = vpack.c.b16 %v5151, %v5149
    %v5164 = vpack.c.b16 %v5154, %v5152
    %v5165 = vpack.c.b16 %v5155, %v5153
    %v5166 = vpack.c.b16 %v5156, %v5156
    %v5167 = vpack.c.b16 %v5157, %v5157
    %5178 = vmatprep.subr.bf16.mxu0 0
    %5179 = vmatpush1.bf16.msra.mxu0 %v5115
    %5180 = vmatprep.subr.bf16.mxu0 0
    %5181 = vmatpush1.bf16.msra.mxu0 %v5116
    %5182 = vmatprep.subr.bf16.mxu0 0
    %5183 = vmatpush1.bf16.msra.mxu0 %v5117
    %5184 = vmatprep.subr.bf16.mxu0 0
    %5185 = vmatpush1.bf16.msra.mxu0 %v5118
    %5186 = vmatprep.subr.bf16.mxu0 0
    %5187 = vmatpush1.bf16.msra.mxu0 %v5119
    %5188 = vmatprep.subr.bf16.mxu0 0
    %5189 = vmatpush1.bf16.msra.mxu0 %v5120
    %5190 = vmatprep.subr.bf16.mxu0 0
    %5191 = vmatpush1.bf16.msra.mxu0 %v5121
    %5192 = vmatprep.subr.bf16.mxu0 0
    %5193 = vmatpush1.bf16.msra.mxu0 %v5122
    %5194 = vmatprep.subr.bf16.mxu0 0
    %5195 = vmatpush1.bf16.msra.mxu0 %v5123
    %5196 = vmatprep.subr.bf16.mxu0 0
    %5197 = vmatpush1.bf16.msra.mxu0 %v5124
    %5198 = vmatprep.subr.bf16.mxu0 0
    %5199 = vmatpush1.bf16.msra.mxu0 %v5125
    %5200 = vmatprep.subr.bf16.mxu0 0
    %5201 = vmatpush1.bf16.msra.mxu0 %v5126
    %5202 = vmatprep.subr.bf16.mxu0 0
    %5203 = vmatpush1.bf16.msra.mxu0 %v5127
    %5204 = vmatprep.subr.bf16.mxu0 0
    %5205 = vmatpush1.bf16.msra.mxu0 %v5128
    %5206 = vmatprep.subr.bf16.mxu0 0
    %5207 = vmatpush1.bf16.msra.mxu0 %v5129
    %5208 = vmatprep.subr.bf16.mxu0 0
    %5209 = vmatpush1.bf16.msra.mxu0 %v5130
    %5210 = vmatprep.mubr.bf16.mxu0 %v5159
    %5211 = vmatmul.mubr.bf16.gmra.mrb[0].mxu0 %v5158
    %v5212 = vpop.f32.mrb[0].mxu0
    %v5213 = vadd.f32 0.0, %v5212
    %v5214 = vpop.f32.mrb[0].mxu0
    %v5215 = vpop.f32.mrb[0].mxu0
    %v5216 = vadd.f32 0.0, %v5215
    %v5217 = vpop.f32.mrb[0].mxu0
    %5218 = vmatprep.mubr.bf16.mxu0 %v5161
    %5219 = vmatmul.mubr.bf16.gmra.mrb[0].mxu0 %v5160
    %v5220 = vpop.f32.mrb[0].mxu0
    %v5221 = vadd.f32 0.0, %v5220
    %v5222 = vpop.f32.mrb[0].mxu0
    %v5223 = vpop.f32.mrb[0].mxu0
    %v5224 = vadd.f32 0.0, %v5223
    %v5225 = vpop.f32.mrb[0].mxu0
    %5226 = vmatprep.mubr.bf16.mxu0 %v5163
    %5227 = vmatmul.mubr.bf16.gmra.mrb[0].mxu0 %v5162
    %v5228 = vpop.f32.mrb[0].mxu0
    %v5229 = vadd.f32 0.0, %v5228
    %v5230 = vpop.f32.mrb[0].mxu0
    %v5231 = vpop.f32.mrb[0].mxu0
    %v5232 = vadd.f32 0.0, %v5231
    %v5233 = vpop.f32.mrb[0].mxu0
    %5234 = vmatprep.mubr.bf16.mxu0 %v5165
    %5235 = vmatmul.mubr.bf16.gmra.mrb[0].mxu0 %v5164
    %v5236 = vpop.f32.mrb[0].mxu0
    %v5237 = vadd.f32 0.0, %v5236
    %v5238 = vpop.f32.mrb[0].mxu0
    %v5239 = vpop.f32.mrb[0].mxu0
    %v5240 = vadd.f32 0.0, %v5239
    %v5241 = vpop.f32.mrb[0].mxu0
    %5242 = vmatprep.mubr.bf16.mxu0 %v5167
    %5243 = vmatmul.mubr.bf16.gmra.mrb[0].mxu0 %v5166
    %v5244 = vpop.f32.mrb[0].mxu0
    %v5245 = vadd.f32 0.0, %v5244
    %v5246 = vpop.f32.mrb[0].mxu0
    %v5247 = vpop.f32.mrb[0].mxu0
    %v5248 = vpop.f32.mrb[0].mxu0
    %5249 = vdwg.mxu0
    %v5250 = vrot.slane %v5213, 3
    %v5251 = vrot.slane %v5216, 3
    %v5252 = vrot.slane %v5221, 3
    %v5253 = vrot.slane %v5224, 3
    %v5254 = vrot.slane %v5229, 3
    %v5255 = vrot.slane %v5232, 3
    %v5256 = vrot.slane %v5237, 3
    %v5257 = vrot.slane %v5240, 3
    %v5258 = vrot.slane %v5245, 3
    %v5259 = vsel %vm160, %v5257, %v5258
    %v5260 = vsel %vm160, %v5256, %v5257
    %v5261 = vsel %vm160, %v5255, %v5256
    %v5262 = vsel %vm160, %v5254, %v5255
    %v5263 = vsel %vm160, %v5253, %v5254
    %v5264 = vsel %vm160, %v5252, %v5253
    %v5265 = vsel %vm160, %v5251, %v5252
    %v5266 = vsel %vm160, %v5250, %v5251
    %v5267 = vsel %vm160, %v5258, %v5250
    %v5268 = vrot.slane %v5213, 4
    %v5269 = vrot.slane %v5216, 4
    %v5270 = vrot.slane %v5221, 4
    %v5271 = vrot.slane %v5224, 4
    %v5272 = vrot.slane %v5229, 4
    %v5273 = vrot.slane %v5232, 4
    %v5274 = vrot.slane %v5237, 4
    %v5275 = vrot.slane %v5240, 4
    %v5276 = vrot.slane %v5245, 4
    %v5277 = vsel %vm225, %v5275, %v5276
    %v5278 = vsel %vm225, %v5274, %v5275
    %v5279 = vsel %vm225, %v5273, %v5274
    %v5280 = vsel %vm225, %v5272, %v5273
    %v5281 = vsel %vm225, %v5271, %v5272
    %v5282 = vsel %vm225, %v5270, %v5271
    %v5283 = vsel %vm225, %v5269, %v5270
    %v5284 = vsel %vm225, %v5268, %v5269
    %v5285 = vsel %vm225, %v5276, %v5268
    %v5286 = vrot.slane %v5213, 6
    %v5287 = vrot.slane %v5216, 6
    %v5288 = vrot.slane %v5221, 6
    %v5289 = vrot.slane %v5224, 6
    %v5290 = vrot.slane %v5229, 6
    %v5291 = vrot.slane %v5232, 6
    %v5292 = vrot.slane %v5237, 6
    %v5293 = vrot.slane %v5240, 6
    %v5294 = vrot.slane %v5245, 6
    %vm5295 = vcmp.lt.s32.totalorder %v159, 2
    %v5296 = vsel %vm5295, %v5293, %v5294
    %v5297 = vsel %vm5295, %v5292, %v5293
    %v5298 = vsel %vm5295, %v5291, %v5292
    %v5299 = vsel %vm5295, %v5290, %v5291
    %v5300 = vsel %vm5295, %v5289, %v5290
    %v5301 = vsel %vm5295, %v5288, %v5289
    %v5302 = vsel %vm5295, %v5287, %v5288
    %v5303 = vsel %vm5295, %v5286, %v5287
    %v5304 = vsel %vm5295, %v5294, %v5286
    %v5305 = vrot.slane %v5213, 7
    %v5306 = vrot.slane %v5216, 7
    %v5307 = vrot.slane %v5221, 7
    %v5308 = vrot.slane %v5224, 7
    %v5309 = vrot.slane %v5229, 7
    %v5310 = vrot.slane %v5232, 7
    %v5311 = vrot.slane %v5237, 7
    %v5312 = vrot.slane %v5240, 7
    %v5313 = vrot.slane %v5245, 7
    %v5314 = vsel %vm355, %v5312, %v5313
    %v5315 = vsel %vm355, %v5311, %v5312
    %v5316 = vsel %vm355, %v5310, %v5311
    %v5317 = vsel %vm355, %v5309, %v5310
    %v5318 = vsel %vm355, %v5308, %v5309
    %v5319 = vsel %vm355, %v5307, %v5308
    %v5320 = vsel %vm355, %v5306, %v5307
    %v5321 = vsel %vm355, %v5305, %v5306
    %v5322 = vsel %vm355, %v5313, %v5305
    %v5323 = vrot.slane %v5213, 5
    %v5324 = vrot.slane %v5216, 5
    %v5325 = vrot.slane %v5221, 5
    %v5326 = vrot.slane %v5224, 5
    %v5327 = vrot.slane %v5229, 5
    %v5328 = vrot.slane %v5232, 5
    %v5329 = vrot.slane %v5237, 5
    %v5330 = vrot.slane %v5240, 5
    %v5331 = vrot.slane %v5245, 5
    %v5332 = vsel %vm290, %v5330, %v5331
    %v5333 = vsel %vm290, %v5329, %v5330
    %v5334 = vsel %vm290, %v5328, %v5329
    %v5335 = vsel %vm290, %v5327, %v5328
    %v5336 = vsel %vm290, %v5326, %v5327
    %v5337 = vsel %vm290, %v5325, %v5326
    %v5338 = vsel %vm290, %v5324, %v5325
    %v5339 = vsel %vm290, %v5323, %v5324
    %v5340 = vsel %vm290, %v5331, %v5323
    %v5341 = vrot.slane %v5213, 1
    %v5342 = vrot.slane %v5216, 1
    %v5343 = vrot.slane %v5221, 1
    %v5344 = vrot.slane %v5224, 1
    %v5345 = vrot.slane %v5229, 1
    %v5346 = vrot.slane %v5232, 1
    %v5347 = vrot.slane %v5237, 1
    %v5348 = vrot.slane %v5240, 1
    %v5349 = vrot.slane %v5245, 1
    %v5350 = vsel %vm420, %v5348, %v5349
    %v5351 = vsel %vm420, %v5347, %v5348
    %v5352 = vsel %vm420, %v5346, %v5347
    %v5353 = vsel %vm420, %v5345, %v5346
    %v5354 = vsel %vm420, %v5344, %v5345
    %v5355 = vsel %vm420, %v5343, %v5344
    %v5356 = vsel %vm420, %v5342, %v5343
    %v5357 = vsel %vm420, %v5341, %v5342
    %v5358 = vsel %vm420, %v5349, %v5341
    %5368 = vrot.lane.b32.xlu0 %v5277, 32
    %v5369 = vpop.permute.xlu0 %5368
    %5370 = vrot.lane.b32.xlu0 %v5285, 32
    %v5371 = vpop.permute.xlu0 %5370
    %5372 = vrot.lane.b32.xlu0 %v5284, 32
    %v5373 = vpop.permute.xlu0 %5372
    %5374 = vrot.lane.b32.xlu0 %v5283, 32
    %v5375 = vpop.permute.xlu0 %5374
    %5376 = vrot.lane.b32.xlu0 %v5282, 32
    %v5377 = vpop.permute.xlu0 %5376
    %5378 = vrot.lane.b32.xlu0 %v5281, 32
    %v5379 = vpop.permute.xlu0 %5378
    %5380 = vrot.lane.b32.xlu0 %v5280, 32
    %v5381 = vpop.permute.xlu0 %5380
    %5382 = vrot.lane.b32.xlu0 %v5279, 32
    %v5383 = vpop.permute.xlu0 %5382
    %5384 = vrot.lane.b32.xlu0 %v5278, 32
    %v5385 = vpop.permute.xlu0 %5384
    %5404 = vrot.lane.b32.xlu0 %v5296, 64
    %v5405 = vpop.permute.xlu0 %5404
    %5406 = vrot.lane.b32.xlu0 %v5304, 64
    %v5407 = vpop.permute.xlu0 %5406
    %5408 = vrot.lane.b32.xlu0 %v5303, 64
    %v5409 = vpop.permute.xlu0 %5408
    %5410 = vrot.lane.b32.xlu0 %v5302, 64
    %v5411 = vpop.permute.xlu0 %5410
    %5412 = vrot.lane.b32.xlu0 %v5301, 64
    %v5413 = vpop.permute.xlu0 %5412
    %5414 = vrot.lane.b32.xlu0 %v5300, 64
    %v5415 = vpop.permute.xlu0 %5414
    %5416 = vrot.lane.b32.xlu0 %v5299, 64
    %v5417 = vpop.permute.xlu0 %5416
    %5418 = vrot.lane.b32.xlu0 %v5298, 64
    %v5419 = vpop.permute.xlu0 %5418
    %5420 = vrot.lane.b32.xlu0 %v5297, 64
    %v5421 = vpop.permute.xlu0 %5420
    %5440 = vrot.lane.b32.xlu0 %v5314, 96
    %v5441 = vpop.permute.xlu0 %5440
    %5442 = vrot.lane.b32.xlu0 %v5322, 96
    %v5443 = vpop.permute.xlu0 %5442
    %5444 = vrot.lane.b32.xlu0 %v5321, 96
    %v5445 = vpop.permute.xlu0 %5444
    %5446 = vrot.lane.b32.xlu0 %v5320, 96
    %v5447 = vpop.permute.xlu0 %5446
    %5448 = vrot.lane.b32.xlu0 %v5319, 96
    %v5449 = vpop.permute.xlu0 %5448
    %5450 = vrot.lane.b32.xlu0 %v5318, 96
    %v5451 = vpop.permute.xlu0 %5450
    %5452 = vrot.lane.b32.xlu0 %v5317, 96
    %v5453 = vpop.permute.xlu0 %5452
    %5454 = vrot.lane.b32.xlu0 %v5316, 96
    %v5455 = vpop.permute.xlu0 %5454
    %5456 = vrot.lane.b32.xlu0 %v5315, 96
    %v5457 = vpop.permute.xlu0 %5456
    %5476 = vrot.lane.b32.xlu0 %v5340, 32
    %v5477 = vpop.permute.xlu0 %5476
    %5478 = vrot.lane.b32.xlu0 %v5339, 32
    %v5479 = vpop.permute.xlu0 %5478
    %5480 = vrot.lane.b32.xlu0 %v5338, 32
    %v5481 = vpop.permute.xlu0 %5480
    %5482 = vrot.lane.b32.xlu0 %v5337, 32
    %v5483 = vpop.permute.xlu0 %5482
    %5484 = vrot.lane.b32.xlu0 %v5336, 32
    %v5485 = vpop.permute.xlu0 %5484
    %5486 = vrot.lane.b32.xlu0 %v5335, 32
    %v5487 = vpop.permute.xlu0 %5486
    %5488 = vrot.lane.b32.xlu0 %v5334, 32
    %v5489 = vpop.permute.xlu0 %5488
    %5490 = vrot.lane.b32.xlu0 %v5333, 32
    %v5491 = vpop.permute.xlu0 %5490
    %5492 = vrot.lane.b32.xlu0 %v5332, 32
    %v5493 = vpop.permute.xlu0 %5492
    %5503 = vrot.lane.b32.xlu0 %v5322, 64
    %v5504 = vpop.permute.xlu0 %5503
    %5505 = vrot.lane.b32.xlu0 %v5321, 64
    %v5506 = vpop.permute.xlu0 %5505
    %5507 = vrot.lane.b32.xlu0 %v5320, 64
    %v5508 = vpop.permute.xlu0 %5507
    %5509 = vrot.lane.b32.xlu0 %v5319, 64
    %v5510 = vpop.permute.xlu0 %5509
    %5511 = vrot.lane.b32.xlu0 %v5318, 64
    %v5512 = vpop.permute.xlu0 %5511
    %5513 = vrot.lane.b32.xlu0 %v5317, 64
    %v5514 = vpop.permute.xlu0 %5513
    %5515 = vrot.lane.b32.xlu0 %v5316, 64
    %v5516 = vpop.permute.xlu0 %5515
    %5517 = vrot.lane.b32.xlu0 %v5315, 64
    %v5518 = vpop.permute.xlu0 %5517
    %5519 = vrot.lane.b32.xlu0 %v5314, 64
    %v5520 = vpop.permute.xlu0 %5519
    %5539 = vrot.lane.b32.xlu0 %v5213, 96
    %v5540 = vpop.permute.xlu0 %5539
    %5541 = vrot.lane.b32.xlu0 %v5216, 96
    %v5542 = vpop.permute.xlu0 %5541
    %5543 = vrot.lane.b32.xlu0 %v5221, 96
    %v5544 = vpop.permute.xlu0 %5543
    %5545 = vrot.lane.b32.xlu0 %v5224, 96
    %v5546 = vpop.permute.xlu0 %5545
    %5547 = vrot.lane.b32.xlu0 %v5229, 96
    %v5548 = vpop.permute.xlu0 %5547
    %5549 = vrot.lane.b32.xlu0 %v5232, 96
    %v5550 = vpop.permute.xlu0 %5549
    %5551 = vrot.lane.b32.xlu0 %v5237, 96
    %v5552 = vpop.permute.xlu0 %5551
    %5553 = vrot.lane.b32.xlu0 %v5240, 96
    %v5554 = vpop.permute.xlu0 %5553
    %5555 = vrot.lane.b32.xlu0 %v5245, 96
    %v5556 = vpop.permute.xlu0 %5555
    %5566 = vrot.lane.b32.xlu0 %v5303, 32
    %v5567 = vpop.permute.xlu0 %5566
    %5568 = vrot.lane.b32.xlu0 %v5302, 32
    %v5569 = vpop.permute.xlu0 %5568
    %5570 = vrot.lane.b32.xlu0 %v5301, 32
    %v5571 = vpop.permute.xlu0 %5570
    %5572 = vrot.lane.b32.xlu0 %v5300, 32
    %v5573 = vpop.permute.xlu0 %5572
    %5574 = vrot.lane.b32.xlu0 %v5299, 32
    %v5575 = vpop.permute.xlu0 %5574
    %5576 = vrot.lane.b32.xlu0 %v5298, 32
    %v5577 = vpop.permute.xlu0 %5576
    %5578 = vrot.lane.b32.xlu0 %v5297, 32
    %v5579 = vpop.permute.xlu0 %5578
    %5580 = vrot.lane.b32.xlu0 %v5296, 32
    %v5581 = vpop.permute.xlu0 %5580
    %5582 = vrot.lane.b32.xlu0 %v5304, 32
    %v5583 = vpop.permute.xlu0 %5582
    %5593 = vrot.lane.b32.xlu0 %v5216, 64
    %v5594 = vpop.permute.xlu0 %5593
    %5595 = vrot.lane.b32.xlu0 %v5221, 64
    %v5596 = vpop.permute.xlu0 %5595
    %5597 = vrot.lane.b32.xlu0 %v5224, 64
    %v5598 = vpop.permute.xlu0 %5597
    %5599 = vrot.lane.b32.xlu0 %v5229, 64
    %v5600 = vpop.permute.xlu0 %5599
    %5601 = vrot.lane.b32.xlu0 %v5232, 64
    %v5602 = vpop.permute.xlu0 %5601
    %5603 = vrot.lane.b32.xlu0 %v5237, 64
    %v5604 = vpop.permute.xlu0 %5603
    %5605 = vrot.lane.b32.xlu0 %v5240, 64
    %v5606 = vpop.permute.xlu0 %5605
    %5607 = vrot.lane.b32.xlu0 %v5245, 64
    %v5608 = vpop.permute.xlu0 %5607
    %5609 = vrot.lane.b32.xlu0 %v5213, 64
    %v5610 = vpop.permute.xlu0 %5609
    %5629 = vrot.lane.b32.xlu0 %v5356, 96
    %v5630 = vpop.permute.xlu0 %5629
    %5631 = vrot.lane.b32.xlu0 %v5355, 96
    %v5632 = vpop.permute.xlu0 %5631
    %5633 = vrot.lane.b32.xlu0 %v5354, 96
    %v5634 = vpop.permute.xlu0 %5633
    %5635 = vrot.lane.b32.xlu0 %v5353, 96
    %v5636 = vpop.permute.xlu0 %5635
    %5637 = vrot.lane.b32.xlu0 %v5352, 96
    %v5638 = vpop.permute.xlu0 %5637
    %5639 = vrot.lane.b32.xlu0 %v5351, 96
    %v5640 = vpop.permute.xlu0 %5639
    %5641 = vrot.lane.b32.xlu0 %v5350, 96
    %v5642 = vpop.permute.xlu0 %5641
    %5643 = vrot.lane.b32.xlu0 %v5358, 96
    %v5644 = vpop.permute.xlu0 %5643
    %5645 = vrot.lane.b32.xlu0 %v5357, 96
    %v5646 = vpop.permute.xlu0 %5645
    %v5656 = vsel %vm3988, %v5259, %v5369
    %v5657 = vsel %vm3988, %v5267, %v5371
    %v5658 = vsel %vm3988, %v5266, %v5373
    %v5659 = vsel %vm3988, %v5265, %v5375
    %v5660 = vsel %vm3988, %v5264, %v5377
    %v5661 = vsel %vm3988, %v5263, %v5379
    %v5662 = vsel %vm3988, %v5262, %v5381
    %v5663 = vsel %vm3988, %v5261, %v5383
    %v5664 = vsel %vm3988, %v5260, %v5385
    %vm5665 = vcmask 523264
    %v5666 = vsel %vm5665, %v5656, %v5405
    %v5667 = vsel %vm5665, %v5657, %v5407
    %v5668 = vsel %vm5665, %v5658, %v5409
    %v5669 = vsel %vm5665, %v5659, %v5411
    %v5670 = vsel %vm5665, %v5660, %v5413
    %v5671 = vsel %vm5665, %v5661, %v5415
    %v5672 = vsel %vm5665, %v5662, %v5417
    %v5673 = vsel %vm5665, %v5663, %v5419
    %v5674 = vsel %vm5665, %v5664, %v5421
    %vm5675 = vcmask 785408
    %v5676 = vsel %vm5675, %v5666, %v5441
    %v5677 = vsel %vm5675, %v5667, %v5443
    %v5678 = vsel %vm5675, %v5668, %v5445
    %v5679 = vsel %vm5675, %v5669, %v5447
    %v5680 = vsel %vm5675, %v5670, %v5449
    %v5681 = vsel %vm5675, %v5671, %v5451
    %v5682 = vsel %vm5675, %v5672, %v5453
    %v5683 = vsel %vm5675, %v5673, %v5455
    %v5684 = vsel %vm5675, %v5674, %v5457
    %v5685 = vsel %vm3988, %v5285, %v5477
    %v5686 = vsel %vm3988, %v5284, %v5479
    %v5687 = vsel %vm3988, %v5283, %v5481
    %v5688 = vsel %vm3988, %v5282, %v5483
    %v5689 = vsel %vm3988, %v5281, %v5485
    %v5690 = vsel %vm3988, %v5280, %v5487
    %v5691 = vsel %vm3988, %v5279, %v5489
    %v5692 = vsel %vm3988, %v5278, %v5491
    %v5693 = vsel %vm3988, %v5277, %v5493
    %v5694 = vsel %vm5665, %v5685, %v5504
    %v5695 = vsel %vm5665, %v5686, %v5506
    %v5696 = vsel %vm5665, %v5687, %v5508
    %v5697 = vsel %vm5665, %v5688, %v5510
    %v5698 = vsel %vm5665, %v5689, %v5512
    %v5699 = vsel %vm5665, %v5690, %v5514
    %v5700 = vsel %vm5665, %v5691, %v5516
    %v5701 = vsel %vm5665, %v5692, %v5518
    %v5702 = vsel %vm5665, %v5693, %v5520
    %v5703 = vsel %vm5675, %v5694, %v5540
    %v5704 = vsel %vm5675, %v5695, %v5542
    %v5705 = vsel %vm5675, %v5696, %v5544
    %v5706 = vsel %vm5675, %v5697, %v5546
    %v5707 = vsel %vm5675, %v5698, %v5548
    %v5708 = vsel %vm5675, %v5699, %v5550
    %v5709 = vsel %vm5675, %v5700, %v5552
    %v5710 = vsel %vm5675, %v5701, %v5554
    %v5711 = vsel %vm5675, %v5702, %v5556
    %v5712 = vsel %vm3988, %v5339, %v5567
    %v5713 = vsel %vm3988, %v5338, %v5569
    %v5714 = vsel %vm3988, %v5337, %v5571
    %v5715 = vsel %vm3988, %v5336, %v5573
    %v5716 = vsel %vm3988, %v5335, %v5575
    %v5717 = vsel %vm3988, %v5334, %v5577
    %v5718 = vsel %vm3988, %v5333, %v5579
    %v5719 = vsel %vm3988, %v5332, %v5581
    %v5720 = vsel %vm3988, %v5340, %v5583
    %v5721 = vsel %vm5665, %v5712, %v5594
    %v5722 = vsel %vm5665, %v5713, %v5596
    %v5723 = vsel %vm5665, %v5714, %v5598
    %v5724 = vsel %vm5665, %v5715, %v5600
    %v5725 = vsel %vm5665, %v5716, %v5602
    %v5726 = vsel %vm5665, %v5717, %v5604
    %v5727 = vsel %vm5665, %v5718, %v5606
    %v5728 = vsel %vm5665, %v5719, %v5608
    %v5729 = vsel %vm5665, %v5720, %v5610
    %v5730 = vsel %vm5675, %v5721, %v5630
    %v5731 = vsel %vm5675, %v5722, %v5632
    %v5732 = vsel %vm5675, %v5723, %v5634
    %v5733 = vsel %vm5675, %v5724, %v5636
    %v5734 = vsel %vm5675, %v5725, %v5638
    %v5735 = vsel %vm5675, %v5726, %v5640
    %v5736 = vsel %vm5675, %v5727, %v5642
    %v5737 = vsel %vm5675, %v5728, %v5644
    %v5738 = vsel %vm5675, %v5729, %v5646
    %v5739 = vld [vmem:[%s5] sm:$0xff]
    %v5740 = vld [vmem:[%s5 + $0x8] sm:$0xff]
    %v5741 = vld [vmem:[%s5 + $0x10] sm:$0xff]
    %v5742 = vld [vmem:[%s5 + $0x18] sm:$0xff]
    %v5743 = vld [vmem:[%s5 + $0x20] sm:$0xff]
    %v5744 = vld [vmem:[%s5 + $0x28] sm:$0xff]
    %v5745 = vld [vmem:[%s5 + $0x30] sm:$0xff]
    %v5746 = vld [vmem:[%s5 + $0x38] sm:$0xff]
    %v5747 = vld [vmem:[%s5 + $0x40] sm:$0xff]
    %v5748 = vld [vmem:[%s5 + $0x48] sm:$0xff]
    %v5749 = vld [vmem:[%s5 + $0x50] sm:$0xff]
    %v5750 = vld [vmem:[%s5 + $0x58] sm:$0xff]
    %v5751 = vld [vmem:[%s5 + $0x60] sm:$0xff]
    %v5752 = vld [vmem:[%s5 + $0x68] sm:$0xff]
    %v5753 = vld [vmem:[%s5 + $0x70] sm:$0xff]
    %v5754 = vld [vmem:[%s5 + $0x78] sm:$0xff]
    %v5755 = vld [vmem:[%s5 + $0x80] sm:$0xff]
    %v5756 = vld [vmem:[%s5 + $0x88] sm:$0xff]
    %v5757 = vld [vmem:[%s5 + $0x90] sm:$0xff]
    %v5758 = vld [vmem:[%s5 + $0x98] sm:$0xff]
    %v5759 = vld [vmem:[%s5 + $0xa0] sm:$0xff]
    %v5760 = vld [vmem:[%s5 + $0xa8] sm:$0xff]
    %v5761 = vld [vmem:[%s5 + $0xb0] sm:$0xff]
    %v5762 = vld [vmem:[%s5 + $0xb8] sm:$0xff]
    %v5763 = vld [vmem:[%s5 + $0xc0] sm:$0xff]
    %v5764 = vld [vmem:[%s5 + $0xc8] sm:$0xff]
    %v5765 = vld [vmem:[%s5 + $0xd0] sm:$0xff]
    %v5766 = vmul.f32 %v5676, %v5739
    %v5767 = vmul.f32 %v5703, %v5740
    %v5768 = vmul.f32 %v5730, %v5741
    %v5769 = vmul.f32 %v5677, %v5742
    %v5770 = vmul.f32 %v5704, %v5743
    %v5771 = vmul.f32 %v5731, %v5744
    %v5772 = vmul.f32 %v5678, %v5745
    %v5773 = vmul.f32 %v5705, %v5746
    %v5774 = vmul.f32 %v5732, %v5747
    %v5775 = vmul.f32 %v5679, %v5748
    %v5776 = vmul.f32 %v5706, %v5749
    %v5777 = vmul.f32 %v5733, %v5750
    %v5778 = vmul.f32 %v5680, %v5751
    %v5779 = vmul.f32 %v5707, %v5752
    %v5780 = vmul.f32 %v5734, %v5753
    %v5781 = vmul.f32 %v5681, %v5754
    %v5782 = vmul.f32 %v5708, %v5755
    %v5783 = vmul.f32 %v5735, %v5756
    %v5784 = vmul.f32 %v5682, %v5757
    %v5785 = vmul.f32 %v5709, %v5758
    %v5786 = vmul.f32 %v5736, %v5759
    %v5787 = vmul.f32 %v5683, %v5760
    %v5788 = vmul.f32 %v5710, %v5761
    %v5789 = vmul.f32 %v5737, %v5762
    %v5790 = vmul.f32 %v5684, %v5763
    %v5791 = vmul.f32 %v5711, %v5764
    %v5792 = vmul.f32 %v5738, %v5765
    %v5793 = vpack.c.bf16 %v5769, %v5766
    %v5794 = vpack.c.bf16 %v5770, %v5767
    %v5795 = vpack.c.bf16 %v5771, %v5768
    %v5796 = vpack.c.bf16 %v5775, %v5772
    %v5797 = vpack.c.bf16 %v5776, %v5773
    %v5798 = vpack.c.bf16 %v5777, %v5774
    %v5799 = vpack.c.bf16 %v5781, %v5778
    %v5800 = vpack.c.bf16 %v5782, %v5779
    %v5801 = vpack.c.bf16 %v5783, %v5780
    %v5802 = vpack.c.bf16 %v5787, %v5784
    %v5803 = vpack.c.bf16 %v5788, %v5785
    %v5804 = vpack.c.bf16 %v5789, %v5786
    %v5805 = vpack.c.bf16 %v5790, %v5790
    %v5806 = vpack.c.bf16 %v5791, %v5791
    %v5807 = vpack.c.bf16 %v5792, %v5792
    %v5808 = vld [vmem:[#allocation7] sm:$0xf]
    %v5809 = vld [vmem:[#allocation7 + $0x4] sm:$0xf]
    %v5810 = vld [vmem:[#allocation7 + $0x8] sm:$0xf]
    %v5811 = vld [vmem:[#allocation7 + $0xc] sm:$0xf]
    %v5812 = vld [vmem:[#allocation7 + $0x10] sm:$0xf]
    %v5813 = vld [vmem:[#allocation7 + $0x14] sm:$0xf]
    %v5814 = vld [vmem:[#allocation7 + $0x18] sm:$0xf]
    %v5815 = vld [vmem:[#allocation7 + $0x1c] sm:$0xf]
    %v5816 = vld [vmem:[#allocation7 + $0x20] sm:$0xf]
    %v5817 = vld [vmem:[#allocation7 + $0x24] sm:$0xf]
    %v5818 = vld [vmem:[#allocation7 + $0x28] sm:$0xf]
    %v5819 = vld [vmem:[#allocation7 + $0x2c] sm:$0xf]
    %v5820 = vld [vmem:[#allocation7 + $0x30] sm:$0xf]
    %v5821 = vld [vmem:[#allocation7 + $0x34] sm:$0xf]
    %v5822 = vld [vmem:[#allocation7 + $0x38] sm:$0xf]
    %v5823 = vld [vmem:[#allocation7 + $0x3c] sm:$0xf]
    %v5824 = vld [vmem:[#allocation7 + $0x40] sm:$0xf]
    %v5825 = vld [vmem:[#allocation7 + $0x44] sm:$0xf]
    %v5826 = vld [vmem:[#allocation7 + $0x48] sm:$0xf]
    %v5827 = vld [vmem:[#allocation7 + $0x4c] sm:$0xf]
    %v5828 = vld [vmem:[#allocation7 + $0x50] sm:$0xf]
    %v5829 = vld [vmem:[#allocation7 + $0x54] sm:$0xf]
    %v5830 = vld [vmem:[#allocation7 + $0x58] sm:$0xf]
    %v5831 = vld [vmem:[#allocation7 + $0x5c] sm:$0xf]
    %v5832 = vld [vmem:[#allocation7 + $0x60] sm:$0xf]
    %v5833 = vld [vmem:[#allocation7 + $0x64] sm:$0xf]
    %v5834 = vld [vmem:[#allocation7 + $0x68] sm:$0xf]
    %v5835 = vld [vmem:[#allocation7 + $0x6c] sm:$0xf]
    %v5836 = vld [vmem:[#allocation7 + $0x70] sm:$0xf]
    %v5837 = vld [vmem:[#allocation7 + $0x74] sm:$0xf]
    %v5838 = vld [vmem:[#allocation7 + $0x78] sm:$0xf]
    %v5839 = vld [vmem:[#allocation7 + $0x7c] sm:$0xf]
    %v5840 = vld [vmem:[#allocation7 + $0x80] sm:$0xf]
    %v5841 = vld [vmem:[#allocation7 + $0x84] sm:$0xf]
    %v5842 = vld [vmem:[#allocation7 + $0x88] sm:$0xf]
    %v5843 = vld [vmem:[#allocation7 + $0x8c] sm:$0xf]
    %v5844 = vld [vmem:[#allocation7 + $0x90] sm:$0xf]
    %v5845 = vld [vmem:[#allocation7 + $0x94] sm:$0xf]
    %v5846 = vld [vmem:[#allocation7 + $0x98] sm:$0xf]
    %v5847 = vld [vmem:[#allocation7 + $0x9c] sm:$0xf]
    %v5848 = vld [vmem:[#allocation7 + $0xa0] sm:$0xf]
    %v5849 = vld [vmem:[#allocation7 + $0xa4] sm:$0xf]
    %v5850 = vld [vmem:[#allocation7 + $0xa8] sm:$0xf]
    %v5851 = vld [vmem:[#allocation7 + $0xac] sm:$0xf]
    %v5852 = vld [vmem:[#allocation7 + $0xb0] sm:$0xf]
    %v5853 = vld [vmem:[#allocation7 + $0xb4] sm:$0xf]
    %v5854 = vld [vmem:[#allocation7 + $0xb8] sm:$0xf]
    %v5855 = vld [vmem:[#allocation7 + $0xbc] sm:$0xf]
    %v5856 = vld [vmem:[%s3 + $0x3] sm:$0x1]
    %v5857 = vlaneseq
    %v5858 = vshrl.u32 %v5857, 7
    %v5859 = vsub.s32 0, %v5858
    %v5860 = vrot.slane %v5856, %v5859
    %v5909 = vunpack.c.l.b16 %v5808
    %v5910 = vunpack.c.l.b16 %v5809
    %v5911 = vunpack.c.l.b16 %v5810
    %v5912 = vunpack.c.l.b16 %v5811
    %v5913 = vunpack.c.l.b16 %v5812
    %v5914 = vunpack.c.l.b16 %v5813
    %v5915 = vunpack.c.l.b16 %v5814
    %v5916 = vunpack.c.l.b16 %v5815
    %v5917 = vunpack.c.l.b16 %v5816
    %v5918 = vunpack.c.l.b16 %v5817
    %v5919 = vunpack.c.l.b16 %v5818
    %v5920 = vunpack.c.l.b16 %v5819
    %v5921 = vunpack.c.l.b16 %v5820
    %v5922 = vunpack.c.l.b16 %v5821
    %v5923 = vunpack.c.l.b16 %v5822
    %v5924 = vunpack.c.l.b16 %v5823
    %v5925 = vunpack.c.l.b16 %v5824
    %v5926 = vunpack.c.l.b16 %v5825
    %v5927 = vunpack.c.l.b16 %v5826
    %v5928 = vunpack.c.l.b16 %v5827
    %v5929 = vunpack.c.l.b16 %v5828
    %v5930 = vunpack.c.l.b16 %v5829
    %v5931 = vunpack.c.l.b16 %v5830
    %v5932 = vunpack.c.l.b16 %v5831
    %v5933 = vunpack.c.l.b16 %v5832
    %v5934 = vunpack.c.l.b16 %v5833
    %v5935 = vunpack.c.l.b16 %v5834
    %v5936 = vunpack.c.l.b16 %v5835
    %v5937 = vunpack.c.l.b16 %v5836
    %v5938 = vunpack.c.l.b16 %v5837
    %v5939 = vunpack.c.l.b16 %v5838
    %v5940 = vunpack.c.l.b16 %v5839
    %v5941 = vunpack.c.l.b16 %v5840
    %v5942 = vunpack.c.l.b16 %v5841
    %v5943 = vunpack.c.l.b16 %v5842
    %v5944 = vunpack.c.l.b16 %v5843
    %v5945 = vunpack.c.l.b16 %v5844
    %v5946 = vunpack.c.l.b16 %v5845
    %v5947 = vunpack.c.l.b16 %v5846
    %v5948 = vunpack.c.l.b16 %v5847
    %v5949 = vunpack.c.l.b16 %v5848
    %v5950 = vunpack.c.l.b16 %v5849
    %v5951 = vunpack.c.l.b16 %v5850
    %v5952 = vunpack.c.l.b16 %v5851
    %v5953 = vunpack.c.l.b16 %v5852
    %v5954 = vunpack.c.l.b16 %v5853
    %v5955 = vunpack.c.l.b16 %v5854
    %v5956 = vunpack.c.l.b16 %v5855
    %v5957 = vpack.c.b16 %v5910, %v5909
    %v5958 = vpack.c.b16 %v5912, %v5911
    %v5959 = vpack.c.b16 %v5914, %v5913
    %v5960 = vpack.c.b16 %v5916, %v5915
    %v5961 = vpack.c.b16 %v5918, %v5917
    %v5962 = vpack.c.b16 %v5920, %v5919
    %v5963 = vpack.c.b16 %v5922, %v5921
    %v5964 = vpack.c.b16 %v5924, %v5923
    %v5965 = vpack.c.b16 %v5926, %v5925
    %v5966 = vpack.c.b16 %v5928, %v5927
    %v5967 = vpack.c.b16 %v5930, %v5929
    %v5968 = vpack.c.b16 %v5932, %v5931
    %v5969 = vpack.c.b16 %v5934, %v5933
    %v5970 = vpack.c.b16 %v5936, %v5935
    %v5971 = vpack.c.b16 %v5938, %v5937
    %v5972 = vpack.c.b16 %v5940, %v5939
    %v5973 = vpack.c.b16 %v5942, %v5941
    %v5974 = vpack.c.b16 %v5944, %v5943
    %v5975 = vpack.c.b16 %v5946, %v5945
    %v5976 = vpack.c.b16 %v5948, %v5947
    %v5977 = vpack.c.b16 %v5950, %v5949
    %v5978 = vpack.c.b16 %v5952, %v5951
    %v5979 = vpack.c.b16 %v5954, %v5953
    %v5980 = vpack.c.b16 %v5956, %v5955
    %6005 = vmatprep.subr.bf16.mxu0 0
    %6006 = vmatpush1.bf16.msra.mxu0 %v5957
    %6007 = vmatprep.subr.bf16.mxu0 0
    %6008 = vmatpush1.bf16.msra.mxu0 %v5958
    %6009 = vmatprep.subr.bf16.mxu0 0
    %6010 = vmatpush1.bf16.msra.mxu0 %v5959
    %6011 = vmatprep.subr.bf16.mxu0 0
    %6012 = vmatpush1.bf16.msra.mxu0 %v5960
    %6013 = vmatprep.subr.bf16.mxu0 0
    %6014 = vmatpush1.bf16.msra.mxu0 %v5961
    %6015 = vmatprep.subr.bf16.mxu0 0
    %6016 = vmatpush1.bf16.msra.mxu0 %v5962
    %6017 = vmatprep.subr.bf16.mxu0 0
    %6018 = vmatpush1.bf16.msra.mxu0 %v5963
    %6019 = vmatprep.subr.bf16.mxu0 0
    %6020 = vmatpush1.bf16.msra.mxu0 %v5964
    %6021 = vmatprep.subr.bf16.mxu0 0
    %6022 = vmatpush1.bf16.msra.mxu0 %v5965
    %6023 = vmatprep.subr.bf16.mxu0 0
    %6024 = vmatpush1.bf16.msra.mxu0 %v5966
    %6025 = vmatprep.subr.bf16.mxu0 0
    %6026 = vmatpush1.bf16.msra.mxu0 %v5967
    %6027 = vmatprep.subr.bf16.mxu0 0
    %6028 = vmatpush1.bf16.msra.mxu0 %v5968
    %6029 = vmatprep.subr.bf16.mxu0 0
    %6030 = vmatpush1.bf16.msra.mxu0 %v5969
    %6031 = vmatprep.subr.bf16.mxu0 0
    %6032 = vmatpush1.bf16.msra.mxu0 %v5970
    %6033 = vmatprep.subr.bf16.mxu0 0
    %6034 = vmatpush1.bf16.msra.mxu0 %v5971
    %6035 = vmatprep.subr.bf16.mxu0 0
    %6036 = vmatpush1.bf16.msra.mxu0 %v5972
    %6037 = vmatprep.mubr.bf16.mxu0 %v5794
    %6038 = vmatmul.mubr.bf16.gmra.mrb[0].mxu0 %v5793
    %v6039 = vpop.f32.mrb[0].mxu0
    %v6040 = vadd.f32 %v5860, %v6039
    %v6041 = vpop.f32.mrb[0].mxu0
    %v6042 = vpop.f32.mrb[0].mxu0
    %v6043 = vadd.f32 %v5860, %v6042
    %v6044 = vpop.f32.mrb[0].mxu0
    %6045 = vmatprep.mubr.bf16.mxu0 %v5797
    %6046 = vmatmul.mubr.bf16.gmra.mrb[0].mxu0 %v5796
    %v6047 = vpop.f32.mrb[0].mxu0
    %v6048 = vadd.f32 %v5860, %v6047
    %v6049 = vpop.f32.mrb[0].mxu0
    %v6050 = vpop.f32.mrb[0].mxu0
    %v6051 = vadd.f32 %v5860, %v6050
    %v6052 = vpop.f32.mrb[0].mxu0
    %6053 = vmatprep.mubr.bf16.mxu0 %v5800
    %6054 = vmatmul.mubr.bf16.gmra.mrb[0].mxu0 %v5799
    %v6055 = vpop.f32.mrb[0].mxu0
    %v6056 = vadd.f32 %v5860, %v6055
    %v6057 = vpop.f32.mrb[0].mxu0
    %v6058 = vpop.f32.mrb[0].mxu0
    %v6059 = vadd.f32 %v5860, %v6058
    %v6060 = vpop.f32.mrb[0].mxu0
    %6061 = vmatprep.mubr.bf16.mxu0 %v5803
    %6062 = vmatmul.mubr.bf16.gmra.mrb[0].mxu0 %v5802
    %v6063 = vpop.f32.mrb[0].mxu0
    %v6064 = vadd.f32 %v5860, %v6063
    %v6065 = vpop.f32.mrb[0].mxu0
    %v6066 = vpop.f32.mrb[0].mxu0
    %v6067 = vadd.f32 %v5860, %v6066
    %v6068 = vpop.f32.mrb[0].mxu0
    %6069 = vmatprep.mubr.bf16.mxu0 %v5806
    %6070 = vmatmul.mubr.bf16.gmra.mrb[0].mxu0 %v5805
    %v6071 = vpop.f32.mrb[0].mxu0
    %v6072 = vadd.f32 %v5860, %v6071
    %v6073 = vpop.f32.mrb[0].mxu0
    %v6074 = vpop.f32.mrb[0].mxu0
    %v6075 = vpop.f32.mrb[0].mxu0
    %6076 = vdwg.mxu0
    %6077 = vmatprep.subr.bf16.mxu0 0
    %6078 = vmatpush1.bf16.msra.mxu0 %v5973
    %6079 = vmatprep.subr.bf16.mxu0 0
    %6080 = vmatpush1.bf16.msra.mxu0 %v5974
    %6081 = vmatprep.subr.bf16.mxu0 0
    %6082 = vmatpush1.bf16.msra.mxu0 %v5975
    %6083 = vmatprep.subr.bf16.mxu0 0
    %6084 = vmatpush1.bf16.msra.mxu0 %v5976
    %6085 = vmatprep.subr.bf16.mxu0 0
    %6086 = vmatpush1.bf16.msra.mxu0 %v5977
    %6087 = vmatprep.subr.bf16.mxu0 0
    %6088 = vmatpush1.bf16.msra.mxu0 %v5978
    %6089 = vmatprep.subr.bf16.mxu0 0
    %6090 = vmatpush1.bf16.msra.mxu0 %v5979
    %6091 = vmatprep.subr.bf16.mxu0 0
    %6092 = vmatpush1.bf16.msra.mxu0 %v5980
    %6093 = vmatprep.subr.bf16.mxu0 0
    %6094 = vmatpush1.bf16.msra.mxu0 0
    %6095 = vmatprep.subr.bf16.mxu0 0
    %6096 = vmatpush1.bf16.msra.mxu0 0
    %6097 = vmatprep.subr.bf16.mxu0 0
    %6098 = vmatpush1.bf16.msra.mxu0 0
    %6099 = vmatprep.subr.bf16.mxu0 0
    %6100 = vmatpush1.bf16.msra.mxu0 0
    %6101 = vmatprep.subr.bf16.mxu0 0
    %6102 = vmatpush1.bf16.msra.mxu0 0
    %6103 = vmatprep.subr.bf16.mxu0 0
    %6104 = vmatpush1.bf16.msra.mxu0 0
    %6105 = vmatprep.subr.bf16.mxu0 0
    %6106 = vmatpush1.bf16.msra.mxu0 0
    %6107 = vmatprep.subr.bf16.mxu0 0
    %6108 = vmatpush1.bf16.msra.mxu0 0
    %6109 = vmatprep.mubr.bf16.mxu0 0
    %6110 = vmatmul.mubr.bf16.gmra.mrb[0].mxu0 %v5795
    %v6111 = vpop.f32.mrb[0].mxu0
    %v6112 = vadd.f32 %v6040, %v6111
    %v6113 = vpop.f32.mrb[0].mxu0
    %v6114 = vpop.f32.mrb[0].mxu0
    %v6115 = vadd.f32 %v6043, %v6114
    %v6116 = vpop.f32.mrb[0].mxu0
    %6117 = vmatprep.mubr.bf16.mxu0 0
    %6118 = vmatmul.mubr.bf16.gmra.mrb[0].mxu0 %v5798
    %v6119 = vpop.f32.mrb[0].mxu0
    %v6120 = vadd.f32 %v6048, %v6119
    %v6121 = vpop.f32.mrb[0].mxu0
    %v6122 = vpop.f32.mrb[0].mxu0
    %v6123 = vadd.f32 %v6051, %v6122
    %v6124 = vpop.f32.mrb[0].mxu0
    %6125 = vmatprep.mubr.bf16.mxu0 0
    %6126 = vmatmul.mubr.bf16.gmra.mrb[0].mxu0 %v5801
    %v6127 = vpop.f32.mrb[0].mxu0
    %v6128 = vadd.f32 %v6056, %v6127
    %v6129 = vpop.f32.mrb[0].mxu0
    %v6130 = vpop.f32.mrb[0].mxu0
    %v6131 = vadd.f32 %v6059, %v6130
    %v6132 = vpop.f32.mrb[0].mxu0
    %6133 = vmatprep.mubr.bf16.mxu0 0
    %6134 = vmatmul.mubr.bf16.gmra.mrb[0].mxu0 %v5804
    %v6135 = vpop.f32.mrb[0].mxu0
    %v6136 = vadd.f32 %v6064, %v6135
    %v6137 = vpop.f32.mrb[0].mxu0
    %v6138 = vpop.f32.mrb[0].mxu0
    %v6139 = vadd.f32 %v6067, %v6138
    %v6140 = vpop.f32.mrb[0].mxu0
    %6141 = vmatprep.mubr.bf16.mxu0 0
    %6142 = vmatmul.mubr.bf16.gmra.mrb[0].mxu0 %v5807
    %v6143 = vpop.f32.mrb[0].mxu0
    %v6144 = vadd.f32 %v6072, %v6143
    %v6145 = vpop.f32.mrb[0].mxu0
    %v6146 = vpop.f32.mrb[0].mxu0
    %v6147 = vpop.f32.mrb[0].mxu0
    %6148 = vdwg.mxu0
    %v6149 = vmax.f32 %v6112, 0.0
    %v6150 = vmax.f32 %v6115, 0.0
    %v6151 = vmax.f32 %v6120, 0.0
    %v6152 = vmax.f32 %v6123, 0.0
    %v6153 = vmax.f32 %v6128, 0.0
    %v6154 = vmax.f32 %v6131, 0.0
    %v6155 = vmax.f32 %v6136, 0.0
    %v6156 = vmax.f32 %v6139, 0.0
    %v6157 = vmax.f32 %v6144, 0.0
    %v6158 = vld [vmem:[%s3 + $0x4] sm:$0x1]
    %v6159 = vlaneseq
    %v6160 = vshrl.u32 %v6159, 7
    %v6161 = vsub.s32 0, %v6160
    %v6162 = vrot.slane %v6158, %v6161
    %v6163 = vmul.f32 %v6149, %v6162
    %v6164 = vmul.f32 %v6150, %v6162
    %v6165 = vmul.f32 %v6151, %v6162
    %v6166 = vmul.f32 %v6152, %v6162
    %v6167 = vmul.f32 %v6153, %v6162
    %v6168 = vmul.f32 %v6154, %v6162
    %v6169 = vmul.f32 %v6155, %v6162
    %v6170 = vmul.f32 %v6156, %v6162
    %v6171 = vmul.f32 %v6157, %v6162
    %v6172 = vld [vmem:[%s3 + $0x5] sm:$0x1]
    %v6173 = vlaneseq
    %v6174 = vshrl.u32 %v6173, 7
    %v6175 = vsub.s32 0, %v6174
    %v6176 = vrot.slane %v6172, %v6175
    %v6177 = vadd.f32 %v6163, %v6176
    %v6178 = vadd.f32 %v6164, %v6176
    %v6179 = vadd.f32 %v6165, %v6176
    %v6180 = vadd.f32 %v6166, %v6176
    %v6181 = vadd.f32 %v6167, %v6176
    %v6182 = vadd.f32 %v6168, %v6176
    %v6183 = vadd.f32 %v6169, %v6176
    %v6184 = vadd.f32 %v6170, %v6176
    %v6185 = vadd.f32 %v6171, %v6176
    %v6186 = vrot.slane %v6177, 1
    %v6187 = vrot.slane %v6178, 1
    %v6188 = vrot.slane %v6179, 1
    %v6189 = vrot.slane %v6180, 1
    %v6190 = vrot.slane %v6181, 1
    %v6191 = vrot.slane %v6182, 1
    %v6192 = vrot.slane %v6183, 1
    %v6193 = vrot.slane %v6184, 1
    %v6194 = vrot.slane %v6185, 1
    %v6195 = vsel %vm420, %v6193, %v6194
    %v6196 = vsel %vm420, %v6192, %v6193
    %v6197 = vsel %vm420, %v6191, %v6192
    %v6198 = vsel %vm420, %v6190, %v6191
    %v6199 = vsel %vm420, %v6189, %v6190
    %v6200 = vsel %vm420, %v6188, %v6189
    %v6201 = vsel %vm420, %v6187, %v6188
    %v6202 = vsel %vm420, %v6186, %v6187
    %v6203 = vsel %vm420, %v6194, %v6186
    %v6204 = vmax.f32 %v6177, %v6202
    %v6205 = vmax.f32 %v6178, %v6201
    %v6206 = vmax.f32 %v6179, %v6200
    %v6207 = vmax.f32 %v6180, %v6199
    %v6208 = vmax.f32 %v6181, %v6198
    %v6209 = vmax.f32 %v6182, %v6197
    %v6210 = vmax.f32 %v6183, %v6196
    %v6211 = vmax.f32 %v6184, %v6195
    %v6212 = vmax.f32 %v6185, %v6203
    %v6213 = vrot.slane %v6204, 3
    %v6214 = vrot.slane %v6205, 3
    %v6215 = vrot.slane %v6206, 3
    %v6216 = vrot.slane %v6207, 3
    %v6217 = vrot.slane %v6208, 3
    %v6218 = vrot.slane %v6209, 3
    %v6219 = vrot.slane %v6210, 3
    %v6220 = vrot.slane %v6211, 3
    %v6221 = vrot.slane %v6212, 3
    %v6222 = vsel %vm160, %v6220, %v6221
    %v6223 = vsel %vm160, %v6219, %v6220
    %v6224 = vsel %vm160, %v6218, %v6219
    %v6225 = vsel %vm160, %v6217, %v6218
    %v6226 = vsel %vm160, %v6216, %v6217
    %v6227 = vsel %vm160, %v6215, %v6216
    %v6228 = vsel %vm160, %v6214, %v6215
    %v6229 = vsel %vm160, %v6213, %v6214
    %v6230 = vsel %vm160, %v6221, %v6213
    %v6231 = vmax.f32 %v6204, %v6229
    %v6232 = vmax.f32 %v6205, %v6228
    %v6233 = vmax.f32 %v6206, %v6227
    %v6234 = vmax.f32 %v6207, %v6226
    %v6235 = vmax.f32 %v6208, %v6225
    %v6236 = vmax.f32 %v6209, %v6224
    %v6237 = vmax.f32 %v6210, %v6223
    %v6238 = vmax.f32 %v6211, %v6222
    %v6239 = vmax.f32 %v6212, %v6230
    %v6240 = vld [vmem:[%s7] sm:$0xf]
    %v6241 = vld [vmem:[%s7 + $0x4] sm:$0xf]
    %v6242 = vld [vmem:[%s7 + $0x8] sm:$0xf]
    %v6243 = vld [vmem:[%s7 + $0xc] sm:$0xf]
    %v6244 = vpack.c.bf16 %v6232, %v6231
    %v6245 = vpack.c.bf16 %v6234, %v6233
    %v6246 = vpack.c.bf16 %v6236, %v6235
    %v6247 = vpack.c.bf16 %v6238, %v6237
    %v6248 = vpack.c.bf16 %v6239, %v6239
    %v6253 = vunpack.c.l.b16 %v6240
    %v6254 = vunpack.c.l.b16 %v6241
    %v6255 = vunpack.c.l.b16 %v6242
    %v6256 = vunpack.c.l.b16 %v6243
    %v6257 = vpack.c.b16 %v6254, %v6253
    %v6258 = vpack.c.b16 %v6256, %v6255
    %vm6259 = vcmask 588800
    %v6261 = vsel %vm6259, %v6257, 0
    %v6264 = vsel %vm6259, %v6258, 0
    %vm6266 = vcmask 1043456
    %v6268 = vsel %vm6266, %v6248, 0
    %6270 = vmatprep.subr.bf16.mxu0 0
    %6271 = vmatpush1.bf16.msra.mxu0 %v6244
    %6272 = vmatprep.subr.bf16.mxu0 0
    %6273 = vmatpush1.bf16.msra.mxu0 %v6245
    %6274 = vmatprep.subr.bf16.mxu0 0
    %6275 = vmatpush1.bf16.msra.mxu0 %v6246
    %6276 = vmatprep.subr.bf16.mxu0 0
    %6277 = vmatpush1.bf16.msra.mxu0 %v6247
    %6278 = vmatprep.subr.bf16.mxu0 0
    %6279 = vmatpush1.bf16.msra.mxu0 %v6268
    %6280 = vmatprep.subr.bf16.mxu0 0
    %6281 = vmatpush1.bf16.msra.mxu0 0
    %6282 = vmatprep.subr.bf16.mxu0 0
    %6283 = vmatpush1.bf16.msra.mxu0 0
    %6284 = vmatprep.subr.bf16.mxu0 0
    %6285 = vmatpush1.bf16.msra.mxu0 0
    %6286 = vmatprep.subr.bf16.mxu0 0
    %6287 = vmatpush1.bf16.msra.mxu0 0
    %6288 = vmatprep.subr.bf16.mxu0 0
    %6289 = vmatpush1.bf16.msra.mxu0 0
    %6290 = vmatprep.subr.bf16.mxu0 0
    %6291 = vmatpush1.bf16.msra.mxu0 0
    %6292 = vmatprep.subr.bf16.mxu0 0
    %6293 = vmatpush1.bf16.msra.mxu0 0
    %6294 = vmatprep.subr.bf16.mxu0 0
    %6295 = vmatpush1.bf16.msra.mxu0 0
    %6296 = vmatprep.subr.bf16.mxu0 0
    %6297 = vmatpush1.bf16.msra.mxu0 0
    %6298 = vmatprep.subr.bf16.mxu0 0
    %6299 = vmatpush1.bf16.msra.mxu0 0
    %6300 = vmatprep.subr.bf16.mxu0 0
    %6301 = vmatpush1.bf16.msra.mxu0 0
    %6302 = vmatprep.mubr.bf16.mxu0 0
    %6303 = vmatmul.mubr.bf16.gmra.mrb[0].mxu0 %v6261
    %v6304 = vpop.f32.mrb[0].mxu0
    %v6305 = vadd.f32 0.0, %v6304
    %v6306 = vpop.f32.mrb[0].mxu0
    %v6307 = vpop.f32.mrb[0].mxu0
    %v6308 = vadd.f32 0.0, %v6307
    %v6309 = vpop.f32.mrb[0].mxu0
    %6310 = vmatprep.mubr.bf16.mxu0 0
    %6311 = vmatmul.mubr.bf16.gmra.mrb[0].mxu0 %v6264
    %v6312 = vpop.f32.mrb[0].mxu0
    %v6313 = vadd.f32 0.0, %v6312
    %v6314 = vpop.f32.mrb[0].mxu0
    %v6315 = vpop.f32.mrb[0].mxu0
    %v6316 = vadd.f32 0.0, %v6315
    %v6317 = vpop.f32.mrb[0].mxu0
    %6318 = vdwg.mxu0
    %v6319 = vld [vmem:[%s10] sm:$0xff]
    %v6320 = vld [vmem:[%s10 + $0x8] sm:$0xff]
    %v6321 = vld [vmem:[%s8] sm:$0xff]
    %v6322 = vmul.f32 %v6305, %v6321
    %v6323 = vpack.c.bf16 %v6322, %v6322
    %v6324 = vld [vmem:[%s9] sm:$0xff]
    %v6325 = vld [vmem:[%s9 + $0x8] sm:$0xff]
    %v6326 = vld [vmem:[%s9 + $0x10] sm:$0xff]
    %v6327 = vld [vmem:[%s9 + $0x18] sm:$0xff]
    %v6328 = vld [vmem:[%s9 + $0x20] sm:$0xff]
    %v6329 = vld [vmem:[%s9 + $0x28] sm:$0xff]
    %v6330 = vld [vmem:[%s9 + $0x30] sm:$0xff]
    %v6331 = vld [vmem:[%s9 + $0x38] sm:$0xff]
    %v6340 = vunpack.c.l.b16 %v6324
    %v6341 = vunpack.c.h.b16 %v6324
    %v6342 = vunpack.c.l.b16 %v6325
    %v6343 = vunpack.c.h.b16 %v6325
    %v6344 = vunpack.c.l.b16 %v6326
    %v6345 = vunpack.c.h.b16 %v6326
    %v6346 = vunpack.c.l.b16 %v6327
    %v6347 = vunpack.c.h.b16 %v6327
    %v6348 = vunpack.c.l.b16 %v6328
    %v6349 = vunpack.c.h.b16 %v6328
    %v6350 = vunpack.c.l.b16 %v6329
    %v6351 = vunpack.c.h.b16 %v6329
    %v6352 = vunpack.c.l.b16 %v6330
    %v6353 = vunpack.c.h.b16 %v6330
    %v6354 = vunpack.c.l.b16 %v6331
    %v6355 = vunpack.c.h.b16 %v6331
    %v6356 = vpack.c.b16 %v6342, %v6340
    %v6357 = vpack.c.b16 %v6343, %v6341
    %v6358 = vpack.c.b16 %v6346, %v6344
    %v6359 = vpack.c.b16 %v6347, %v6345
    %v6360 = vpack.c.b16 %v6350, %v6348
    %v6361 = vpack.c.b16 %v6351, %v6349
    %v6362 = vpack.c.b16 %v6354, %v6352
    %v6363 = vpack.c.b16 %v6355, %v6353
    %v6373 = vsel %vm5665, %v6323, 0
    %6375 = vmatprep.subr.bf16.mxu0 %v6357
    %6376 = vmatpush1.bf16.msra.mxu0 %v6356
    %6377 = vmatprep.subr.bf16.mxu0 %v6359
    %6378 = vmatpush1.bf16.msra.mxu0 %v6358
    %6379 = vmatprep.subr.bf16.mxu0 %v6361
    %6380 = vmatpush1.bf16.msra.mxu0 %v6360
    %6381 = vmatprep.subr.bf16.mxu0 %v6363
    %6382 = vmatpush1.bf16.msra.mxu0 %v6362
    %6383 = vmatprep.subr.bf16.mxu0 0
    %6384 = vmatpush1.bf16.msra.mxu0 0
    %6385 = vmatprep.subr.bf16.mxu0 0
    %6386 = vmatpush1.bf16.msra.mxu0 0
    %6387 = vmatprep.subr.bf16.mxu0 0
    %6388 = vmatpush1.bf16.msra.mxu0 0
    %6389 = vmatprep.subr.bf16.mxu0 0
    %6390 = vmatpush1.bf16.msra.mxu0 0
    %6391 = vmatprep.subr.bf16.mxu0 0
    %6392 = vmatpush1.bf16.msra.mxu0 0
    %6393 = vmatprep.subr.bf16.mxu0 0
    %6394 = vmatpush1.bf16.msra.mxu0 0
    %6395 = vmatprep.subr.bf16.mxu0 0
    %6396 = vmatpush1.bf16.msra.mxu0 0
    %6397 = vmatprep.subr.bf16.mxu0 0
    %6398 = vmatpush1.bf16.msra.mxu0 0
    %6399 = vmatprep.subr.bf16.mxu0 0
    %6400 = vmatpush1.bf16.msra.mxu0 0
    %6401 = vmatprep.subr.bf16.mxu0 0
    %6402 = vmatpush1.bf16.msra.mxu0 0
    %6403 = vmatprep.subr.bf16.mxu0 0
    %6404 = vmatpush1.bf16.msra.mxu0 0
    %6405 = vmatprep.subr.bf16.mxu0 0
    %6406 = vmatpush1.bf16.msra.mxu0 0
    %6407 = vmatprep.mubr.bf16.mxu0 0
    %6408 = vmatmul.mubr.bf16.gmra.mrb[0].mxu0 %v6373
    %v6409 = vpop.f32.mrb[0].mxu0
    %v6410 = vadd.f32 0.0, %v6409
    %v6411 = vpop.f32.mrb[0].mxu0
    %v6412 = vadd.f32 0.0, %v6411
    %v6413 = vpop.f32.mrb[0].mxu0
    %v6414 = vpop.f32.mrb[0].mxu0
    %6415 = vdwg.mxu0
    %v6416 = vadd.f32 %v6319, %v6410
    %v6417 = vadd.f32 %v6320, %v6412
    %s6418 = scalar_lea.vmem %s8, 8
    %v6419 = vld [vmem:[%s6418] sm:$0xff]
    %v6420 = vmul.f32 %v6308, %v6419
    %v6421 = vpack.c.bf16 %v6420, %v6420
    %s6422 = scalar_lea.vmem %s9, 64
    %v6423 = vld [vmem:[%s6422] sm:$0xff]
    %v6424 = vld [vmem:[%s6422 + $0x8] sm:$0xff]
    %v6425 = vld [vmem:[%s6422 + $0x10] sm:$0xff]
    %v6426 = vld [vmem:[%s6422 + $0x18] sm:$0xff]
    %v6427 = vld [vmem:[%s6422 + $0x20] sm:$0xff]
    %v6428 = vld [vmem:[%s6422 + $0x28] sm:$0xff]
    %v6429 = vld [vmem:[%s6422 + $0x30] sm:$0xff]
    %v6430 = vld [vmem:[%s6422 + $0x38] sm:$0xff]
    %v6439 = vunpack.c.l.b16 %v6423
    %v6440 = vunpack.c.h.b16 %v6423
    %v6441 = vunpack.c.l.b16 %v6424
    %v6442 = vunpack.c.h.b16 %v6424
    %v6443 = vunpack.c.l.b16 %v6425
    %v6444 = vunpack.c.h.b16 %v6425
    %v6445 = vunpack.c.l.b16 %v6426
    %v6446 = vunpack.c.h.b16 %v6426
    %v6447 = vunpack.c.l.b16 %v6427
    %v6448 = vunpack.c.h.b16 %v6427
    %v6449 = vunpack.c.l.b16 %v6428
    %v6450 = vunpack.c.h.b16 %v6428
    %v6451 = vunpack.c.l.b16 %v6429
    %v6452 = vunpack.c.h.b16 %v6429
    %v6453 = vunpack.c.l.b16 %v6430
    %v6454 = vunpack.c.h.b16 %v6430
    %v6455 = vpack.c.b16 %v6441, %v6439
    %v6456 = vpack.c.b16 %v6442, %v6440
    %v6457 = vpack.c.b16 %v6445, %v6443
    %v6458 = vpack.c.b16 %v6446, %v6444
    %v6459 = vpack.c.b16 %v6449, %v6447
    %v6460 = vpack.c.b16 %v6450, %v6448
    %v6461 = vpack.c.b16 %v6453, %v6451
    %v6462 = vpack.c.b16 %v6454, %v6452
    %v6472 = vsel %vm5665, %v6421, 0
    %6474 = vmatprep.subr.bf16.mxu0 %v6456
    %6475 = vmatpush1.bf16.msra.mxu0 %v6455
    %6476 = vmatprep.subr.bf16.mxu0 %v6458
    %6477 = vmatpush1.bf16.msra.mxu0 %v6457
    %6478 = vmatprep.subr.bf16.mxu0 %v6460
    %6479 = vmatpush1.bf16.msra.mxu0 %v6459
    %6480 = vmatprep.subr.bf16.mxu0 %v6462
    %6481 = vmatpush1.bf16.msra.mxu0 %v6461
    %6482 = vmatprep.subr.bf16.mxu0 0
    %6483 = vmatpush1.bf16.msra.mxu0 0
    %6484 = vmatprep.subr.bf16.mxu0 0
    %6485 = vmatpush1.bf16.msra.mxu0 0
    %6486 = vmatprep.subr.bf16.mxu0 0
    %6487 = vmatpush1.bf16.msra.mxu0 0
    %6488 = vmatprep.subr.bf16.mxu0 0
    %6489 = vmatpush1.bf16.msra.mxu0 0
    %6490 = vmatprep.subr.bf16.mxu0 0
    %6491 = vmatpush1.bf16.msra.mxu0 0
    %6492 = vmatprep.subr.bf16.mxu0 0
    %6493 = vmatpush1.bf16.msra.mxu0 0
    %6494 = vmatprep.subr.bf16.mxu0 0
    %6495 = vmatpush1.bf16.msra.mxu0 0
    %6496 = vmatprep.subr.bf16.mxu0 0
    %6497 = vmatpush1.bf16.msra.mxu0 0
    %6498 = vmatprep.subr.bf16.mxu0 0
    %6499 = vmatpush1.bf16.msra.mxu0 0
    %6500 = vmatprep.subr.bf16.mxu0 0
    %6501 = vmatpush1.bf16.msra.mxu0 0
    %6502 = vmatprep.subr.bf16.mxu0 0
    %6503 = vmatpush1.bf16.msra.mxu0 0
    %6504 = vmatprep.subr.bf16.mxu0 0
    %6505 = vmatpush1.bf16.msra.mxu0 0
    %6506 = vmatprep.mubr.bf16.mxu0 0
    %6507 = vmatmul.mubr.bf16.gmra.mrb[0].mxu0 %v6472
    %v6508 = vpop.f32.mrb[0].mxu0
    %v6509 = vadd.f32 0.0, %v6508
    %v6510 = vpop.f32.mrb[0].mxu0
    %v6511 = vadd.f32 0.0, %v6510
    %v6512 = vpop.f32.mrb[0].mxu0
    %v6513 = vpop.f32.mrb[0].mxu0
    %6514 = vdwg.mxu0
    %v6515 = vadd.f32 %v6416, %v6509
    %v6516 = vadd.f32 %v6417, %v6511
    %s6517 = scalar_lea.vmem %s8, 16
    %v6518 = vld [vmem:[%s6517] sm:$0xff]
    %v6519 = vmul.f32 %v6313, %v6518
    %v6520 = vpack.c.bf16 %v6519, %v6519
    %s6521 = scalar_lea.vmem %s9, 128
    %v6522 = vld [vmem:[%s6521] sm:$0xff]
    %v6523 = vld [vmem:[%s6521 + $0x8] sm:$0xff]
    %v6524 = vld [vmem:[%s6521 + $0x10] sm:$0xff]
    %v6525 = vld [vmem:[%s6521 + $0x18] sm:$0xff]
    %v6526 = vld [vmem:[%s6521 + $0x20] sm:$0xff]
    %v6527 = vld [vmem:[%s6521 + $0x28] sm:$0xff]
    %v6528 = vld [vmem:[%s6521 + $0x30] sm:$0xff]
    %v6529 = vld [vmem:[%s6521 + $0x38] sm:$0xff]
    %v6538 = vunpack.c.l.b16 %v6522
    %v6539 = vunpack.c.h.b16 %v6522
    %v6540 = vunpack.c.l.b16 %v6523
    %v6541 = vunpack.c.h.b16 %v6523
    %v6542 = vunpack.c.l.b16 %v6524
    %v6543 = vunpack.c.h.b16 %v6524
    %v6544 = vunpack.c.l.b16 %v6525
    %v6545 = vunpack.c.h.b16 %v6525
    %v6546 = vunpack.c.l.b16 %v6526
    %v6547 = vunpack.c.h.b16 %v6526
    %v6548 = vunpack.c.l.b16 %v6527
    %v6549 = vunpack.c.h.b16 %v6527
    %v6550 = vunpack.c.l.b16 %v6528
    %v6551 = vunpack.c.h.b16 %v6528
    %v6552 = vunpack.c.l.b16 %v6529
    %v6553 = vunpack.c.h.b16 %v6529
    %v6554 = vpack.c.b16 %v6540, %v6538
    %v6555 = vpack.c.b16 %v6541, %v6539
    %v6556 = vpack.c.b16 %v6544, %v6542
    %v6557 = vpack.c.b16 %v6545, %v6543
    %v6558 = vpack.c.b16 %v6548, %v6546
    %v6559 = vpack.c.b16 %v6549, %v6547
    %v6560 = vpack.c.b16 %v6552, %v6550
    %v6561 = vpack.c.b16 %v6553, %v6551
    %v6571 = vsel %vm5665, %v6520, 0
    %6573 = vmatprep.subr.bf16.mxu0 %v6555
    %6574 = vmatpush1.bf16.msra.mxu0 %v6554
    %6575 = vmatprep.subr.bf16.mxu0 %v6557
    %6576 = vmatpush1.bf16.msra.mxu0 %v6556
    %6577 = vmatprep.subr.bf16.mxu0 %v6559
    %6578 = vmatpush1.bf16.msra.mxu0 %v6558
    %6579 = vmatprep.subr.bf16.mxu0 %v6561
    %6580 = vmatpush1.bf16.msra.mxu0 %v6560
    %6581 = vmatprep.subr.bf16.mxu0 0
    %6582 = vmatpush1.bf16.msra.mxu0 0
    %6583 = vmatprep.subr.bf16.mxu0 0
    %6584 = vmatpush1.bf16.msra.mxu0 0
    %6585 = vmatprep.subr.bf16.mxu0 0
    %6586 = vmatpush1.bf16.msra.mxu0 0
    %6587 = vmatprep.subr.bf16.mxu0 0
    %6588 = vmatpush1.bf16.msra.mxu0 0
    %6589 = vmatprep.subr.bf16.mxu0 0
    %6590 = vmatpush1.bf16.msra.mxu0 0
    %6591 = vmatprep.subr.bf16.mxu0 0
    %6592 = vmatpush1.bf16.msra.mxu0 0
    %6593 = vmatprep.subr.bf16.mxu0 0
    %6594 = vmatpush1.bf16.msra.mxu0 0
    %6595 = vmatprep.subr.bf16.mxu0 0
    %6596 = vmatpush1.bf16.msra.mxu0 0
    %6597 = vmatprep.subr.bf16.mxu0 0
    %6598 = vmatpush1.bf16.msra.mxu0 0
    %6599 = vmatprep.subr.bf16.mxu0 0
    %6600 = vmatpush1.bf16.msra.mxu0 0
    %6601 = vmatprep.subr.bf16.mxu0 0
    %6602 = vmatpush1.bf16.msra.mxu0 0
    %6603 = vmatprep.subr.bf16.mxu0 0
    %6604 = vmatpush1.bf16.msra.mxu0 0
    %6605 = vmatprep.mubr.bf16.mxu0 0
    %6606 = vmatmul.mubr.bf16.gmra.mrb[0].mxu0 %v6571
    %v6607 = vpop.f32.mrb[0].mxu0
    %v6608 = vadd.f32 0.0, %v6607
    %v6609 = vpop.f32.mrb[0].mxu0
    %v6610 = vadd.f32 0.0, %v6609
    %v6611 = vpop.f32.mrb[0].mxu0
    %v6612 = vpop.f32.mrb[0].mxu0
    %6613 = vdwg.mxu0
    %v6614 = vadd.f32 %v6515, %v6608
    %v6615 = vadd.f32 %v6516, %v6610
    %s6616 = scalar_lea.vmem %s8, 24
    %v6617 = vld [vmem:[%s6616] sm:$0xff]
    %v6618 = vmul.f32 %v6316, %v6617
    %v6619 = vpack.c.bf16 %v6618, %v6618
    %s6620 = scalar_lea.vmem %s9, 192
    %v6621 = vld [vmem:[%s6620] sm:$0xff]
    %v6622 = vld [vmem:[%s6620 + $0x8] sm:$0xff]
    %v6623 = vld [vmem:[%s6620 + $0x10] sm:$0xff]
    %v6624 = vld [vmem:[%s6620 + $0x18] sm:$0xff]
    %v6625 = vld [vmem:[%s6620 + $0x20] sm:$0xff]
    %v6626 = vld [vmem:[%s6620 + $0x28] sm:$0xff]
    %v6627 = vld [vmem:[%s6620 + $0x30] sm:$0xff]
    %v6628 = vld [vmem:[%s6620 + $0x38] sm:$0xff]
    %v6637 = vunpack.c.l.b16 %v6621
    %v6638 = vunpack.c.h.b16 %v6621
    %v6639 = vunpack.c.l.b16 %v6622
    %v6640 = vunpack.c.h.b16 %v6622
    %v6641 = vunpack.c.l.b16 %v6623
    %v6642 = vunpack.c.h.b16 %v6623
    %v6643 = vunpack.c.l.b16 %v6624
    %v6644 = vunpack.c.h.b16 %v6624
    %v6645 = vunpack.c.l.b16 %v6625
    %v6646 = vunpack.c.h.b16 %v6625
    %v6647 = vunpack.c.l.b16 %v6626
    %v6648 = vunpack.c.h.b16 %v6626
    %v6649 = vunpack.c.l.b16 %v6627
    %v6650 = vunpack.c.h.b16 %v6627
    %v6651 = vunpack.c.l.b16 %v6628
    %v6652 = vunpack.c.h.b16 %v6628
    %v6653 = vpack.c.b16 %v6639, %v6637
    %v6654 = vpack.c.b16 %v6640, %v6638
    %v6655 = vpack.c.b16 %v6643, %v6641
    %v6656 = vpack.c.b16 %v6644, %v6642
    %v6657 = vpack.c.b16 %v6647, %v6645
    %v6658 = vpack.c.b16 %v6648, %v6646
    %v6659 = vpack.c.b16 %v6651, %v6649
    %v6660 = vpack.c.b16 %v6652, %v6650
    %v6670 = vsel %vm5665, %v6619, 0
    %6672 = vmatprep.subr.bf16.mxu0 %v6654
    %6673 = vmatpush1.bf16.msra.mxu0 %v6653
    %6674 = vmatprep.subr.bf16.mxu0 %v6656
    %6675 = vmatpush1.bf16.msra.mxu0 %v6655
    %6676 = vmatprep.subr.bf16.mxu0 %v6658
    %6677 = vmatpush1.bf16.msra.mxu0 %v6657
    %6678 = vmatprep.subr.bf16.mxu0 %v6660
    %6679 = vmatpush1.bf16.msra.mxu0 %v6659
    %6680 = vmatprep.subr.bf16.mxu0 0
    %6681 = vmatpush1.bf16.msra.mxu0 0
    %6682 = vmatprep.subr.bf16.mxu0 0
    %6683 = vmatpush1.bf16.msra.mxu0 0
    %6684 = vmatprep.subr.bf16.mxu0 0
    %6685 = vmatpush1.bf16.msra.mxu0 0
    %6686 = vmatprep.subr.bf16.mxu0 0
    %6687 = vmatpush1.bf16.msra.mxu0 0
    %6688 = vmatprep.subr.bf16.mxu0 0
    %6689 = vmatpush1.bf16.msra.mxu0 0
    %6690 = vmatprep.subr.bf16.mxu0 0
    %6691 = vmatpush1.bf16.msra.mxu0 0
    %6692 = vmatprep.subr.bf16.mxu0 0
    %6693 = vmatpush1.bf16.msra.mxu0 0
    %6694 = vmatprep.subr.bf16.mxu0 0
    %6695 = vmatpush1.bf16.msra.mxu0 0
    %6696 = vmatprep.subr.bf16.mxu0 0
    %6697 = vmatpush1.bf16.msra.mxu0 0
    %6698 = vmatprep.subr.bf16.mxu0 0
    %6699 = vmatpush1.bf16.msra.mxu0 0
    %6700 = vmatprep.subr.bf16.mxu0 0
    %6701 = vmatpush1.bf16.msra.mxu0 0
    %6702 = vmatprep.subr.bf16.mxu0 0
    %6703 = vmatpush1.bf16.msra.mxu0 0
    %6704 = vmatprep.mubr.bf16.mxu0 0
    %6705 = vmatmul.mubr.bf16.gmra.mrb[0].mxu0 %v6670
    %v6706 = vpop.f32.mrb[0].mxu0
    %v6707 = vadd.f32 0.0, %v6706
    %v6708 = vpop.f32.mrb[0].mxu0
    %v6709 = vadd.f32 0.0, %v6708
    %v6710 = vpop.f32.mrb[0].mxu0
    %v6711 = vpop.f32.mrb[0].mxu0
    %6712 = vdwg.mxu0
    %v6713 = vadd.f32 %v6614, %v6707
    %v6714 = vadd.f32 %v6615, %v6709
    %6715 = vst [vmem:[%s11] sm:$0xff] %v6713
    %6716 = vst [vmem:[%s11 + $0x8] sm:$0xff] %v6714
    // Predicated region
    $region62: #{_lambda_.1} parent=1 // pred_check
      _
    $region63: #{_lambda_.1} parent=1 // pred_check_branch
      %6718 = sbr.rel (0) target = $region65
    $region64: #{_lambda_.1} parent=1 // pred_region
      _
    $region65: #{_lambda_.1} parent=1 // pred_fallthru
      _
    // Predicated region
    $region66: #{_lambda_.1} parent=1 // pred_check
      _
    $region67: #{_lambda_.1} parent=1 // pred_check_branch
      %6720 = sbr.rel (0) target = $region69
    $region68: #{_lambda_.1} parent=1 // pred_region
      _
    $region69: #{_lambda_.1} parent=1 // pred_fallthru
      _
    %6721 = vsyncpa [#allocation3], 1
    %6722 = vsyncpa [#allocation5], 1
    %6723 = vsyncpa [#allocation8], 1

</llo_original>
